<compile_context>
chip_gen: v6e
topology: v6e:2x2x1
jax: 0.10.0
libtpu: 0.0.40
codegen_flags: <defaults>
</compile_context>

<pallas_src>
import functools

import jax
import jax.numpy as jnp
from jax.experimental import pallas as pl
from jax.experimental.pallas import tpu as pltpu


# ----------------------------------------------------------------------------
# Wrapper-side im2col at the four 2x2-pool offsets (static slices, no gather).
# ----------------------------------------------------------------------------
def _im2col_pooled(x_cbhw, bc, k_pad):
    """x: (C, B, H, W) f32 -> patches (k_pad, n_chunks * 4 * bc * Ho * Wo) bf16.

    Column index = ((chunk * 4 + off) * bc + b_local) * (Ho*Wo) + ho*Wo + wo
    Row index    = c * 25 + ky * 5 + kx       (zero padded up to k_pad)
    i.e. within each batch-chunk's lane block the 4 pool offsets are contiguous
    (offset-major), so one matmul per block covers all four offsets.
    """
    C, B, H, W = x_cbhw.shape
    Ho, Wo = H // 2, W // 2
    hw = Ho * Wo
    nc = B // bc
    xp = jnp.pad(x_cbhw, ((0, 0), (0, 0), (2, 2), (2, 2))).astype(jnp.bfloat16)

    offs = ((0, 0), (0, 1), (1, 0), (1, 1))                     # (dy, dx)
    taps = []
    for ky in range(5):
        for kx in range(5):
            per_off = []
            for (dy, dx) in offs:
                a, c_ = dy + ky, dx + kx
                # win[c,b,ho,wo] = xp[c, b, a + 2*ho, c_ + 2*wo]
                win = xp[:, :, a:a + 2 * Ho:2, c_:c_ + 2 * Wo:2]  # (C,B,Ho,Wo)
                per_off.append(win.reshape(C, nc, bc, hw))
            taps.append(jnp.stack(per_off, axis=2))               # (C,nc,4,bc,hw)
    P = jnp.stack(taps, axis=1)                                   # (C,25,nc,4,bc,hw)
    P = P.reshape(C * 25, nc * 4 * bc * hw)
    if k_pad > C * 25:
        P = jnp.pad(P, ((0, k_pad - C * 25), (0, 0)))
    return P


def _pick_batch_block(B, hw, k_pad, cout):
    """Pick the batch-chunk size bc.

    Constraints / preferences:
      * bc*hw % 128 == 0 (lane-dense, unmasked stores) when possible,
      * double-buffered block working set <= ~24 MiB (fits v7x / v5e scoped VMEM),
      * >= 2 grid steps when alignment allows (v7x megacore + pipelining),
      * otherwise fall back to bc == B (block == full array satisfies tiling).
    """
    budget = 24 << 20
    def fits(bc):
        patch_blk = k_pad * 4 * bc * hw * 2       # bf16 input block
        out_blk = cout * bc * hw * 4              # f32 output block
        return 2 * (patch_blk + out_blk) <= budget
    divisors = [d for d in range(1, B + 1) if B % d == 0]
    aligned = [d for d in divisors if (d * hw) % 128 == 0 and fits(d)]
    if aligned:
        multi = [d for d in aligned if B // d >= 2]
        return max(multi) if multi else max(aligned)
    return B


# ----------------------------------------------------------------------------
# Fused Conv2d(5x5, stride 1, pad 2) + MaxPool2d(2) kernel.
#   acc(Cout, 4*n_blk) = W(Cout, K) @ P(K, 4*n_blk)       -- one MXU matmul
#   out(Cout, n_blk)   = max over the 4 lane-contiguous chunks + bias
# ----------------------------------------------------------------------------
def _conv_pool_kernel(p_ref, w_ref, b_ref, o_ref, *, n_blk):
    acc = jnp.dot(w_ref[...], p_ref[...], preferred_element_type=jnp.float32)
    m01 = jnp.maximum(acc[:, 0 * n_blk:1 * n_blk], acc[:, 1 * n_blk:2 * n_blk])
    m23 = jnp.maximum(acc[:, 2 * n_blk:3 * n_blk], acc[:, 3 * n_blk:4 * n_blk])
    # Bias after max is equivalent (bias is pool-offset invariant); single
    # broadcast + add per grid step.
    o_ref[...] = jnp.maximum(m01, m23) + b_ref[...]


def conv5x5_pool2(x_cbhw, w_oihw, b):
    """x: (Cin, B, H, W) f32; w: PyTorch (Cout, Cin, 5, 5); b: (Cout,).

    Returns pooled feature map in (Cout, B, H//2, W//2) layout (f32).
    """
    Cin, B, H, W = x_cbhw.shape
    Cout = w_oihw.shape[0]
    Ho, Wo = H // 2, W // 2
    hw = Ho * Wo
    K = Cin * 25
    k_pad = ((K + 15) // 16) * 16          # bf16 sublane packing: 75 -> 80

    bc = _pick_batch_block(B, hw, k_pad, Cout)
    n_chunks = B // bc
    n_blk = bc * hw

    patches = _im2col_pooled(x_cbhw, bc, k_pad)              # (k_pad, 4*B*hw) bf16
    wmat = w_oihw.reshape(Cout, K).astype(jnp.bfloat16)      # col = cin*25+ky*5+kx
    if k_pad > K:
        wmat = jnp.pad(wmat, ((0, 0), (0, k_pad - K)))
    bvec = b.reshape(Cout, 1).astype(jnp.float32)

    n_total = 4 * B * hw
    cost = pl.CostEstimate(
        flops=2 * Cout * k_pad * n_total,
        transcendentals=0,
        bytes_accessed=(2 * k_pad * n_total + 2 * Cout * k_pad
                        + 4 * Cout + 4 * Cout * B * hw),
    )

    out = pl.pallas_call(
        functools.partial(_conv_pool_kernel, n_blk=n_blk),
        out_shape=jax.ShapeDtypeStruct((Cout, B * hw), jnp.float32),
        grid=(n_chunks,),
        in_specs=[
            pl.BlockSpec((k_pad, 4 * n_blk), lambda i: (0, i)),
            pl.BlockSpec((Cout, k_pad), lambda i: (0, 0)),
            pl.BlockSpec((Cout, 1), lambda i: (0, 0)),
        ],
        out_specs=pl.BlockSpec((Cout, n_blk), lambda i: (0, i)),
        compiler_params=pltpu.CompilerParams(
            dimension_semantics=("parallel",),
            vmem_limit_bytes=48 * 1024 * 1024),
        cost_estimate=cost,
    )(patches, wmat, bvec)

    return out.reshape(Cout, B, Ho, Wo)


# ----------------------------------------------------------------------------
# Fused MLP head: Linear(1024, 64) -> Linear(64, 10), batch on the lane axis.
#   h(64, B) = W1(64,1024) @ x_t(1024,B) + b1 ; out(10, B) = W2(10,64) @ h + b2
# ----------------------------------------------------------------------------
def _mlp_head_kernel(x_ref, w1_ref, b1_ref, w2_ref, b2_ref, o_ref):
    h = jnp.dot(w1_ref[...], x_ref[...],
                preferred_element_type=jnp.float32) + b1_ref[...]
    o_ref[...] = jnp.dot(w2_ref[...], h,
                         preferred_element_type=jnp.float32) + b2_ref[...]


def mlp_head(x_t, w1, b1, w2, b2):
    """x_t: (1024, B); w1: (64, 1024); w2: (10, 64). Returns (10, B)."""
    Din, B = x_t.shape
    H1 = w1.shape[0]
    Dout = w2.shape[0]
    cost = pl.CostEstimate(
        flops=2 * B * (Din * H1 + H1 * Dout),
        transcendentals=0,
        bytes_accessed=4 * (x_t.size + w1.size + w2.size + H1 + Dout + Dout * B),
    )
    return pl.pallas_call(
        _mlp_head_kernel,
        out_shape=jax.ShapeDtypeStruct((Dout, B), jnp.float32),
        cost_estimate=cost,
    )(x_t.astype(jnp.float32),
      w1.astype(jnp.float32), b1.reshape(H1, 1).astype(jnp.float32),
      w2.astype(jnp.float32), b2.reshape(Dout, 1).astype(jnp.float32))


# ----------------------------------------------------------------------------
# Parameters (deterministic synthetic init, native PyTorch shapes)
# ----------------------------------------------------------------------------
def init_params(key):
    ks = jax.random.split(key, 10)
    s = 0.05

    def n(k, shape):
        return jax.random.normal(k, shape, jnp.float32) * s

    return dict(
        conv1_w=n(ks[0], (32, 3, 5, 5)),  conv1_b=n(ks[1], (32,)),
        conv2_w=n(ks[2], (32, 32, 5, 5)), conv2_b=n(ks[3], (32,)),
        conv3_w=n(ks[4], (64, 32, 5, 5)), conv3_b=n(ks[5], (64,)),
        fc1_w=n(ks[6], (64, 1024)),       fc1_b=n(ks[7], (64,)),
        fc2_w=n(ks[8], (10, 64)),         fc2_b=n(ks[9], (10,)),
    )


# ----------------------------------------------------------------------------
# Full forward (matches Tudui.forward)
# ----------------------------------------------------------------------------
def tudui_forward(x_nchw, p):
    B = x_nchw.shape[0]
    # NCHW -> CBHW: channels on sublanes, (batch, spatial) on lanes internally.
    x = jnp.transpose(x_nchw.astype(jnp.float32), (1, 0, 2, 3))   # (3, B, 32, 32)
    x = conv5x5_pool2(x, p["conv1_w"], p["conv1_b"])              # (32, B, 16, 16)
    x = conv5x5_pool2(x, p["conv2_w"], p["conv2_b"])              # (32, B,  8,  8)
    x = conv5x5_pool2(x, p["conv3_w"], p["conv3_b"])              # (64, B,  4,  4)
    # Flatten in PyTorch order (row index = c*16 + h*4 + w), batch on lanes.
    x_flat_t = jnp.transpose(x, (0, 2, 3, 1)).reshape(64 * 4 * 4, B)   # (1024, B)
    out_t = mlp_head(x_flat_t, p["fc1_w"], p["fc1_b"],
                     p["fc2_w"], p["fc2_b"])                       # (10, B)
    return out_t.T                                                 # (B, 10)


if __name__ == "__main__":
    key = jax.random.PRNGKey(0)
    k_x, k_p = jax.random.split(key)
    # Linear(1024, 64) pins the input to 3x32x32 (CIFAR-10 size); batch=2.
    x = jax.random.normal(k_x, (2, 3, 32, 32), jnp.float32)
    params = init_params(k_p)

    fwd = jax.jit(tudui_forward)
    out = jax.block_until_ready(fwd(x, params))
    assert out.shape == (2, 10), out.shape
    assert out.dtype == jnp.float32
    print("KERNEL_OK")
</pallas_src>

<mosaic_0001>
module attributes {stable_mosaic.version = 11 : i64} {
  func.func @_conv_pool_kernel(%arg0: i32, %arg1: memref<80x1024xbf16, #tpu.memory_space<vmem>>, %arg2: memref<32x80xbf16, #tpu.memory_space<vmem>>, %arg3: memref<32x1xf32, #tpu.memory_space<vmem>>, %arg4: memref<32x256xf32, #tpu.memory_space<vmem>>) attributes {dimension_semantics = [#tpu.dimension_semantics<parallel>], iteration_bounds = array<i64: 2>, scalar_prefetch = 0 : i64, scratch_operands = 0 : i64, tpu.core_type = #tpu.core_type<tc>, window_params = [{transform_indices = @transform_0, window_bounds = array<i64: 80, 1024>}, {pipeline_mode = #tpu.pipeline_mode<synchronous>, transform_indices = @transform_1, window_bounds = array<i64: 32, 80>}, {pipeline_mode = #tpu.pipeline_mode<synchronous>, transform_indices = @transform_2, window_bounds = array<i64: 32, 1>}, {transform_indices = @transform_3, window_bounds = array<i64: 32, 256>}]} {
    %c0 = arith.constant 0 : index
    %c0_0 = arith.constant 0 : index
    %0 = vector.load %arg2[%c0, %c0_0] : memref<32x80xbf16, #tpu.memory_space<vmem>>, vector<32x80xbf16>
    %c0_1 = arith.constant 0 : index
    %c0_2 = arith.constant 0 : index
    %1 = vector.load %arg1[%c0_1, %c0_2] : memref<80x1024xbf16, #tpu.memory_space<vmem>>, vector<80x1024xbf16>
    %cst = arith.constant dense<0.000000e+00> : vector<32x1024xf32>
    %2 = tpu.matmul %0, %1, %cst {dimension_numbers = #tpu.dot_dimension_numbers<[1], [0], [0], [1], [0, 0, 1, 1], [], []>} : vector<32x80xbf16>, vector<80x1024xbf16>, vector<32x1024xf32> -> vector<32x1024xf32>
    %3 = vector.extract_strided_slice %2 {offsets = [0, 0], sizes = [32, 256], strides = [1, 1]} : vector<32x1024xf32> to vector<32x256xf32>
    %4 = vector.extract_strided_slice %2 {offsets = [0, 256], sizes = [32, 256], strides = [1, 1]} : vector<32x1024xf32> to vector<32x256xf32>
    %5 = arith.maximumf %3, %4 : vector<32x256xf32>
    %6 = vector.extract_strided_slice %2 {offsets = [0, 512], sizes = [32, 256], strides = [1, 1]} : vector<32x1024xf32> to vector<32x256xf32>
    %7 = vector.extract_strided_slice %2 {offsets = [0, 768], sizes = [32, 256], strides = [1, 1]} : vector<32x1024xf32> to vector<32x256xf32>
    %8 = arith.maximumf %6, %7 : vector<32x256xf32>
    %9 = arith.maximumf %5, %8 : vector<32x256xf32>
    %c0_3 = arith.constant 0 : index
    %c0_4 = arith.constant 0 : index
    %10 = vector.load %arg3[%c0_3, %c0_4] : memref<32x1xf32, #tpu.memory_space<vmem>>, vector<32x1xf32>
    %11 = vector.broadcast %10 : vector<32x1xf32> to vector<32x256xf32>
    %12 = arith.addf %9, %11 : vector<32x256xf32>
    %c0_5 = arith.constant 0 : index
    %c0_6 = arith.constant 0 : index
    %13 = vector.load %arg4[%c0_5, %c0_6] : memref<32x256xf32, #tpu.memory_space<vmem>>, vector<32x256xf32>
    tpu.vector_store %arg4[%c0_5, %c0_6], %12 {strides = array<i32>} : memref<32x256xf32, #tpu.memory_space<vmem>>, vector<32x256xf32>,
    return
  }
  func.func @transform_0(%arg0: i32) -> (i32, i32) {
    %c0_i32 = arith.constant 0 : i32
    %c0_i32_0 = arith.constant 0 : i32
    return %c0_i32, %arg0 : i32, i32
  }
  func.func @transform_1(%arg0: i32) -> (i32, i32) {
    %c0_i32 = arith.constant 0 : i32
    %c0_i32_0 = arith.constant 0 : i32
    %c0_i32_1 = arith.constant 0 : i32
    return %c0_i32, %c0_i32_0 : i32, i32
  }
  func.func @transform_2(%arg0: i32) -> (i32, i32) {
    %c0_i32 = arith.constant 0 : i32
    %c0_i32_0 = arith.constant 0 : i32
    %c0_i32_1 = arith.constant 0 : i32
    return %c0_i32, %c0_i32_0 : i32, i32
  }
  func.func @transform_3(%arg0: i32) -> (i32, i32) {
    %c0_i32 = arith.constant 0 : i32
    %c0_i32_0 = arith.constant 0 : i32
    return %c0_i32, %arg0 : i32, i32
  }
}

module attributes {stable_mosaic.version = 11 : i64} {
  func.func @_conv_pool_kernel(%arg0: i32, %arg1: memref<800x512xbf16, #tpu.memory_space<vmem>>, %arg2: memref<32x800xbf16, #tpu.memory_space<vmem>>, %arg3: memref<32x1xf32, #tpu.memory_space<vmem>>, %arg4: memref<32x128xf32, #tpu.memory_space<vmem>>) attributes {dimension_semantics = [#tpu.dimension_semantics<parallel>], iteration_bounds = array<i64: 1>, scalar_prefetch = 0 : i64, scratch_operands = 0 : i64, tpu.core_type = #tpu.core_type<tc>, window_params = [{transform_indices = @transform_0, window_bounds = array<i64: 800, 512>}, {pipeline_mode = #tpu.pipeline_mode<synchronous>, transform_indices = @transform_1, window_bounds = array<i64: 32, 800>}, {pipeline_mode = #tpu.pipeline_mode<synchronous>, transform_indices = @transform_2, window_bounds = array<i64: 32, 1>}, {transform_indices = @transform_3, window_bounds = array<i64: 32, 128>}]} {
    %c0 = arith.constant 0 : index
    %c0_0 = arith.constant 0 : index
    %0 = vector.load %arg2[%c0, %c0_0] : memref<32x800xbf16, #tpu.memory_space<vmem>>, vector<32x800xbf16>
    %c0_1 = arith.constant 0 : index
    %c0_2 = arith.constant 0 : index
    %1 = vector.load %arg1[%c0_1, %c0_2] : memref<800x512xbf16, #tpu.memory_space<vmem>>, vector<800x512xbf16>
    %cst = arith.constant dense<0.000000e+00> : vector<32x512xf32>
    %2 = tpu.matmul %0, %1, %cst {dimension_numbers = #tpu.dot_dimension_numbers<[1], [0], [0], [1], [0, 0, 1, 1], [], []>} : vector<32x800xbf16>, vector<800x512xbf16>, vector<32x512xf32> -> vector<32x512xf32>
    %3 = vector.extract_strided_slice %2 {offsets = [0, 0], sizes = [32, 128], strides = [1, 1]} : vector<32x512xf32> to vector<32x128xf32>
    %4 = vector.extract_strided_slice %2 {offsets = [0, 128], sizes = [32, 128], strides = [1, 1]} : vector<32x512xf32> to vector<32x128xf32>
    %5 = arith.maximumf %3, %4 : vector<32x128xf32>
    %6 = vector.extract_strided_slice %2 {offsets = [0, 256], sizes = [32, 128], strides = [1, 1]} : vector<32x512xf32> to vector<32x128xf32>
    %7 = vector.extract_strided_slice %2 {offsets = [0, 384], sizes = [32, 128], strides = [1, 1]} : vector<32x512xf32> to vector<32x128xf32>
    %8 = arith.maximumf %6, %7 : vector<32x128xf32>
    %9 = arith.maximumf %5, %8 : vector<32x128xf32>
    %c0_3 = arith.constant 0 : index
    %c0_4 = arith.constant 0 : index
    %10 = vector.load %arg3[%c0_3, %c0_4] : memref<32x1xf32, #tpu.memory_space<vmem>>, vector<32x1xf32>
    %11 = vector.broadcast %10 : vector<32x1xf32> to vector<32x128xf32>
    %12 = arith.addf %9, %11 : vector<32x128xf32>
    %c0_5 = arith.constant 0 : index
    %c0_6 = arith.constant 0 : index
    %13 = vector.load %arg4[%c0_5, %c0_6] : memref<32x128xf32, #tpu.memory_space<vmem>>, vector<32x128xf32>
    tpu.vector_store %arg4[%c0_5, %c0_6], %12 {strides = array<i32>} : memref<32x128xf32, #tpu.memory_space<vmem>>, vector<32x128xf32>,
    return
  }
  func.func @transform_0(%arg0: i32) -> (i32, i32) {
    %c0_i32 = arith.constant 0 : i32
    %c0_i32_0 = arith.constant 0 : i32
    return %c0_i32, %arg0 : i32, i32
  }
  func.func @transform_1(%arg0: i32) -> (i32, i32) {
    %c0_i32 = arith.constant 0 : i32
    %c0_i32_0 = arith.constant 0 : i32
    %c0_i32_1 = arith.constant 0 : i32
    return %c0_i32, %c0_i32_0 : i32, i32
  }
  func.func @transform_2(%arg0: i32) -> (i32, i32) {
    %c0_i32 = arith.constant 0 : i32
    %c0_i32_0 = arith.constant 0 : i32
    %c0_i32_1 = arith.constant 0 : i32
    return %c0_i32, %c0_i32_0 : i32, i32
  }
  func.func @transform_3(%arg0: i32) -> (i32, i32) {
    %c0_i32 = arith.constant 0 : i32
    %c0_i32_0 = arith.constant 0 : i32
    return %c0_i32, %arg0 : i32, i32
  }
}

module attributes {stable_mosaic.version = 11 : i64} {
  func.func @_conv_pool_kernel(%arg0: i32, %arg1: memref<800x128xbf16, #tpu.memory_space<vmem>>, %arg2: memref<64x800xbf16, #tpu.memory_space<vmem>>, %arg3: memref<64x1xf32, #tpu.memory_space<vmem>>, %arg4: memref<64x32xf32, #tpu.memory_space<vmem>>) attributes {dimension_semantics = [#tpu.dimension_semantics<parallel>], iteration_bounds = array<i64: 1>, scalar_prefetch = 0 : i64, scratch_operands = 0 : i64, tpu.core_type = #tpu.core_type<tc>, window_params = [{transform_indices = @transform_0, window_bounds = array<i64: 800, 128>}, {pipeline_mode = #tpu.pipeline_mode<synchronous>, transform_indices = @transform_1, window_bounds = array<i64: 64, 800>}, {pipeline_mode = #tpu.pipeline_mode<synchronous>, transform_indices = @transform_2, window_bounds = array<i64: 64, 1>}, {transform_indices = @transform_3, window_bounds = array<i64: 64, 32>}]} {
    %c0 = arith.constant 0 : index
    %c0_0 = arith.constant 0 : index
    %0 = vector.load %arg2[%c0, %c0_0] : memref<64x800xbf16, #tpu.memory_space<vmem>>, vector<64x800xbf16>
    %c0_1 = arith.constant 0 : index
    %c0_2 = arith.constant 0 : index
    %1 = vector.load %arg1[%c0_1, %c0_2] : memref<800x128xbf16, #tpu.memory_space<vmem>>, vector<800x128xbf16>
    %cst = arith.constant dense<0.000000e+00> : vector<64x128xf32>
    %2 = tpu.matmul %0, %1, %cst {dimension_numbers = #tpu.dot_dimension_numbers<[1], [0], [0], [1], [0, 0, 1, 1], [], []>} : vector<64x800xbf16>, vector<800x128xbf16>, vector<64x128xf32> -> vector<64x128xf32>
    %3 = vector.extract_strided_slice %2 {offsets = [0, 0], sizes = [64, 32], strides = [1, 1]} : vector<64x128xf32> to vector<64x32xf32>
    %4 = vector.extract_strided_slice %2 {offsets = [0, 32], sizes = [64, 32], strides = [1, 1]} : vector<64x128xf32> to vector<64x32xf32>
    %5 = arith.maximumf %3, %4 : vector<64x32xf32>
    %6 = vector.extract_strided_slice %2 {offsets = [0, 64], sizes = [64, 32], strides = [1, 1]} : vector<64x128xf32> to vector<64x32xf32>
    %7 = vector.extract_strided_slice %2 {offsets = [0, 96], sizes = [64, 32], strides = [1, 1]} : vector<64x128xf32> to vector<64x32xf32>
    %8 = arith.maximumf %6, %7 : vector<64x32xf32>
    %9 = arith.maximumf %5, %8 : vector<64x32xf32>
    %c0_3 = arith.constant 0 : index
    %c0_4 = arith.constant 0 : index
    %10 = vector.load %arg3[%c0_3, %c0_4] : memref<64x1xf32, #tpu.memory_space<vmem>>, vector<64x1xf32>
    %11 = vector.broadcast %10 : vector<64x1xf32> to vector<64x32xf32>
    %12 = arith.addf %9, %11 : vector<64x32xf32>
    %c0_5 = arith.constant 0 : index
    %c0_6 = arith.constant 0 : index
    %13 = vector.load %arg4[%c0_5, %c0_6] : memref<64x32xf32, #tpu.memory_space<vmem>>, vector<64x32xf32>
    tpu.vector_store %arg4[%c0_5, %c0_6], %12 {strides = array<i32>} : memref<64x32xf32, #tpu.memory_space<vmem>>, vector<64x32xf32>,
    return
  }
  func.func @transform_0(%arg0: i32) -> (i32, i32) {
    %c0_i32 = arith.constant 0 : i32
    %c0_i32_0 = arith.constant 0 : i32
    return %c0_i32, %arg0 : i32, i32
  }
  func.func @transform_1(%arg0: i32) -> (i32, i32) {
    %c0_i32 = arith.constant 0 : i32
    %c0_i32_0 = arith.constant 0 : i32
    %c0_i32_1 = arith.constant 0 : i32
    return %c0_i32, %c0_i32_0 : i32, i32
  }
  func.func @transform_2(%arg0: i32) -> (i32, i32) {
    %c0_i32 = arith.constant 0 : i32
    %c0_i32_0 = arith.constant 0 : i32
    %c0_i32_1 = arith.constant 0 : i32
    return %c0_i32, %c0_i32_0 : i32, i32
  }
  func.func @transform_3(%arg0: i32) -> (i32, i32) {
    %c0_i32 = arith.constant 0 : i32
    %c0_i32_0 = arith.constant 0 : i32
    return %c0_i32, %arg0 : i32, i32
  }
}

module attributes {stable_mosaic.version = 11 : i64} {
  func.func @_mlp_head_kernel(%arg0: memref<1024x2xf32, #tpu.memory_space<vmem>>, %arg1: memref<64x1024xf32, #tpu.memory_space<vmem>>, %arg2: memref<64x1xf32, #tpu.memory_space<vmem>>, %arg3: memref<10x64xf32, #tpu.memory_space<vmem>>, %arg4: memref<10x1xf32, #tpu.memory_space<vmem>>, %arg5: memref<10x2xf32, #tpu.memory_space<vmem>>) attributes {dimension_semantics = [], scalar_prefetch = 0 : i64, scratch_operands = 0 : i64, tpu.core_type = #tpu.core_type<tc>} {
    %c0 = arith.constant 0 : index
    %c0_0 = arith.constant 0 : index
    %0 = vector.load %arg1[%c0, %c0_0] : memref<64x1024xf32, #tpu.memory_space<vmem>>, vector<64x1024xf32>
    %c0_1 = arith.constant 0 : index
    %c0_2 = arith.constant 0 : index
    %1 = vector.load %arg0[%c0_1, %c0_2] : memref<1024x2xf32, #tpu.memory_space<vmem>>, vector<1024x2xf32>
    %cst = arith.constant dense<0.000000e+00> : vector<64x2xf32>
    %2 = tpu.matmul %0, %1, %cst {dimension_numbers = #tpu.dot_dimension_numbers<[1], [0], [0], [1], [0, 0, 1, 1], [], []>} : vector<64x1024xf32>, vector<1024x2xf32>, vector<64x2xf32> -> vector<64x2xf32>
    %c0_3 = arith.constant 0 : index
    %c0_4 = arith.constant 0 : index
    %3 = vector.load %arg2[%c0_3, %c0_4] : memref<64x1xf32, #tpu.memory_space<vmem>>, vector<64x1xf32>
    %4 = vector.broadcast %3 : vector<64x1xf32> to vector<64x2xf32>
    %5 = arith.addf %2, %4 : vector<64x2xf32>
    %c0_5 = arith.constant 0 : index
    %c0_6 = arith.constant 0 : index
    %6 = vector.load %arg3[%c0_5, %c0_6] : memref<10x64xf32, #tpu.memory_space<vmem>>, vector<10x64xf32>
    %cst_7 = arith.constant dense<0.000000e+00> : vector<10x2xf32>
    %7 = tpu.matmul %6, %5, %cst_7 {dimension_numbers = #tpu.dot_dimension_numbers<[1], [0], [0], [1], [0, 0, 1, 1], [], []>} : vector<10x64xf32>, vector<64x2xf32>, vector<10x2xf32> -> vector<10x2xf32>
    %c0_8 = arith.constant 0 : index
    %c0_9 = arith.constant 0 : index
    %8 = vector.load %arg4[%c0_8, %c0_9] : memref<10x1xf32, #tpu.memory_space<vmem>>, vector<10x1xf32>
    %9 = vector.broadcast %8 : vector<10x1xf32> to vector<10x2xf32>
    %10 = arith.addf %7, %9 : vector<10x2xf32>
    %c0_10 = arith.constant 0 : index
    %c0_11 = arith.constant 0 : index
    %11 = vector.load %arg5[%c0_10, %c0_11] : memref<10x2xf32, #tpu.memory_space<vmem>>, vector<10x2xf32>
    tpu.vector_store %arg5[%c0_10, %c0_11], %10 {strides = array<i32>} : memref<10x2xf32, #tpu.memory_space<vmem>>, vector<10x2xf32>,
    return
  }
}

</mosaic_0001>

<llo_original>
// kernel: tudui_forward.4
$region0: #{tudui_forward.4}
  #allocation0 [shape = 'u32[]', space=smem, size = 0x4, offset = 0x4, fixed_abs, tag = 'smem constant byte address 0x4 - core index']
  #allocation1 [shape = 'u32[144,128]{1,0:T(1,128)}', space=vmem, size = 0x12000, scoped, tag = 'internal scratch']
  %s0 = inlined_call_operand.vmem [shape: bf16[80,2048], index: 0, kind: input, shape index: {}]
  %s1 = inlined_call_operand.vmem [shape: bf16[32,80], index: 1, kind: input, shape index: {}]
  %s2 = inlined_call_operand.vmem [shape: f32[32,1], index: 2, kind: input, shape index: {}]
  %s3 = inlined_call_operand.vmem [shape: f32[32,512], index: 3, kind: output, shape index: {}]
  %s4 = sld [smem:[#allocation0]]
  $region87: #{tudui_forward.4} parent=0
    _
  %s6 = ssub.s32 1, %s4
  %s7 = scalar_select 0, %s6, %s4
  $region1: #{tudui_forward.4} parent=0
    #allocation2 [shape = 'u8[327680]{0}', space=vmem, size = 0x50000, scoped, tag = 'input window, operand 0']
    #allocation3 [shape = 'u8[65536]{0}', space=vmem, size = 0x10000, scoped, tag = 'output window, operand 0']
    loop: start=0, step=1, limit=4
    $region2: #{tudui_forward.4} parent=1 // loop_pre_header
      _
    $region3: #{tudui_forward.4} parent=1 // loop_header
      %s9 = sphi 0, %s13
      %p10 = scmp.ge.s32.totalorder %s9, 4
      %s19 = sphi 0, %s21
      %s22 = sphi 0, %s19
      %s23 = sphi 0, %s22
      %s39 = sphi 0, %s23
      %s43 = sphi 0, %s43
      %s45 = sphi 0, %s43
      %s46 = sphi 0, %s45
      %s60 = sphi 0, %s46
      %s64 = sphi 0, %s64
      %s66 = sphi 0, %s64
      %s67 = sphi 0, %s66
      %s81 = sphi 0, %s67
      %s87 = sphi 0, %s89
      %s90 = sphi 0, %s87
      %s91 = sphi 0, %s90
      %s107 = sphi 0, %s91
    $region4: #{tudui_forward.4} parent=1 // loop_header_branch
      %12 = sbr.rel (%p10) target = $region8
    $region5: #{tudui_forward.4} parent=1 // loop_body
      %s14 = ssub.s32 %s9, 1
      %s15 = ssub.s32 %s9, 2
      %s16 = sadd.s32 %s9, 1
      %s17 = ssub.s32 %s9, %s16
      %p18 = scmp.eq.s32.totalorder %s17, 0
      %s20 = sadd.s32 %s19, 1
      %s21 = scalar_select %p18, %s19, %s20
      %p24 = pneg %p18
      %p25 = scmp.eq.s32.totalorder %s9, 1
      %p26 = por %p24, %p25
      %p27 = scmp.ne.s32.totalorder %s19, %s22
      %p28 = scmp.eq.s32.totalorder %s9, 0
      %p29 = por %p27, %p28
      %p30 = scmp.ne.s32.totalorder %s19, %s22
      %p31 = scmp.eq.s32.totalorder %s14, 1
      %p32 = por %p30, %p31
      %p33 = scmp.ne.s32.totalorder %s22, %s23
      %p34 = scmp.eq.s32.totalorder %s14, 0
      %p35 = por %p33, %p34
      %p36 = scmp.ne.s32.totalorder %s22, %s23
      %p37 = scmp.eq.s32.totalorder %s15, 1
      %p38 = por %p36, %p37
      %p40 = scmp.ne.s32.totalorder %s23, %s39
      %p41 = scmp.eq.s32.totalorder %s15, 0
      %p42 = por %p40, %p41
      %s44 = sadd.s32 %s43, 1
      %p47 = scmp.eq.s32.totalorder %s9, 1
      %p48 = scmp.ne.s32.totalorder %s43, %s45
      %p49 = scmp.eq.s32.totalorder %s9, 0
      %p50 = por %p48, %p49
      %p51 = scmp.ne.s32.totalorder %s43, %s45
      %p52 = scmp.eq.s32.totalorder %s14, 1
      %p53 = por %p51, %p52
      %p54 = scmp.ne.s32.totalorder %s45, %s46
      %p55 = scmp.eq.s32.totalorder %s14, 0
      %p56 = por %p54, %p55
      %p57 = scmp.ne.s32.totalorder %s45, %s46
      %p58 = scmp.eq.s32.totalorder %s15, 1
      %p59 = por %p57, %p58
      %p61 = scmp.ne.s32.totalorder %s46, %s60
      %p62 = scmp.eq.s32.totalorder %s15, 0
      %p63 = por %p61, %p62
      %s65 = sadd.s32 %s64, 1
      %p68 = scmp.eq.s32.totalorder %s9, 1
      %p69 = scmp.ne.s32.totalorder %s64, %s66
      %p70 = scmp.eq.s32.totalorder %s9, 0
      %p71 = por %p69, %p70
      %p72 = scmp.ne.s32.totalorder %s64, %s66
      %p73 = scmp.eq.s32.totalorder %s14, 1
      %p74 = por %p72, %p73
      %p75 = scmp.ne.s32.totalorder %s66, %s67
      %p76 = scmp.eq.s32.totalorder %s14, 0
      %p77 = por %p75, %p76
      %p78 = scmp.ne.s32.totalorder %s66, %s67
      %p79 = scmp.eq.s32.totalorder %s15, 1
      %p80 = por %p78, %p79
      %p82 = scmp.ne.s32.totalorder %s67, %s81
      %p83 = scmp.eq.s32.totalorder %s15, 0
      %p84 = por %p82, %p83
      %s85 = ssub.s32 %s9, %s16
      %p86 = scmp.eq.s32.totalorder %s85, 0
      %s88 = sadd.s32 %s87, 1
      %s89 = scalar_select %p86, %s87, %s88
      %p92 = pneg %p86
      %p93 = scmp.eq.s32.totalorder %s9, 1
      %p94 = por %p92, %p93
      %p95 = scmp.ne.s32.totalorder %s87, %s90
      %p96 = scmp.eq.s32.totalorder %s9, 0
      %p97 = por %p95, %p96
      %p98 = scmp.ne.s32.totalorder %s87, %s90
      %p99 = scmp.eq.s32.totalorder %s14, 1
      %p100 = por %p98, %p99
      %p101 = scmp.ne.s32.totalorder %s90, %s91
      %p102 = scmp.eq.s32.totalorder %s14, 0
      %p103 = por %p101, %p102
      %p104 = scmp.ne.s32.totalorder %s90, %s91
      %p105 = scmp.eq.s32.totalorder %s15, 1
      %p106 = por %p104, %p105
      %p108 = scmp.ne.s32.totalorder %s91, %s107
      %p109 = scmp.eq.s32.totalorder %s15, 0
      %p110 = por %p108, %p109
      %p111 = scmp.le.s32.totalorder 1, %s9
      %p112 = scmp.lt.s32.totalorder %s9, 3
      %p113 = pnand %p111, %p112
      %p114 = pneg %p113
      // Predicated region
      $region9: #{tudui_forward.4} parent=5 // pred_check
        _
      $region10: #{tudui_forward.4} parent=5 // pred_check_branch
        %116 = sbr.rel (%p113) target = $region12
      $region11: #{tudui_forward.4} parent=5 // pred_region
        %s117 = ssub.s32 %s9, 1
        // Predicated region
        $region13: #{tudui_forward.4} parent=11 // pred_check
          %p118 = pneg %p56
        $region14: #{tudui_forward.4} parent=11 // pred_check_branch
          %120 = sbr.rel (%p118) target = $region16
        $region15: #{tudui_forward.4} parent=11 // pred_region
          _
        $region16: #{tudui_forward.4} parent=11 // pred_fallthru
          _
        // Predicated region
        $region17: #{tudui_forward.4} parent=11 // pred_check
          %p121 = pneg %p77
        $region18: #{tudui_forward.4} parent=11 // pred_check_branch
          %123 = sbr.rel (%p121) target = $region20
        $region19: #{tudui_forward.4} parent=11 // pred_region
          _
        $region20: #{tudui_forward.4} parent=11 // pred_fallthru
          _
      $region12: #{tudui_forward.4} parent=5 // pred_fallthru
        _
      %p124 = scmp.lt.s32.totalorder %s9, 2
      // Predicated region
      $region21: #{tudui_forward.4} parent=5 // pred_check
        %p125 = pneg %p124
      $region22: #{tudui_forward.4} parent=5 // pred_check_branch
        %127 = sbr.rel (%p125) target = $region24
      $region23: #{tudui_forward.4} parent=5 // pred_region
        // Predicated region
        $region25: #{tudui_forward.4} parent=23 // pred_check
          %p128 = pneg %p29
        $region26: #{tudui_forward.4} parent=23 // pred_check_branch
          %130 = sbr.rel (%p128) target = $region28
        $region27: #{tudui_forward.4} parent=23 // pred_region
          %s131 = sand.u32 %s19, 1
          %s132 = sand.u32 %s19, 1
          %s133 = smul.addr %s132, 320
          %s134 = scalar_lea.vmem [#allocation2], %s133
          %s135 = smul.u32 8, %s9
          %s136 = smul.addr %s135, 4
          %s137 = scalar_lea.vmem %s0, %s136
          // Predicated region
          $region29: #{tudui_forward.4} parent=27 // pred_check
            _
          $region30: #{tudui_forward.4} parent=27 // pred_check_branch
            %139 = sbr.rel (0) target = $region32
          $region31: #{tudui_forward.4} parent=27 // pred_region
            // Predicated region
            $region33: #{tudui_forward.4} parent=31 // pred_check
              _
            $region34: #{tudui_forward.4} parent=31 // pred_check_branch
              %141 = sbr.rel (0) target = $region36
            $region35: #{tudui_forward.4} parent=31 // pred_region
              loop: start=0, step=1, limit=1
              $region37: #{tudui_forward.4} parent=35 // loop_pre_header
                _
              $region38: #{tudui_forward.4} parent=35 // loop_header
                %s143 = sphi 0, %s147
                %p144 = scmp.ge.s32.totalorder %s143, 1
                %s148 = sphi %s137, %s137
                %s149 = sphi %s134, %s134
              $region39: #{tudui_forward.4} parent=35 // loop_header_branch
                %146 = sbr.rel (%p144) target = $region43
              $region40: #{tudui_forward.4} parent=35 // loop_body
                %v150 = vld [vmem:[%s148] sm:$0xff]
                %151 = vst [vmem:[%s149] sm:$0xff] %v150
                %v152 = vld [vmem:[%s148 + $0x8] sm:$0xff]
                %153 = vst [vmem:[%s149 + $0x8] sm:$0xff] %v152
                %v154 = vld [vmem:[%s148 + $0x10] sm:$0xff]
                %155 = vst [vmem:[%s149 + $0x10] sm:$0xff] %v154
                %v156 = vld [vmem:[%s148 + $0x18] sm:$0xff]
                %157 = vst [vmem:[%s149 + $0x18] sm:$0xff] %v156
                %v158 = vld [vmem:[%s148 + $0x40] sm:$0xff]
                %159 = vst [vmem:[%s149 + $0x20] sm:$0xff] %v158
                %v160 = vld [vmem:[%s148 + $0x48] sm:$0xff]
                %161 = vst [vmem:[%s149 + $0x28] sm:$0xff] %v160
                %v162 = vld [vmem:[%s148 + $0x50] sm:$0xff]
                %163 = vst [vmem:[%s149 + $0x30] sm:$0xff] %v162
                %v164 = vld [vmem:[%s148 + $0x58] sm:$0xff]
                %165 = vst [vmem:[%s149 + $0x38] sm:$0xff] %v164
                %v166 = vld [vmem:[%s148 + $0x80] sm:$0xff]
                %167 = vst [vmem:[%s149 + $0x40] sm:$0xff] %v166
                %v168 = vld [vmem:[%s148 + $0x88] sm:$0xff]
                %169 = vst [vmem:[%s149 + $0x48] sm:$0xff] %v168
                %v170 = vld [vmem:[%s148 + $0x90] sm:$0xff]
                %171 = vst [vmem:[%s149 + $0x50] sm:$0xff] %v170
                %v172 = vld [vmem:[%s148 + $0x98] sm:$0xff]
                %173 = vst [vmem:[%s149 + $0x58] sm:$0xff] %v172
                %v174 = vld [vmem:[%s148 + $0xc0] sm:$0xff]
                %175 = vst [vmem:[%s149 + $0x60] sm:$0xff] %v174
                %v176 = vld [vmem:[%s148 + $0xc8] sm:$0xff]
                %177 = vst [vmem:[%s149 + $0x68] sm:$0xff] %v176
                %v178 = vld [vmem:[%s148 + $0xd0] sm:$0xff]
                %179 = vst [vmem:[%s149 + $0x70] sm:$0xff] %v178
                %v180 = vld [vmem:[%s148 + $0xd8] sm:$0xff]
                %181 = vst [vmem:[%s149 + $0x78] sm:$0xff] %v180
                %v182 = vld [vmem:[%s148 + $0x100] sm:$0xff]
                %183 = vst [vmem:[%s149 + $0x80] sm:$0xff] %v182
                %v184 = vld [vmem:[%s148 + $0x108] sm:$0xff]
                %185 = vst [vmem:[%s149 + $0x88] sm:$0xff] %v184
                %v186 = vld [vmem:[%s148 + $0x110] sm:$0xff]
                %187 = vst [vmem:[%s149 + $0x90] sm:$0xff] %v186
                %v188 = vld [vmem:[%s148 + $0x118] sm:$0xff]
                %189 = vst [vmem:[%s149 + $0x98] sm:$0xff] %v188
                %v190 = vld [vmem:[%s148 + $0x140] sm:$0xff]
                %191 = vst [vmem:[%s149 + $0xa0] sm:$0xff] %v190
                %v192 = vld [vmem:[%s148 + $0x148] sm:$0xff]
                %193 = vst [vmem:[%s149 + $0xa8] sm:$0xff] %v192
                %v194 = vld [vmem:[%s148 + $0x150] sm:$0xff]
                %195 = vst [vmem:[%s149 + $0xb0] sm:$0xff] %v194
                %v196 = vld [vmem:[%s148 + $0x158] sm:$0xff]
                %197 = vst [vmem:[%s149 + $0xb8] sm:$0xff] %v196
                %v198 = vld [vmem:[%s148 + $0x180] sm:$0xff]
                %199 = vst [vmem:[%s149 + $0xc0] sm:$0xff] %v198
                %v200 = vld [vmem:[%s148 + $0x188] sm:$0xff]
                %201 = vst [vmem:[%s149 + $0xc8] sm:$0xff] %v200
                %v202 = vld [vmem:[%s148 + $0x190] sm:$0xff]
                %203 = vst [vmem:[%s149 + $0xd0] sm:$0xff] %v202
                %v204 = vld [vmem:[%s148 + $0x198] sm:$0xff]
                %205 = vst [vmem:[%s149 + $0xd8] sm:$0xff] %v204
                %v206 = vld [vmem:[%s148 + $0x1c0] sm:$0xff]
                %207 = vst [vmem:[%s149 + $0xe0] sm:$0xff] %v206
                %v208 = vld [vmem:[%s148 + $0x1c8] sm:$0xff]
                %209 = vst [vmem:[%s149 + $0xe8] sm:$0xff] %v208
                %v210 = vld [vmem:[%s148 + $0x1d0] sm:$0xff]
                %211 = vst [vmem:[%s149 + $0xf0] sm:$0xff] %v210
                %v212 = vld [vmem:[%s148 + $0x1d8] sm:$0xff]
                %213 = vst [vmem:[%s149 + $0xf8] sm:$0xff] %v212
                %v214 = vld [vmem:[%s148 + $0x200] sm:$0xff]
                %215 = vst [vmem:[%s149 + $0x100] sm:$0xff] %v214
                %v216 = vld [vmem:[%s148 + $0x208] sm:$0xff]
                %217 = vst [vmem:[%s149 + $0x108] sm:$0xff] %v216
                %v218 = vld [vmem:[%s148 + $0x210] sm:$0xff]
                %219 = vst [vmem:[%s149 + $0x110] sm:$0xff] %v218
                %v220 = vld [vmem:[%s148 + $0x218] sm:$0xff]
                %221 = vst [vmem:[%s149 + $0x118] sm:$0xff] %v220
                %v222 = vld [vmem:[%s148 + $0x240] sm:$0xff]
                %223 = vst [vmem:[%s149 + $0x120] sm:$0xff] %v222
                %v224 = vld [vmem:[%s148 + $0x248] sm:$0xff]
                %225 = vst [vmem:[%s149 + $0x128] sm:$0xff] %v224
                %v226 = vld [vmem:[%s148 + $0x250] sm:$0xff]
                %227 = vst [vmem:[%s149 + $0x130] sm:$0xff] %v226
                %v228 = vld [vmem:[%s148 + $0x258] sm:$0xff]
                %229 = vst [vmem:[%s149 + $0x138] sm:$0xff] %v228
              $region41: #{tudui_forward.4} parent=35 // loop_footer
                %s147 = sadd.s32 1, %s143
              $region42: #{tudui_forward.4} parent=35 // loop_footer_branch
                %142 = sbr.rel target = $region38
              $region43: #{tudui_forward.4} parent=35 // loop_exit
                _
            $region36: #{tudui_forward.4} parent=31 // pred_fallthru
              _
            // Predicated region
            $region44: #{tudui_forward.4} parent=31 // pred_check
              _
            $region45: #{tudui_forward.4} parent=31 // pred_check_branch
              %231 = sbr.rel target = $region47
            $region46: #{tudui_forward.4} parent=31 // pred_region
              _
            $region47: #{tudui_forward.4} parent=31 // pred_fallthru
              _
          $region32: #{tudui_forward.4} parent=27 // pred_fallthru
            _
          %232 = vnop
        $region28: #{tudui_forward.4} parent=23 // pred_fallthru
          _
      $region24: #{tudui_forward.4} parent=5 // pred_fallthru
        _
      %p233 = scmp.le.s32.totalorder 1, %s9
      %p234 = scmp.lt.s32.totalorder %s9, 3
      %p235 = pnand %p233, %p234
      %p236 = pneg %p235
      // Predicated region
      $region48: #{tudui_forward.4} parent=5 // pred_check
        _
      $region49: #{tudui_forward.4} parent=5 // pred_check_branch
        %238 = sbr.rel (%p235) target = $region51
      $region50: #{tudui_forward.4} parent=5 // pred_region
        %s239 = ssub.s32 %s9, 1
        %s240 = sand.u32 %s22, 1
        %s241 = sand.u32 %s22, 1
        %s242 = smul.addr %s241, 320
        %s243 = scalar_lea.vmem [#allocation2], %s242
        // Predicated region
        $region52: #{tudui_forward.4} parent=50 // pred_check
          %p244 = pneg %p35
        $region53: #{tudui_forward.4} parent=50 // pred_check_branch
          %246 = sbr.rel (%p244) target = $region55
        $region54: #{tudui_forward.4} parent=50 // pred_region
          _
        $region55: #{tudui_forward.4} parent=50 // pred_fallthru
          _
        %s247 = sand.u32 %s22, 1
        %s248 = sand.u32 %s22, 1
        %s249 = smul.addr %s248, 320
        %s250 = scalar_lea.vmem [#allocation2], %s249
        %p251 = pneg %p35
        %p252 = pneg %p32
        %p253 = pneg %p56
        %p254 = pneg %p53
        %p255 = pneg %p77
        %p256 = pneg %p74
        %p257 = pneg %p103
        %p258 = pneg %p100
        %s259 = sand.u32 %s90, 1
        %s260 = sand.u32 %s90, 1
        %s261 = smul.addr %s260, 64
        %s262 = scalar_lea.vmem [#allocation3], %s261
        %s263 = smul.u32 8, %s14
        %s264 = smul.u32 2, %s14
        %v266 = vld [vmem:[%s1] sm:$0xf]
        %v267 = vld [vmem:[%s1 + $0x4] sm:$0xf]
        %v268 = vld [vmem:[%s1 + $0x8] sm:$0xf]
        %v269 = vld [vmem:[%s1 + $0xc] sm:$0xf]
        %v270 = vld [vmem:[%s243] sm:$0xff]
        %v271 = vld [vmem:[%s243 + $0x8] sm:$0xff]
        %v272 = vld [vmem:[%s243 + $0x10] sm:$0xff]
        %v273 = vld [vmem:[%s243 + $0x18] sm:$0xff]
        %v274 = vld [vmem:[%s243 + $0x20] sm:$0xff]
        %v275 = vld [vmem:[%s243 + $0x28] sm:$0xff]
        %v276 = vld [vmem:[%s243 + $0x30] sm:$0xff]
        %v277 = vld [vmem:[%s243 + $0x38] sm:$0xff]
        %v278 = vld [vmem:[%s243 + $0x40] sm:$0xff]
        %v279 = vld [vmem:[%s243 + $0x48] sm:$0xff]
        %v280 = vld [vmem:[%s243 + $0x50] sm:$0xff]
        %v281 = vld [vmem:[%s243 + $0x58] sm:$0xff]
        %v282 = vld [vmem:[%s243 + $0x60] sm:$0xff]
        %v283 = vld [vmem:[%s243 + $0x68] sm:$0xff]
        %v284 = vld [vmem:[%s243 + $0x70] sm:$0xff]
        %v285 = vld [vmem:[%s243 + $0x78] sm:$0xff]
        %v286 = vld [vmem:[%s243 + $0x80] sm:$0xff]
        %v287 = vld [vmem:[%s243 + $0x88] sm:$0xff]
        %v288 = vld [vmem:[%s243 + $0x90] sm:$0xff]
        %v289 = vld [vmem:[%s243 + $0x98] sm:$0xff]
        %v290 = vld [vmem:[%s243 + $0xa0] sm:$0xff]
        %v291 = vld [vmem:[%s243 + $0xa8] sm:$0xff]
        %v292 = vld [vmem:[%s243 + $0xb0] sm:$0xff]
        %v293 = vld [vmem:[%s243 + $0xb8] sm:$0xff]
        %v294 = vld [vmem:[%s243 + $0xc0] sm:$0xff]
        %v295 = vld [vmem:[%s243 + $0xc8] sm:$0xff]
        %v296 = vld [vmem:[%s243 + $0xd0] sm:$0xff]
        %v297 = vld [vmem:[%s243 + $0xd8] sm:$0xff]
        %v298 = vld [vmem:[%s243 + $0xe0] sm:$0xff]
        %v299 = vld [vmem:[%s243 + $0xe8] sm:$0xff]
        %v300 = vld [vmem:[%s243 + $0xf0] sm:$0xff]
        %v301 = vld [vmem:[%s243 + $0xf8] sm:$0xff]
        %v302 = vld [vmem:[%s243 + $0x100] sm:$0xff]
        %v303 = vld [vmem:[%s243 + $0x108] sm:$0xff]
        %v304 = vld [vmem:[%s243 + $0x110] sm:$0xff]
        %v305 = vld [vmem:[%s243 + $0x118] sm:$0xff]
        %v306 = vld [vmem:[%s243 + $0x120] sm:$0xff]
        %v307 = vld [vmem:[%s243 + $0x128] sm:$0xff]
        %v308 = vld [vmem:[%s243 + $0x130] sm:$0xff]
        %v309 = vld [vmem:[%s243 + $0x138] sm:$0xff]
        %v314 = vunpack.c.l.b16 %v266
        %v315 = vunpack.c.l.b16 %v267
        %v316 = vunpack.c.l.b16 %v268
        %v317 = vunpack.c.l.b16 %v269
        %v318 = vpack.c.b16 %v315, %v314
        %v319 = vpack.c.b16 %v317, %v316
        %v360 = vunpack.c.l.b16 %v270
        %v361 = vunpack.c.h.b16 %v270
        %v362 = vunpack.c.l.b16 %v271
        %v363 = vunpack.c.h.b16 %v271
        %v364 = vunpack.c.l.b16 %v272
        %v365 = vunpack.c.h.b16 %v272
        %v366 = vunpack.c.l.b16 %v273
        %v367 = vunpack.c.h.b16 %v273
        %v368 = vunpack.c.l.b16 %v274
        %v369 = vunpack.c.h.b16 %v274
        %v370 = vunpack.c.l.b16 %v275
        %v371 = vunpack.c.h.b16 %v275
        %v372 = vunpack.c.l.b16 %v276
        %v373 = vunpack.c.h.b16 %v276
        %v374 = vunpack.c.l.b16 %v277
        %v375 = vunpack.c.h.b16 %v277
        %v376 = vunpack.c.l.b16 %v278
        %v377 = vunpack.c.h.b16 %v278
        %v378 = vunpack.c.l.b16 %v279
        %v379 = vunpack.c.h.b16 %v279
        %v380 = vunpack.c.l.b16 %v280
        %v381 = vunpack.c.h.b16 %v280
        %v382 = vunpack.c.l.b16 %v281
        %v383 = vunpack.c.h.b16 %v281
        %v384 = vunpack.c.l.b16 %v282
        %v385 = vunpack.c.h.b16 %v282
        %v386 = vunpack.c.l.b16 %v283
        %v387 = vunpack.c.h.b16 %v283
        %v388 = vunpack.c.l.b16 %v284
        %v389 = vunpack.c.h.b16 %v284
        %v390 = vunpack.c.l.b16 %v285
        %v391 = vunpack.c.h.b16 %v285
        %v392 = vunpack.c.l.b16 %v286
        %v393 = vunpack.c.h.b16 %v286
        %v394 = vunpack.c.l.b16 %v287
        %v395 = vunpack.c.h.b16 %v287
        %v396 = vunpack.c.l.b16 %v288
        %v397 = vunpack.c.h.b16 %v288
        %v398 = vunpack.c.l.b16 %v289
        %v399 = vunpack.c.h.b16 %v289
        %v400 = vunpack.c.l.b16 %v290
        %v401 = vunpack.c.h.b16 %v290
        %v402 = vunpack.c.l.b16 %v291
        %v403 = vunpack.c.h.b16 %v291
        %v404 = vunpack.c.l.b16 %v292
        %v405 = vunpack.c.h.b16 %v292
        %v406 = vunpack.c.l.b16 %v293
        %v407 = vunpack.c.h.b16 %v293
        %v408 = vunpack.c.l.b16 %v294
        %v409 = vunpack.c.h.b16 %v294
        %v410 = vunpack.c.l.b16 %v295
        %v411 = vunpack.c.h.b16 %v295
        %v412 = vunpack.c.l.b16 %v296
        %v413 = vunpack.c.h.b16 %v296
        %v414 = vunpack.c.l.b16 %v297
        %v415 = vunpack.c.h.b16 %v297
        %v416 = vunpack.c.l.b16 %v298
        %v417 = vunpack.c.h.b16 %v298
        %v418 = vunpack.c.l.b16 %v299
        %v419 = vunpack.c.h.b16 %v299
        %v420 = vunpack.c.l.b16 %v300
        %v421 = vunpack.c.h.b16 %v300
        %v422 = vunpack.c.l.b16 %v301
        %v423 = vunpack.c.h.b16 %v301
        %v424 = vunpack.c.l.b16 %v302
        %v425 = vunpack.c.h.b16 %v302
        %v426 = vunpack.c.l.b16 %v303
        %v427 = vunpack.c.h.b16 %v303
        %v428 = vunpack.c.l.b16 %v304
        %v429 = vunpack.c.h.b16 %v304
        %v430 = vunpack.c.l.b16 %v305
        %v431 = vunpack.c.h.b16 %v305
        %v432 = vunpack.c.l.b16 %v306
        %v433 = vunpack.c.h.b16 %v306
        %v434 = vunpack.c.l.b16 %v307
        %v435 = vunpack.c.h.b16 %v307
        %v436 = vunpack.c.l.b16 %v308
        %v437 = vunpack.c.h.b16 %v308
        %v438 = vunpack.c.l.b16 %v309
        %v439 = vunpack.c.h.b16 %v309
        %v440 = vpack.c.b16 %v368, %v360
        %v441 = vpack.c.b16 %v369, %v361
        %v442 = vpack.c.b16 %v370, %v362
        %v443 = vpack.c.b16 %v371, %v363
        %v444 = vpack.c.b16 %v372, %v364
        %v445 = vpack.c.b16 %v373, %v365
        %v446 = vpack.c.b16 %v374, %v366
        %v447 = vpack.c.b16 %v375, %v367
        %v448 = vpack.c.b16 %v384, %v376
        %v449 = vpack.c.b16 %v385, %v377
        %v450 = vpack.c.b16 %v386, %v378
        %v451 = vpack.c.b16 %v387, %v379
        %v452 = vpack.c.b16 %v388, %v380
        %v453 = vpack.c.b16 %v389, %v381
        %v454 = vpack.c.b16 %v390, %v382
        %v455 = vpack.c.b16 %v391, %v383
        %v456 = vpack.c.b16 %v400, %v392
        %v457 = vpack.c.b16 %v401, %v393
        %v458 = vpack.c.b16 %v402, %v394
        %v459 = vpack.c.b16 %v403, %v395
        %v460 = vpack.c.b16 %v404, %v396
        %v461 = vpack.c.b16 %v405, %v397
        %v462 = vpack.c.b16 %v406, %v398
        %v463 = vpack.c.b16 %v407, %v399
        %v464 = vpack.c.b16 %v416, %v408
        %v465 = vpack.c.b16 %v417, %v409
        %v466 = vpack.c.b16 %v418, %v410
        %v467 = vpack.c.b16 %v419, %v411
        %v468 = vpack.c.b16 %v420, %v412
        %v469 = vpack.c.b16 %v421, %v413
        %v470 = vpack.c.b16 %v422, %v414
        %v471 = vpack.c.b16 %v423, %v415
        %v472 = vpack.c.b16 %v432, %v424
        %v473 = vpack.c.b16 %v433, %v425
        %v474 = vpack.c.b16 %v434, %v426
        %v475 = vpack.c.b16 %v435, %v427
        %v476 = vpack.c.b16 %v436, %v428
        %v477 = vpack.c.b16 %v437, %v429
        %v478 = vpack.c.b16 %v438, %v430
        %v479 = vpack.c.b16 %v439, %v431
        %vm520 = vcmask 654336
        %v522 = vsel %vm520, %v318, 0
        %v525 = vsel %vm520, %v319, 0
        %527 = vmatprep.subr.bf16.mxu0 0
        %528 = vmatpush1.bf16.msra.mxu0 0
        %529 = vmatprep.subr.bf16.mxu0 0
        %530 = vmatpush1.bf16.msra.mxu0 0
        %531 = vmatprep.subr.bf16.mxu0 0
        %532 = vmatpush1.bf16.msra.mxu0 0
        %533 = vmatprep.subr.bf16.mxu0 %v473
        %534 = vmatpush1.bf16.msra.mxu0 %v472
        %535 = vmatprep.subr.bf16.mxu0 %v465
        %536 = vmatpush1.bf16.msra.mxu0 %v464
        %537 = vmatprep.subr.bf16.mxu0 %v457
        %538 = vmatpush1.bf16.msra.mxu0 %v456
        %539 = vmatprep.subr.bf16.mxu0 %v449
        %540 = vmatpush1.bf16.msra.mxu0 %v448
        %541 = vmatprep.subr.bf16.mxu0 %v441
        %542 = vmatpush1.bf16.msra.mxu0 %v440
        %543 = vmatprep.subr.bf16.mxu0 0
        %544 = vmatpush2.bf16.msra.mxu0 0
        %545 = vmatprep.subr.bf16.mxu0 0
        %546 = vmatpush2.bf16.msra.mxu0 0
        %547 = vmatprep.subr.bf16.mxu0 0
        %548 = vmatpush2.bf16.msra.mxu0 0
        %549 = vmatprep.subr.bf16.mxu0 0
        %550 = vmatpush2.bf16.msra.mxu0 0
        %551 = vmatprep.subr.bf16.mxu0 0
        %552 = vmatpush2.bf16.msra.mxu0 0
        %553 = vmatprep.subr.bf16.mxu0 0
        %554 = vmatpush2.bf16.msra.mxu0 0
        %555 = vmatprep.subr.bf16.mxu0 0
        %556 = vmatpush2.bf16.msra.mxu0 0
        %557 = vmatprep.subr.bf16.mxu0 0
        %558 = vmatpush2.bf16.msra.mxu0 0
        %559 = vmatprep.mubr.bf16.mxu0 0
        %560 = vmatmul.mubr.bf16.gmra.mxu0 %v522
        %v561 = vpop.f32.mrf.mxu0
        %v562 = vadd.f32 0.0, %v561
        %v563 = vpop.f32.mrf.mxu0
        %v564 = vadd.f32 0.0, %v563
        %v565 = vpop.f32.mrf.mxu0
        %v566 = vadd.f32 0.0, %v565
        %v567 = vpop.f32.mrf.mxu0
        %v568 = vadd.f32 0.0, %v567
        %569 = vmatprep.mubr.bf16.mxu0 0
        %570 = vmatmul.mubr.bf16.gmra.mxu0 %v525
        %v571 = vpop.f32.mrf.mxu0
        %v572 = vadd.f32 0.0, %v571
        %v573 = vpop.f32.mrf.mxu0
        %v574 = vadd.f32 0.0, %v573
        %v575 = vpop.f32.mrf.mxu0
        %v576 = vadd.f32 0.0, %v575
        %v577 = vpop.f32.mrf.mxu0
        %v578 = vadd.f32 0.0, %v577
        %579 = vdwg.mxu0
        %580 = vmatprep.subr.bf16.mxu0 0
        %581 = vmatpush1.bf16.msra.mxu0 0
        %582 = vmatprep.subr.bf16.mxu0 0
        %583 = vmatpush1.bf16.msra.mxu0 0
        %584 = vmatprep.subr.bf16.mxu0 0
        %585 = vmatpush1.bf16.msra.mxu0 0
        %586 = vmatprep.subr.bf16.mxu0 %v475
        %587 = vmatpush1.bf16.msra.mxu0 %v474
        %588 = vmatprep.subr.bf16.mxu0 %v467
        %589 = vmatpush1.bf16.msra.mxu0 %v466
        %590 = vmatprep.subr.bf16.mxu0 %v459
        %591 = vmatpush1.bf16.msra.mxu0 %v458
        %592 = vmatprep.subr.bf16.mxu0 %v451
        %593 = vmatpush1.bf16.msra.mxu0 %v450
        %594 = vmatprep.subr.bf16.mxu0 %v443
        %595 = vmatpush1.bf16.msra.mxu0 %v442
        %596 = vmatprep.subr.bf16.mxu0 0
        %597 = vmatpush2.bf16.msra.mxu0 0
        %598 = vmatprep.subr.bf16.mxu0 0
        %599 = vmatpush2.bf16.msra.mxu0 0
        %600 = vmatprep.subr.bf16.mxu0 0
        %601 = vmatpush2.bf16.msra.mxu0 0
        %602 = vmatprep.subr.bf16.mxu0 0
        %603 = vmatpush2.bf16.msra.mxu0 0
        %604 = vmatprep.subr.bf16.mxu0 0
        %605 = vmatpush2.bf16.msra.mxu0 0
        %606 = vmatprep.subr.bf16.mxu0 0
        %607 = vmatpush2.bf16.msra.mxu0 0
        %608 = vmatprep.subr.bf16.mxu0 0
        %609 = vmatpush2.bf16.msra.mxu0 0
        %610 = vmatprep.subr.bf16.mxu0 0
        %611 = vmatpush2.bf16.msra.mxu0 0
        %612 = vmatprep.mubr.bf16.mxu0 0
        %613 = vmatmul.mubr.bf16.gmra.mxu0 %v522
        %v614 = vpop.f32.mrf.mxu0
        %v615 = vadd.f32 0.0, %v614
        %v616 = vpop.f32.mrf.mxu0
        %v617 = vadd.f32 0.0, %v616
        %v618 = vpop.f32.mrf.mxu0
        %v619 = vadd.f32 0.0, %v618
        %v620 = vpop.f32.mrf.mxu0
        %v621 = vadd.f32 0.0, %v620
        %622 = vmatprep.mubr.bf16.mxu0 0
        %623 = vmatmul.mubr.bf16.gmra.mxu0 %v525
        %v624 = vpop.f32.mrf.mxu0
        %v625 = vadd.f32 0.0, %v624
        %v626 = vpop.f32.mrf.mxu0
        %v627 = vadd.f32 0.0, %v626
        %v628 = vpop.f32.mrf.mxu0
        %v629 = vadd.f32 0.0, %v628
        %v630 = vpop.f32.mrf.mxu0
        %v631 = vadd.f32 0.0, %v630
        %632 = vdwg.mxu0
        %633 = vmatprep.subr.bf16.mxu0 0
        %634 = vmatpush1.bf16.msra.mxu0 0
        %635 = vmatprep.subr.bf16.mxu0 0
        %636 = vmatpush1.bf16.msra.mxu0 0
        %637 = vmatprep.subr.bf16.mxu0 0
        %638 = vmatpush1.bf16.msra.mxu0 0
        %639 = vmatprep.subr.bf16.mxu0 %v477
        %640 = vmatpush1.bf16.msra.mxu0 %v476
        %641 = vmatprep.subr.bf16.mxu0 %v469
        %642 = vmatpush1.bf16.msra.mxu0 %v468
        %643 = vmatprep.subr.bf16.mxu0 %v461
        %644 = vmatpush1.bf16.msra.mxu0 %v460
        %645 = vmatprep.subr.bf16.mxu0 %v453
        %646 = vmatpush1.bf16.msra.mxu0 %v452
        %647 = vmatprep.subr.bf16.mxu0 %v445
        %648 = vmatpush1.bf16.msra.mxu0 %v444
        %649 = vmatprep.subr.bf16.mxu0 0
        %650 = vmatpush2.bf16.msra.mxu0 0
        %651 = vmatprep.subr.bf16.mxu0 0
        %652 = vmatpush2.bf16.msra.mxu0 0
        %653 = vmatprep.subr.bf16.mxu0 0
        %654 = vmatpush2.bf16.msra.mxu0 0
        %655 = vmatprep.subr.bf16.mxu0 0
        %656 = vmatpush2.bf16.msra.mxu0 0
        %657 = vmatprep.subr.bf16.mxu0 0
        %658 = vmatpush2.bf16.msra.mxu0 0
        %659 = vmatprep.subr.bf16.mxu0 0
        %660 = vmatpush2.bf16.msra.mxu0 0
        %661 = vmatprep.subr.bf16.mxu0 0
        %662 = vmatpush2.bf16.msra.mxu0 0
        %663 = vmatprep.subr.bf16.mxu0 0
        %664 = vmatpush2.bf16.msra.mxu0 0
        %665 = vmatprep.mubr.bf16.mxu0 0
        %666 = vmatmul.mubr.bf16.gmra.mxu0 %v522
        %v667 = vpop.f32.mrf.mxu0
        %v668 = vadd.f32 0.0, %v667
        %v669 = vpop.f32.mrf.mxu0
        %v670 = vadd.f32 0.0, %v669
        %v671 = vpop.f32.mrf.mxu0
        %v672 = vadd.f32 0.0, %v671
        %v673 = vpop.f32.mrf.mxu0
        %v674 = vadd.f32 0.0, %v673
        %675 = vmatprep.mubr.bf16.mxu0 0
        %676 = vmatmul.mubr.bf16.gmra.mxu0 %v525
        %v677 = vpop.f32.mrf.mxu0
        %v678 = vadd.f32 0.0, %v677
        %v679 = vpop.f32.mrf.mxu0
        %v680 = vadd.f32 0.0, %v679
        %v681 = vpop.f32.mrf.mxu0
        %v682 = vadd.f32 0.0, %v681
        %v683 = vpop.f32.mrf.mxu0
        %v684 = vadd.f32 0.0, %v683
        %685 = vdwg.mxu0
        %686 = vmatprep.subr.bf16.mxu0 0
        %687 = vmatpush1.bf16.msra.mxu0 0
        %688 = vmatprep.subr.bf16.mxu0 0
        %689 = vmatpush1.bf16.msra.mxu0 0
        %690 = vmatprep.subr.bf16.mxu0 0
        %691 = vmatpush1.bf16.msra.mxu0 0
        %692 = vmatprep.subr.bf16.mxu0 %v479
        %693 = vmatpush1.bf16.msra.mxu0 %v478
        %694 = vmatprep.subr.bf16.mxu0 %v471
        %695 = vmatpush1.bf16.msra.mxu0 %v470
        %696 = vmatprep.subr.bf16.mxu0 %v463
        %697 = vmatpush1.bf16.msra.mxu0 %v462
        %698 = vmatprep.subr.bf16.mxu0 %v455
        %699 = vmatpush1.bf16.msra.mxu0 %v454
        %700 = vmatprep.subr.bf16.mxu0 %v447
        %701 = vmatpush1.bf16.msra.mxu0 %v446
        %702 = vmatprep.subr.bf16.mxu0 0
        %703 = vmatpush2.bf16.msra.mxu0 0
        %704 = vmatprep.subr.bf16.mxu0 0
        %705 = vmatpush2.bf16.msra.mxu0 0
        %706 = vmatprep.subr.bf16.mxu0 0
        %707 = vmatpush2.bf16.msra.mxu0 0
        %708 = vmatprep.subr.bf16.mxu0 0
        %709 = vmatpush2.bf16.msra.mxu0 0
        %710 = vmatprep.subr.bf16.mxu0 0
        %711 = vmatpush2.bf16.msra.mxu0 0
        %712 = vmatprep.subr.bf16.mxu0 0
        %713 = vmatpush2.bf16.msra.mxu0 0
        %714 = vmatprep.subr.bf16.mxu0 0
        %715 = vmatpush2.bf16.msra.mxu0 0
        %716 = vmatprep.subr.bf16.mxu0 0
        %717 = vmatpush2.bf16.msra.mxu0 0
        %718 = vmatprep.mubr.bf16.mxu0 0
        %719 = vmatmul.mubr.bf16.gmra.mxu0 %v522
        %v720 = vpop.f32.mrf.mxu0
        %v721 = vadd.f32 0.0, %v720
        %v722 = vpop.f32.mrf.mxu0
        %v723 = vadd.f32 0.0, %v722
        %v724 = vpop.f32.mrf.mxu0
        %v725 = vadd.f32 0.0, %v724
        %v726 = vpop.f32.mrf.mxu0
        %v727 = vadd.f32 0.0, %v726
        %728 = vmatprep.mubr.bf16.mxu0 0
        %729 = vmatmul.mubr.bf16.gmra.mxu0 %v525
        %v730 = vpop.f32.mrf.mxu0
        %v731 = vadd.f32 0.0, %v730
        %v732 = vpop.f32.mrf.mxu0
        %v733 = vadd.f32 0.0, %v732
        %v734 = vpop.f32.mrf.mxu0
        %v735 = vadd.f32 0.0, %v734
        %v736 = vpop.f32.mrf.mxu0
        %v737 = vadd.f32 0.0, %v736
        %738 = vdwg.mxu0
        %v739 = vmax.f32 %v562, %v615
        %v740 = vmax.f32 %v564, %v617
        %v741 = vmax.f32 %v566, %v619
        %v742 = vmax.f32 %v568, %v621
        %v743 = vmax.f32 %v572, %v625
        %v744 = vmax.f32 %v574, %v627
        %v745 = vmax.f32 %v576, %v629
        %v746 = vmax.f32 %v578, %v631
        %v747 = vmax.f32 %v668, %v721
        %v748 = vmax.f32 %v670, %v723
        %v749 = vmax.f32 %v672, %v725
        %v750 = vmax.f32 %v674, %v727
        %v751 = vmax.f32 %v678, %v731
        %v752 = vmax.f32 %v680, %v733
        %v753 = vmax.f32 %v682, %v735
        %v754 = vmax.f32 %v684, %v737
        %v755 = vmax.f32 %v739, %v747
        %v756 = vmax.f32 %v740, %v748
        %v757 = vmax.f32 %v741, %v749
        %v758 = vmax.f32 %v742, %v750
        %v759 = vmax.f32 %v743, %v751
        %v760 = vmax.f32 %v744, %v752
        %v761 = vmax.f32 %v745, %v753
        %v762 = vmax.f32 %v746, %v754
        %v763 = vld [vmem:[%s2] sm:$0xff]
        %v764 = vld [vmem:[%s2 + $0x8] sm:$0xff]
        %v765 = vld [vmem:[%s2 + $0x10] sm:$0xff]
        %v766 = vld [vmem:[%s2 + $0x18] sm:$0xff]
        %768 = vset.pattern.permute.xlu0 0
        %769 = vperm.xlu0 %768, %v763
        %v770 = vpop.permute.xlu0 %769
        %773 = vset.pattern.permute.xlu0 0
        %774 = vperm.xlu0 %773, %v764
        %v775 = vpop.permute.xlu0 %774
        %778 = vset.pattern.permute.xlu0 0
        %779 = vperm.xlu0 %778, %v765
        %v780 = vpop.permute.xlu0 %779
        %783 = vset.pattern.permute.xlu0 0
        %784 = vperm.xlu0 %783, %v766
        %v785 = vpop.permute.xlu0 %784
        %v787 = vadd.f32 %v755, %v770
        %v788 = vadd.f32 %v756, %v770
        %v789 = vadd.f32 %v757, %v775
        %v790 = vadd.f32 %v758, %v775
        %v791 = vadd.f32 %v759, %v780
        %v792 = vadd.f32 %v760, %v780
        %v793 = vadd.f32 %v761, %v785
        %v794 = vadd.f32 %v762, %v785
        %795 = vst [vmem:[%s262] sm:$0xff] %v787
        %796 = vst [vmem:[%s262 + $0x8] sm:$0xff] %v788
        %797 = vst [vmem:[%s262 + $0x10] sm:$0xff] %v789
        %798 = vst [vmem:[%s262 + $0x18] sm:$0xff] %v790
        %799 = vst [vmem:[%s262 + $0x20] sm:$0xff] %v791
        %800 = vst [vmem:[%s262 + $0x28] sm:$0xff] %v792
        %801 = vst [vmem:[%s262 + $0x30] sm:$0xff] %v793
        %802 = vst [vmem:[%s262 + $0x38] sm:$0xff] %v794
        %s803 = sand.u32 %s90, 1
        %s804 = sand.u32 %s90, 1
        %s805 = smul.addr %s804, 64
        %s806 = scalar_lea.vmem [#allocation3], %s805
        // Predicated region
        $region56: #{tudui_forward.4} parent=50 // pred_check
          %p807 = pneg %p100
        $region57: #{tudui_forward.4} parent=50 // pred_check_branch
          %809 = sbr.rel (%p807) target = $region59
        $region58: #{tudui_forward.4} parent=50 // pred_region
          %s810 = smul.u32 2, %s14
          %s811 = smul.addr %s810, 8
          %s812 = scalar_lea.vmem %s3, %s811
          // Predicated region
          $region60: #{tudui_forward.4} parent=58 // pred_check
            _
          $region61: #{tudui_forward.4} parent=58 // pred_check_branch
            %814 = sbr.rel (0) target = $region63
          $region62: #{tudui_forward.4} parent=58 // pred_region
            // Predicated region
            $region64: #{tudui_forward.4} parent=62 // pred_check
              _
            $region65: #{tudui_forward.4} parent=62 // pred_check_branch
              %816 = sbr.rel (0) target = $region67
            $region66: #{tudui_forward.4} parent=62 // pred_region
              loop: start=0, step=1, limit=1
              $region68: #{tudui_forward.4} parent=66 // loop_pre_header
                _
              $region69: #{tudui_forward.4} parent=66 // loop_header
                %s818 = sphi 0, %s822
                %p819 = scmp.ge.s32.totalorder %s818, 1
                %s823 = sphi %s806, %s806
                %s824 = sphi %s812, %s812
              $region70: #{tudui_forward.4} parent=66 // loop_header_branch
                %821 = sbr.rel (%p819) target = $region74
              $region71: #{tudui_forward.4} parent=66 // loop_body
                %v825 = vld [vmem:[%s823] sm:$0xff]
                %826 = vst [vmem:[%s824] sm:$0xff] %v825
                %v827 = vld [vmem:[%s823 + $0x8] sm:$0xff]
                %828 = vst [vmem:[%s824 + $0x8] sm:$0xff] %v827
                %v829 = vld [vmem:[%s823 + $0x10] sm:$0xff]
                %830 = vst [vmem:[%s824 + $0x20] sm:$0xff] %v829
                %v831 = vld [vmem:[%s823 + $0x18] sm:$0xff]
                %832 = vst [vmem:[%s824 + $0x28] sm:$0xff] %v831
                %v833 = vld [vmem:[%s823 + $0x20] sm:$0xff]
                %834 = vst [vmem:[%s824 + $0x40] sm:$0xff] %v833
                %v835 = vld [vmem:[%s823 + $0x28] sm:$0xff]
                %836 = vst [vmem:[%s824 + $0x48] sm:$0xff] %v835
                %v837 = vld [vmem:[%s823 + $0x30] sm:$0xff]
                %838 = vst [vmem:[%s824 + $0x60] sm:$0xff] %v837
                %v839 = vld [vmem:[%s823 + $0x38] sm:$0xff]
                %840 = vst [vmem:[%s824 + $0x68] sm:$0xff] %v839
              $region72: #{tudui_forward.4} parent=66 // loop_footer
                %s822 = sadd.s32 1, %s818
              $region73: #{tudui_forward.4} parent=66 // loop_footer_branch
                %817 = sbr.rel target = $region69
              $region74: #{tudui_forward.4} parent=66 // loop_exit
                _
            $region67: #{tudui_forward.4} parent=62 // pred_fallthru
              _
            // Predicated region
            $region75: #{tudui_forward.4} parent=62 // pred_check
              _
            $region76: #{tudui_forward.4} parent=62 // pred_check_branch
              %842 = sbr.rel target = $region78
            $region77: #{tudui_forward.4} parent=62 // pred_region
              _
            $region78: #{tudui_forward.4} parent=62 // pred_fallthru
              _
          $region63: #{tudui_forward.4} parent=58 // pred_fallthru
            _
          %843 = vnop
        $region59: #{tudui_forward.4} parent=50 // pred_fallthru
          _
      $region51: #{tudui_forward.4} parent=5 // pred_fallthru
        _
      %p844 = scmp.le.s32.totalorder 2, %s9
      // Predicated region
      $region79: #{tudui_forward.4} parent=5 // pred_check
        %p845 = pneg %p844
      $region80: #{tudui_forward.4} parent=5 // pred_check_branch
        %847 = sbr.rel (%p845) target = $region82
      $region81: #{tudui_forward.4} parent=5 // pred_region
        %s848 = ssub.s32 %s9, 2
        // Predicated region
        $region83: #{tudui_forward.4} parent=81 // pred_check
          %p849 = pneg %p106
        $region84: #{tudui_forward.4} parent=81 // pred_check_branch
          %851 = sbr.rel (%p849) target = $region86
        $region85: #{tudui_forward.4} parent=81 // pred_region
          %s852 = sand.u32 %s91, 1
          %s853 = sand.u32 %s91, 1
          %s854 = smul.addr %s853, 64
          %s855 = scalar_lea.vmem [#allocation3], %s854
        $region86: #{tudui_forward.4} parent=81 // pred_fallthru
          _
      $region82: #{tudui_forward.4} parent=5 // pred_fallthru
        _
    $region6: #{tudui_forward.4} parent=1 // loop_footer
      %s13 = sadd.s32 1, %s9
    $region7: #{tudui_forward.4} parent=1 // loop_footer_branch
      %8 = sbr.rel target = $region3
    $region8: #{tudui_forward.4} parent=1 // loop_exit
      _

// kernel: tudui_forward.5
$region0: #{tudui_forward.5}
  #allocation0 [shape = 'u32[]', space=smem, size = 0x4, offset = 0x4, fixed_abs, tag = 'smem constant byte address 0x4 - core index']
  #allocation1 [shape = 'u32[144,128]{1,0:T(1,128)}', space=vmem, size = 0x12000, scoped, tag = 'internal scratch']
  %s0 = inlined_call_operand.vmem [shape: bf16[800,512], index: 0, kind: input, shape index: {}]
  %s1 = inlined_call_operand.vmem [shape: bf16[32,800], index: 1, kind: input, shape index: {}]
  %s2 = inlined_call_operand.vmem [shape: f32[32,1], index: 2, kind: input, shape index: {}]
  %s3 = inlined_call_operand.vmem [shape: f32[32,128], index: 3, kind: output, shape index: {}]
  %s4 = sld [smem:[#allocation0]]
  $region22: #{tudui_forward.5} parent=0
    _
  %s6 = ssub.s32 1, %s4
  %s7 = scalar_select 0, %s6, %s4
  // Predicated region
  $region2: #{tudui_forward.5} parent=0 // pred_check
    _
  $region3: #{tudui_forward.5} parent=0 // pred_check_branch
    %9 = sbr.rel (0) target = $region5
  $region4: #{tudui_forward.5} parent=0 // pred_region
    _
  $region5: #{tudui_forward.5} parent=0 // pred_fallthru
    _
  // Predicated region
  $region6: #{tudui_forward.5} parent=0 // pred_check
    _
  $region7: #{tudui_forward.5} parent=0 // pred_check_branch
    %11 = sbr.rel (0) target = $region9
  $region8: #{tudui_forward.5} parent=0 // pred_region
    _
  $region9: #{tudui_forward.5} parent=0 // pred_fallthru
    _
  // Predicated region
  $region10: #{tudui_forward.5} parent=0 // pred_check
    _
  $region11: #{tudui_forward.5} parent=0 // pred_check_branch
    %13 = sbr.rel (0) target = $region13
  $region12: #{tudui_forward.5} parent=0 // pred_region
    _
  $region13: #{tudui_forward.5} parent=0 // pred_fallthru
    _
  %v15 = vld [vmem:[%s1] sm:$0xff]
  %v16 = vld [vmem:[%s1 + $0x8] sm:$0xff]
  %v17 = vld [vmem:[%s1 + $0x10] sm:$0xff]
  %v18 = vld [vmem:[%s1 + $0x18] sm:$0xf]
  %v19 = vld [vmem:[%s1 + $0x1c] sm:$0xff]
  %v20 = vld [vmem:[%s1 + $0x24] sm:$0xff]
  %v21 = vld [vmem:[%s1 + $0x2c] sm:$0xff]
  %v22 = vld [vmem:[%s1 + $0x34] sm:$0xf]
  %v23 = vld [vmem:[%s1 + $0x38] sm:$0xff]
  %v24 = vld [vmem:[%s1 + $0x40] sm:$0xff]
  %v25 = vld [vmem:[%s1 + $0x48] sm:$0xff]
  %v26 = vld [vmem:[%s1 + $0x50] sm:$0xf]
  %v27 = vld [vmem:[%s1 + $0x54] sm:$0xff]
  %v28 = vld [vmem:[%s1 + $0x5c] sm:$0xff]
  %v29 = vld [vmem:[%s1 + $0x64] sm:$0xff]
  %v30 = vld [vmem:[%s1 + $0x6c] sm:$0xf]
  %v31 = vld [vmem:[%s0] sm:$0xff]
  %v32 = vld [vmem:[%s0 + $0x8] sm:$0xff]
  %v33 = vld [vmem:[%s0 + $0x10] sm:$0xff]
  %v34 = vld [vmem:[%s0 + $0x18] sm:$0xff]
  %v35 = vld [vmem:[%s0 + $0x20] sm:$0xff]
  %v36 = vld [vmem:[%s0 + $0x28] sm:$0xff]
  %v37 = vld [vmem:[%s0 + $0x30] sm:$0xff]
  %v38 = vld [vmem:[%s0 + $0x38] sm:$0xff]
  %v39 = vld [vmem:[%s0 + $0x40] sm:$0xff]
  %v40 = vld [vmem:[%s0 + $0x48] sm:$0xff]
  %v41 = vld [vmem:[%s0 + $0x50] sm:$0xff]
  %v42 = vld [vmem:[%s0 + $0x58] sm:$0xff]
  %v43 = vld [vmem:[%s0 + $0x60] sm:$0xff]
  %v44 = vld [vmem:[%s0 + $0x68] sm:$0xff]
  %v45 = vld [vmem:[%s0 + $0x70] sm:$0xff]
  %v46 = vld [vmem:[%s0 + $0x78] sm:$0xff]
  %v47 = vld [vmem:[%s0 + $0x80] sm:$0xff]
  %v48 = vld [vmem:[%s0 + $0x88] sm:$0xff]
  %v49 = vld [vmem:[%s0 + $0x90] sm:$0xff]
  %v50 = vld [vmem:[%s0 + $0x98] sm:$0xff]
  %v51 = vld [vmem:[%s0 + $0xa0] sm:$0xff]
  %v52 = vld [vmem:[%s0 + $0xa8] sm:$0xff]
  %v53 = vld [vmem:[%s0 + $0xb0] sm:$0xff]
  %v54 = vld [vmem:[%s0 + $0xb8] sm:$0xff]
  %v55 = vld [vmem:[%s0 + $0xc0] sm:$0xff]
  %v56 = vld [vmem:[%s0 + $0xc8] sm:$0xff]
  %v57 = vld [vmem:[%s0 + $0xd0] sm:$0xff]
  %v58 = vld [vmem:[%s0 + $0xd8] sm:$0xff]
  %v59 = vld [vmem:[%s0 + $0xe0] sm:$0xff]
  %v60 = vld [vmem:[%s0 + $0xe8] sm:$0xff]
  %v61 = vld [vmem:[%s0 + $0xf0] sm:$0xff]
  %v62 = vld [vmem:[%s0 + $0xf8] sm:$0xff]
  %v63 = vld [vmem:[%s0 + $0x100] sm:$0xff]
  %v64 = vld [vmem:[%s0 + $0x108] sm:$0xff]
  %v65 = vld [vmem:[%s0 + $0x110] sm:$0xff]
  %v66 = vld [vmem:[%s0 + $0x118] sm:$0xff]
  %v67 = vld [vmem:[%s0 + $0x120] sm:$0xff]
  %v68 = vld [vmem:[%s0 + $0x128] sm:$0xff]
  %v69 = vld [vmem:[%s0 + $0x130] sm:$0xff]
  %v70 = vld [vmem:[%s0 + $0x138] sm:$0xff]
  %v71 = vld [vmem:[%s0 + $0x140] sm:$0xff]
  %v72 = vld [vmem:[%s0 + $0x148] sm:$0xff]
  %v73 = vld [vmem:[%s0 + $0x150] sm:$0xff]
  %v74 = vld [vmem:[%s0 + $0x158] sm:$0xff]
  %v75 = vld [vmem:[%s0 + $0x160] sm:$0xff]
  %v76 = vld [vmem:[%s0 + $0x168] sm:$0xff]
  %v77 = vld [vmem:[%s0 + $0x170] sm:$0xff]
  %v78 = vld [vmem:[%s0 + $0x178] sm:$0xff]
  %v79 = vld [vmem:[%s0 + $0x180] sm:$0xff]
  %v80 = vld [vmem:[%s0 + $0x188] sm:$0xff]
  %v81 = vld [vmem:[%s0 + $0x190] sm:$0xff]
  %v82 = vld [vmem:[%s0 + $0x198] sm:$0xff]
  %v83 = vld [vmem:[%s0 + $0x1a0] sm:$0xff]
  %v84 = vld [vmem:[%s0 + $0x1a8] sm:$0xff]
  %v85 = vld [vmem:[%s0 + $0x1b0] sm:$0xff]
  %v86 = vld [vmem:[%s0 + $0x1b8] sm:$0xff]
  %v87 = vld [vmem:[%s0 + $0x1c0] sm:$0xff]
  %v88 = vld [vmem:[%s0 + $0x1c8] sm:$0xff]
  %v89 = vld [vmem:[%s0 + $0x1d0] sm:$0xff]
  %v90 = vld [vmem:[%s0 + $0x1d8] sm:$0xff]
  %v91 = vld [vmem:[%s0 + $0x1e0] sm:$0xff]
  %v92 = vld [vmem:[%s0 + $0x1e8] sm:$0xff]
  %v93 = vld [vmem:[%s0 + $0x1f0] sm:$0xff]
  %v94 = vld [vmem:[%s0 + $0x1f8] sm:$0xff]
  %v95 = vld [vmem:[%s0 + $0x200] sm:$0xff]
  %v96 = vld [vmem:[%s0 + $0x208] sm:$0xff]
  %v97 = vld [vmem:[%s0 + $0x210] sm:$0xff]
  %v98 = vld [vmem:[%s0 + $0x218] sm:$0xff]
  %v99 = vld [vmem:[%s0 + $0x220] sm:$0xff]
  %v100 = vld [vmem:[%s0 + $0x228] sm:$0xff]
  %v101 = vld [vmem:[%s0 + $0x230] sm:$0xff]
  %v102 = vld [vmem:[%s0 + $0x238] sm:$0xff]
  %v103 = vld [vmem:[%s0 + $0x240] sm:$0xff]
  %v104 = vld [vmem:[%s0 + $0x248] sm:$0xff]
  %v105 = vld [vmem:[%s0 + $0x250] sm:$0xff]
  %v106 = vld [vmem:[%s0 + $0x258] sm:$0xff]
  %v107 = vld [vmem:[%s0 + $0x260] sm:$0xff]
  %v108 = vld [vmem:[%s0 + $0x268] sm:$0xff]
  %v109 = vld [vmem:[%s0 + $0x270] sm:$0xff]
  %v110 = vld [vmem:[%s0 + $0x278] sm:$0xff]
  %v111 = vld [vmem:[%s0 + $0x280] sm:$0xff]
  %v112 = vld [vmem:[%s0 + $0x288] sm:$0xff]
  %v113 = vld [vmem:[%s0 + $0x290] sm:$0xff]
  %v114 = vld [vmem:[%s0 + $0x298] sm:$0xff]
  %v115 = vld [vmem:[%s0 + $0x2a0] sm:$0xff]
  %v116 = vld [vmem:[%s0 + $0x2a8] sm:$0xff]
  %v117 = vld [vmem:[%s0 + $0x2b0] sm:$0xff]
  %v118 = vld [vmem:[%s0 + $0x2b8] sm:$0xff]
  %v119 = vld [vmem:[%s0 + $0x2c0] sm:$0xff]
  %v120 = vld [vmem:[%s0 + $0x2c8] sm:$0xff]
  %v121 = vld [vmem:[%s0 + $0x2d0] sm:$0xff]
  %v122 = vld [vmem:[%s0 + $0x2d8] sm:$0xff]
  %v123 = vld [vmem:[%s0 + $0x2e0] sm:$0xff]
  %v124 = vld [vmem:[%s0 + $0x2e8] sm:$0xff]
  %v125 = vld [vmem:[%s0 + $0x2f0] sm:$0xff]
  %v126 = vld [vmem:[%s0 + $0x2f8] sm:$0xff]
  %v127 = vld [vmem:[%s0 + $0x300] sm:$0xff]
  %v128 = vld [vmem:[%s0 + $0x308] sm:$0xff]
  %v129 = vld [vmem:[%s0 + $0x310] sm:$0xff]
  %v130 = vld [vmem:[%s0 + $0x318] sm:$0xff]
  %v131 = vld [vmem:[%s0 + $0x320] sm:$0xff]
  %v132 = vld [vmem:[%s0 + $0x328] sm:$0xff]
  %v133 = vld [vmem:[%s0 + $0x330] sm:$0xff]
  %v134 = vld [vmem:[%s0 + $0x338] sm:$0xff]
  %v135 = vld [vmem:[%s0 + $0x340] sm:$0xff]
  %v136 = vld [vmem:[%s0 + $0x348] sm:$0xff]
  %v137 = vld [vmem:[%s0 + $0x350] sm:$0xff]
  %v138 = vld [vmem:[%s0 + $0x358] sm:$0xff]
  %v139 = vld [vmem:[%s0 + $0x360] sm:$0xff]
  %v140 = vld [vmem:[%s0 + $0x368] sm:$0xff]
  %v141 = vld [vmem:[%s0 + $0x370] sm:$0xff]
  %v142 = vld [vmem:[%s0 + $0x378] sm:$0xff]
  %v143 = vld [vmem:[%s0 + $0x380] sm:$0xff]
  %v144 = vld [vmem:[%s0 + $0x388] sm:$0xff]
  %v145 = vld [vmem:[%s0 + $0x390] sm:$0xff]
  %v146 = vld [vmem:[%s0 + $0x398] sm:$0xff]
  %v147 = vld [vmem:[%s0 + $0x3a0] sm:$0xff]
  %v148 = vld [vmem:[%s0 + $0x3a8] sm:$0xff]
  %v149 = vld [vmem:[%s0 + $0x3b0] sm:$0xff]
  %v150 = vld [vmem:[%s0 + $0x3b8] sm:$0xff]
  %v151 = vld [vmem:[%s0 + $0x3c0] sm:$0xff]
  %v152 = vld [vmem:[%s0 + $0x3c8] sm:$0xff]
  %v153 = vld [vmem:[%s0 + $0x3d0] sm:$0xff]
  %v154 = vld [vmem:[%s0 + $0x3d8] sm:$0xff]
  %v155 = vld [vmem:[%s0 + $0x3e0] sm:$0xff]
  %v156 = vld [vmem:[%s0 + $0x3e8] sm:$0xff]
  %v157 = vld [vmem:[%s0 + $0x3f0] sm:$0xff]
  %v158 = vld [vmem:[%s0 + $0x3f8] sm:$0xff]
  %v159 = vld [vmem:[%s0 + $0x400] sm:$0xff]
  %v160 = vld [vmem:[%s0 + $0x408] sm:$0xff]
  %v161 = vld [vmem:[%s0 + $0x410] sm:$0xff]
  %v162 = vld [vmem:[%s0 + $0x418] sm:$0xff]
  %v163 = vld [vmem:[%s0 + $0x420] sm:$0xff]
  %v164 = vld [vmem:[%s0 + $0x428] sm:$0xff]
  %v165 = vld [vmem:[%s0 + $0x430] sm:$0xff]
  %v166 = vld [vmem:[%s0 + $0x438] sm:$0xff]
  %v167 = vld [vmem:[%s0 + $0x440] sm:$0xff]
  %v168 = vld [vmem:[%s0 + $0x448] sm:$0xff]
  %v169 = vld [vmem:[%s0 + $0x450] sm:$0xff]
  %v170 = vld [vmem:[%s0 + $0x458] sm:$0xff]
  %v171 = vld [vmem:[%s0 + $0x460] sm:$0xff]
  %v172 = vld [vmem:[%s0 + $0x468] sm:$0xff]
  %v173 = vld [vmem:[%s0 + $0x470] sm:$0xff]
  %v174 = vld [vmem:[%s0 + $0x478] sm:$0xff]
  %v175 = vld [vmem:[%s0 + $0x480] sm:$0xff]
  %v176 = vld [vmem:[%s0 + $0x488] sm:$0xff]
  %v177 = vld [vmem:[%s0 + $0x490] sm:$0xff]
  %v178 = vld [vmem:[%s0 + $0x498] sm:$0xff]
  %v179 = vld [vmem:[%s0 + $0x4a0] sm:$0xff]
  %v180 = vld [vmem:[%s0 + $0x4a8] sm:$0xff]
  %v181 = vld [vmem:[%s0 + $0x4b0] sm:$0xff]
  %v182 = vld [vmem:[%s0 + $0x4b8] sm:$0xff]
  %v183 = vld [vmem:[%s0 + $0x4c0] sm:$0xff]
  %v184 = vld [vmem:[%s0 + $0x4c8] sm:$0xff]
  %v185 = vld [vmem:[%s0 + $0x4d0] sm:$0xff]
  %v186 = vld [vmem:[%s0 + $0x4d8] sm:$0xff]
  %v187 = vld [vmem:[%s0 + $0x4e0] sm:$0xff]
  %v188 = vld [vmem:[%s0 + $0x4e8] sm:$0xff]
  %v189 = vld [vmem:[%s0 + $0x4f0] sm:$0xff]
  %v190 = vld [vmem:[%s0 + $0x4f8] sm:$0xff]
  %v191 = vld [vmem:[%s0 + $0x500] sm:$0xff]
  %v192 = vld [vmem:[%s0 + $0x508] sm:$0xff]
  %v193 = vld [vmem:[%s0 + $0x510] sm:$0xff]
  %v194 = vld [vmem:[%s0 + $0x518] sm:$0xff]
  %v195 = vld [vmem:[%s0 + $0x520] sm:$0xff]
  %v196 = vld [vmem:[%s0 + $0x528] sm:$0xff]
  %v197 = vld [vmem:[%s0 + $0x530] sm:$0xff]
  %v198 = vld [vmem:[%s0 + $0x538] sm:$0xff]
  %v199 = vld [vmem:[%s0 + $0x540] sm:$0xff]
  %v200 = vld [vmem:[%s0 + $0x548] sm:$0xff]
  %v201 = vld [vmem:[%s0 + $0x550] sm:$0xff]
  %v202 = vld [vmem:[%s0 + $0x558] sm:$0xff]
  %v203 = vld [vmem:[%s0 + $0x560] sm:$0xff]
  %v204 = vld [vmem:[%s0 + $0x568] sm:$0xff]
  %v205 = vld [vmem:[%s0 + $0x570] sm:$0xff]
  %v206 = vld [vmem:[%s0 + $0x578] sm:$0xff]
  %v207 = vld [vmem:[%s0 + $0x580] sm:$0xff]
  %v208 = vld [vmem:[%s0 + $0x588] sm:$0xff]
  %v209 = vld [vmem:[%s0 + $0x590] sm:$0xff]
  %v210 = vld [vmem:[%s0 + $0x598] sm:$0xff]
  %v211 = vld [vmem:[%s0 + $0x5a0] sm:$0xff]
  %v212 = vld [vmem:[%s0 + $0x5a8] sm:$0xff]
  %v213 = vld [vmem:[%s0 + $0x5b0] sm:$0xff]
  %v214 = vld [vmem:[%s0 + $0x5b8] sm:$0xff]
  %v215 = vld [vmem:[%s0 + $0x5c0] sm:$0xff]
  %v216 = vld [vmem:[%s0 + $0x5c8] sm:$0xff]
  %v217 = vld [vmem:[%s0 + $0x5d0] sm:$0xff]
  %v218 = vld [vmem:[%s0 + $0x5d8] sm:$0xff]
  %v219 = vld [vmem:[%s0 + $0x5e0] sm:$0xff]
  %v220 = vld [vmem:[%s0 + $0x5e8] sm:$0xff]
  %v221 = vld [vmem:[%s0 + $0x5f0] sm:$0xff]
  %v222 = vld [vmem:[%s0 + $0x5f8] sm:$0xff]
  %v223 = vld [vmem:[%s0 + $0x600] sm:$0xff]
  %v224 = vld [vmem:[%s0 + $0x608] sm:$0xff]
  %v225 = vld [vmem:[%s0 + $0x610] sm:$0xff]
  %v226 = vld [vmem:[%s0 + $0x618] sm:$0xff]
  %v227 = vld [vmem:[%s0 + $0x620] sm:$0xff]
  %v228 = vld [vmem:[%s0 + $0x628] sm:$0xff]
  %v229 = vld [vmem:[%s0 + $0x630] sm:$0xff]
  %v230 = vld [vmem:[%s0 + $0x638] sm:$0xff]
  %v247 = vunpack.c.l.b16 %v15
  %v248 = vunpack.c.h.b16 %v15
  %v249 = vunpack.c.l.b16 %v16
  %v250 = vunpack.c.h.b16 %v16
  %v251 = vunpack.c.l.b16 %v17
  %v252 = vunpack.c.h.b16 %v17
  %v253 = vunpack.c.l.b16 %v18
  %v254 = vunpack.c.l.b16 %v19
  %v255 = vunpack.c.h.b16 %v19
  %v256 = vunpack.c.l.b16 %v20
  %v257 = vunpack.c.h.b16 %v20
  %v258 = vunpack.c.l.b16 %v21
  %v259 = vunpack.c.h.b16 %v21
  %v260 = vunpack.c.l.b16 %v22
  %v261 = vunpack.c.l.b16 %v23
  %v262 = vunpack.c.h.b16 %v23
  %v263 = vunpack.c.l.b16 %v24
  %v264 = vunpack.c.h.b16 %v24
  %v265 = vunpack.c.l.b16 %v25
  %v266 = vunpack.c.h.b16 %v25
  %v267 = vunpack.c.l.b16 %v26
  %v268 = vunpack.c.l.b16 %v27
  %v269 = vunpack.c.h.b16 %v27
  %v270 = vunpack.c.l.b16 %v28
  %v271 = vunpack.c.h.b16 %v28
  %v272 = vunpack.c.l.b16 %v29
  %v273 = vunpack.c.h.b16 %v29
  %v274 = vunpack.c.l.b16 %v30
  %v275 = vpack.c.b16 %v254, %v247
  %v276 = vpack.c.b16 %v255, %v248
  %v277 = vpack.c.b16 %v256, %v249
  %v278 = vpack.c.b16 %v257, %v250
  %v279 = vpack.c.b16 %v258, %v251
  %v280 = vpack.c.b16 %v259, %v252
  %v281 = vpack.c.b16 %v260, %v253
  %v282 = vpack.c.b16 %v268, %v261
  %v283 = vpack.c.b16 %v269, %v262
  %v284 = vpack.c.b16 %v270, %v263
  %v285 = vpack.c.b16 %v271, %v264
  %v286 = vpack.c.b16 %v272, %v265
  %v287 = vpack.c.b16 %v273, %v266
  %v288 = vpack.c.b16 %v274, %v267
  %v501 = vunpack.c.l.b16 %v31
  %v502 = vunpack.c.h.b16 %v31
  %v503 = vunpack.c.l.b16 %v32
  %v504 = vunpack.c.h.b16 %v32
  %v505 = vunpack.c.l.b16 %v33
  %v506 = vunpack.c.h.b16 %v33
  %v507 = vunpack.c.l.b16 %v34
  %v508 = vunpack.c.h.b16 %v34
  %v509 = vunpack.c.l.b16 %v35
  %v510 = vunpack.c.h.b16 %v35
  %v511 = vunpack.c.l.b16 %v36
  %v512 = vunpack.c.h.b16 %v36
  %v513 = vunpack.c.l.b16 %v37
  %v514 = vunpack.c.h.b16 %v37
  %v515 = vunpack.c.l.b16 %v38
  %v516 = vunpack.c.h.b16 %v38
  %v517 = vunpack.c.l.b16 %v39
  %v518 = vunpack.c.h.b16 %v39
  %v519 = vunpack.c.l.b16 %v40
  %v520 = vunpack.c.h.b16 %v40
  %v521 = vunpack.c.l.b16 %v41
  %v522 = vunpack.c.h.b16 %v41
  %v523 = vunpack.c.l.b16 %v42
  %v524 = vunpack.c.h.b16 %v42
  %v525 = vunpack.c.l.b16 %v43
  %v526 = vunpack.c.h.b16 %v43
  %v527 = vunpack.c.l.b16 %v44
  %v528 = vunpack.c.h.b16 %v44
  %v529 = vunpack.c.l.b16 %v45
  %v530 = vunpack.c.h.b16 %v45
  %v531 = vunpack.c.l.b16 %v46
  %v532 = vunpack.c.h.b16 %v46
  %v533 = vunpack.c.l.b16 %v47
  %v534 = vunpack.c.h.b16 %v47
  %v535 = vunpack.c.l.b16 %v48
  %v536 = vunpack.c.h.b16 %v48
  %v537 = vunpack.c.l.b16 %v49
  %v538 = vunpack.c.h.b16 %v49
  %v539 = vunpack.c.l.b16 %v50
  %v540 = vunpack.c.h.b16 %v50
  %v541 = vunpack.c.l.b16 %v51
  %v542 = vunpack.c.h.b16 %v51
  %v543 = vunpack.c.l.b16 %v52
  %v544 = vunpack.c.h.b16 %v52
  %v545 = vunpack.c.l.b16 %v53
  %v546 = vunpack.c.h.b16 %v53
  %v547 = vunpack.c.l.b16 %v54
  %v548 = vunpack.c.h.b16 %v54
  %v549 = vunpack.c.l.b16 %v55
  %v550 = vunpack.c.h.b16 %v55
  %v551 = vunpack.c.l.b16 %v56
  %v552 = vunpack.c.h.b16 %v56
  %v553 = vunpack.c.l.b16 %v57
  %v554 = vunpack.c.h.b16 %v57
  %v555 = vunpack.c.l.b16 %v58
  %v556 = vunpack.c.h.b16 %v58
  %v557 = vunpack.c.l.b16 %v59
  %v558 = vunpack.c.h.b16 %v59
  %v559 = vunpack.c.l.b16 %v60
  %v560 = vunpack.c.h.b16 %v60
  %v561 = vunpack.c.l.b16 %v61
  %v562 = vunpack.c.h.b16 %v61
  %v563 = vunpack.c.l.b16 %v62
  %v564 = vunpack.c.h.b16 %v62
  %v565 = vunpack.c.l.b16 %v63
  %v566 = vunpack.c.h.b16 %v63
  %v567 = vunpack.c.l.b16 %v64
  %v568 = vunpack.c.h.b16 %v64
  %v569 = vunpack.c.l.b16 %v65
  %v570 = vunpack.c.h.b16 %v65
  %v571 = vunpack.c.l.b16 %v66
  %v572 = vunpack.c.h.b16 %v66
  %v573 = vunpack.c.l.b16 %v67
  %v574 = vunpack.c.h.b16 %v67
  %v575 = vunpack.c.l.b16 %v68
  %v576 = vunpack.c.h.b16 %v68
  %v577 = vunpack.c.l.b16 %v69
  %v578 = vunpack.c.h.b16 %v69
  %v579 = vunpack.c.l.b16 %v70
  %v580 = vunpack.c.h.b16 %v70
  %v581 = vunpack.c.l.b16 %v71
  %v582 = vunpack.c.h.b16 %v71
  %v583 = vunpack.c.l.b16 %v72
  %v584 = vunpack.c.h.b16 %v72
  %v585 = vunpack.c.l.b16 %v73
  %v586 = vunpack.c.h.b16 %v73
  %v587 = vunpack.c.l.b16 %v74
  %v588 = vunpack.c.h.b16 %v74
  %v589 = vunpack.c.l.b16 %v75
  %v590 = vunpack.c.h.b16 %v75
  %v591 = vunpack.c.l.b16 %v76
  %v592 = vunpack.c.h.b16 %v76
  %v593 = vunpack.c.l.b16 %v77
  %v594 = vunpack.c.h.b16 %v77
  %v595 = vunpack.c.l.b16 %v78
  %v596 = vunpack.c.h.b16 %v78
  %v597 = vunpack.c.l.b16 %v79
  %v598 = vunpack.c.h.b16 %v79
  %v599 = vunpack.c.l.b16 %v80
  %v600 = vunpack.c.h.b16 %v80
  %v601 = vunpack.c.l.b16 %v81
  %v602 = vunpack.c.h.b16 %v81
  %v603 = vunpack.c.l.b16 %v82
  %v604 = vunpack.c.h.b16 %v82
  %v605 = vunpack.c.l.b16 %v83
  %v606 = vunpack.c.h.b16 %v83
  %v607 = vunpack.c.l.b16 %v84
  %v608 = vunpack.c.h.b16 %v84
  %v609 = vunpack.c.l.b16 %v85
  %v610 = vunpack.c.h.b16 %v85
  %v611 = vunpack.c.l.b16 %v86
  %v612 = vunpack.c.h.b16 %v86
  %v613 = vunpack.c.l.b16 %v87
  %v614 = vunpack.c.h.b16 %v87
  %v615 = vunpack.c.l.b16 %v88
  %v616 = vunpack.c.h.b16 %v88
  %v617 = vunpack.c.l.b16 %v89
  %v618 = vunpack.c.h.b16 %v89
  %v619 = vunpack.c.l.b16 %v90
  %v620 = vunpack.c.h.b16 %v90
  %v621 = vunpack.c.l.b16 %v91
  %v622 = vunpack.c.h.b16 %v91
  %v623 = vunpack.c.l.b16 %v92
  %v624 = vunpack.c.h.b16 %v92
  %v625 = vunpack.c.l.b16 %v93
  %v626 = vunpack.c.h.b16 %v93
  %v627 = vunpack.c.l.b16 %v94
  %v628 = vunpack.c.h.b16 %v94
  %v629 = vunpack.c.l.b16 %v95
  %v630 = vunpack.c.h.b16 %v95
  %v631 = vunpack.c.l.b16 %v96
  %v632 = vunpack.c.h.b16 %v96
  %v633 = vunpack.c.l.b16 %v97
  %v634 = vunpack.c.h.b16 %v97
  %v635 = vunpack.c.l.b16 %v98
  %v636 = vunpack.c.h.b16 %v98
  %v637 = vunpack.c.l.b16 %v99
  %v638 = vunpack.c.h.b16 %v99
  %v639 = vunpack.c.l.b16 %v100
  %v640 = vunpack.c.h.b16 %v100
  %v641 = vunpack.c.l.b16 %v101
  %v642 = vunpack.c.h.b16 %v101
  %v643 = vunpack.c.l.b16 %v102
  %v644 = vunpack.c.h.b16 %v102
  %v645 = vunpack.c.l.b16 %v103
  %v646 = vunpack.c.h.b16 %v103
  %v647 = vunpack.c.l.b16 %v104
  %v648 = vunpack.c.h.b16 %v104
  %v649 = vunpack.c.l.b16 %v105
  %v650 = vunpack.c.h.b16 %v105
  %v651 = vunpack.c.l.b16 %v106
  %v652 = vunpack.c.h.b16 %v106
  %v653 = vunpack.c.l.b16 %v107
  %v654 = vunpack.c.h.b16 %v107
  %v655 = vunpack.c.l.b16 %v108
  %v656 = vunpack.c.h.b16 %v108
  %v657 = vunpack.c.l.b16 %v109
  %v658 = vunpack.c.h.b16 %v109
  %v659 = vunpack.c.l.b16 %v110
  %v660 = vunpack.c.h.b16 %v110
  %v661 = vunpack.c.l.b16 %v111
  %v662 = vunpack.c.h.b16 %v111
  %v663 = vunpack.c.l.b16 %v112
  %v664 = vunpack.c.h.b16 %v112
  %v665 = vunpack.c.l.b16 %v113
  %v666 = vunpack.c.h.b16 %v113
  %v667 = vunpack.c.l.b16 %v114
  %v668 = vunpack.c.h.b16 %v114
  %v669 = vunpack.c.l.b16 %v115
  %v670 = vunpack.c.h.b16 %v115
  %v671 = vunpack.c.l.b16 %v116
  %v672 = vunpack.c.h.b16 %v116
  %v673 = vunpack.c.l.b16 %v117
  %v674 = vunpack.c.h.b16 %v117
  %v675 = vunpack.c.l.b16 %v118
  %v676 = vunpack.c.h.b16 %v118
  %v677 = vunpack.c.l.b16 %v119
  %v678 = vunpack.c.h.b16 %v119
  %v679 = vunpack.c.l.b16 %v120
  %v680 = vunpack.c.h.b16 %v120
  %v681 = vunpack.c.l.b16 %v121
  %v682 = vunpack.c.h.b16 %v121
  %v683 = vunpack.c.l.b16 %v122
  %v684 = vunpack.c.h.b16 %v122
  %v685 = vunpack.c.l.b16 %v123
  %v686 = vunpack.c.h.b16 %v123
  %v687 = vunpack.c.l.b16 %v124
  %v688 = vunpack.c.h.b16 %v124
  %v689 = vunpack.c.l.b16 %v125
  %v690 = vunpack.c.h.b16 %v125
  %v691 = vunpack.c.l.b16 %v126
  %v692 = vunpack.c.h.b16 %v126
  %v693 = vunpack.c.l.b16 %v127
  %v694 = vunpack.c.h.b16 %v127
  %v695 = vunpack.c.l.b16 %v128
  %v696 = vunpack.c.h.b16 %v128
  %v697 = vunpack.c.l.b16 %v129
  %v698 = vunpack.c.h.b16 %v129
  %v699 = vunpack.c.l.b16 %v130
  %v700 = vunpack.c.h.b16 %v130
  %v701 = vunpack.c.l.b16 %v131
  %v702 = vunpack.c.h.b16 %v131
  %v703 = vunpack.c.l.b16 %v132
  %v704 = vunpack.c.h.b16 %v132
  %v705 = vunpack.c.l.b16 %v133
  %v706 = vunpack.c.h.b16 %v133
  %v707 = vunpack.c.l.b16 %v134
  %v708 = vunpack.c.h.b16 %v134
  %v709 = vunpack.c.l.b16 %v135
  %v710 = vunpack.c.h.b16 %v135
  %v711 = vunpack.c.l.b16 %v136
  %v712 = vunpack.c.h.b16 %v136
  %v713 = vunpack.c.l.b16 %v137
  %v714 = vunpack.c.h.b16 %v137
  %v715 = vunpack.c.l.b16 %v138
  %v716 = vunpack.c.h.b16 %v138
  %v717 = vunpack.c.l.b16 %v139
  %v718 = vunpack.c.h.b16 %v139
  %v719 = vunpack.c.l.b16 %v140
  %v720 = vunpack.c.h.b16 %v140
  %v721 = vunpack.c.l.b16 %v141
  %v722 = vunpack.c.h.b16 %v141
  %v723 = vunpack.c.l.b16 %v142
  %v724 = vunpack.c.h.b16 %v142
  %v725 = vunpack.c.l.b16 %v143
  %v726 = vunpack.c.h.b16 %v143
  %v727 = vunpack.c.l.b16 %v144
  %v728 = vunpack.c.h.b16 %v144
  %v729 = vunpack.c.l.b16 %v145
  %v730 = vunpack.c.h.b16 %v145
  %v731 = vunpack.c.l.b16 %v146
  %v732 = vunpack.c.h.b16 %v146
  %v733 = vunpack.c.l.b16 %v147
  %v734 = vunpack.c.h.b16 %v147
  %v735 = vunpack.c.l.b16 %v148
  %v736 = vunpack.c.h.b16 %v148
  %v737 = vunpack.c.l.b16 %v149
  %v738 = vunpack.c.h.b16 %v149
  %v739 = vunpack.c.l.b16 %v150
  %v740 = vunpack.c.h.b16 %v150
  %v741 = vunpack.c.l.b16 %v151
  %v742 = vunpack.c.h.b16 %v151
  %v743 = vunpack.c.l.b16 %v152
  %v744 = vunpack.c.h.b16 %v152
  %v745 = vunpack.c.l.b16 %v153
  %v746 = vunpack.c.h.b16 %v153
  %v747 = vunpack.c.l.b16 %v154
  %v748 = vunpack.c.h.b16 %v154
  %v749 = vunpack.c.l.b16 %v155
  %v750 = vunpack.c.h.b16 %v155
  %v751 = vunpack.c.l.b16 %v156
  %v752 = vunpack.c.h.b16 %v156
  %v753 = vunpack.c.l.b16 %v157
  %v754 = vunpack.c.h.b16 %v157
  %v755 = vunpack.c.l.b16 %v158
  %v756 = vunpack.c.h.b16 %v158
  %v757 = vunpack.c.l.b16 %v159
  %v758 = vunpack.c.h.b16 %v159
  %v759 = vunpack.c.l.b16 %v160
  %v760 = vunpack.c.h.b16 %v160
  %v761 = vunpack.c.l.b16 %v161
  %v762 = vunpack.c.h.b16 %v161
  %v763 = vunpack.c.l.b16 %v162
  %v764 = vunpack.c.h.b16 %v162
  %v765 = vunpack.c.l.b16 %v163
  %v766 = vunpack.c.h.b16 %v163
  %v767 = vunpack.c.l.b16 %v164
  %v768 = vunpack.c.h.b16 %v164
  %v769 = vunpack.c.l.b16 %v165
  %v770 = vunpack.c.h.b16 %v165
  %v771 = vunpack.c.l.b16 %v166
  %v772 = vunpack.c.h.b16 %v166
  %v773 = vunpack.c.l.b16 %v167
  %v774 = vunpack.c.h.b16 %v167
  %v775 = vunpack.c.l.b16 %v168
  %v776 = vunpack.c.h.b16 %v168
  %v777 = vunpack.c.l.b16 %v169
  %v778 = vunpack.c.h.b16 %v169
  %v779 = vunpack.c.l.b16 %v170
  %v780 = vunpack.c.h.b16 %v170
  %v781 = vunpack.c.l.b16 %v171
  %v782 = vunpack.c.h.b16 %v171
  %v783 = vunpack.c.l.b16 %v172
  %v784 = vunpack.c.h.b16 %v172
  %v785 = vunpack.c.l.b16 %v173
  %v786 = vunpack.c.h.b16 %v173
  %v787 = vunpack.c.l.b16 %v174
  %v788 = vunpack.c.h.b16 %v174
  %v789 = vunpack.c.l.b16 %v175
  %v790 = vunpack.c.h.b16 %v175
  %v791 = vunpack.c.l.b16 %v176
  %v792 = vunpack.c.h.b16 %v176
  %v793 = vunpack.c.l.b16 %v177
  %v794 = vunpack.c.h.b16 %v177
  %v795 = vunpack.c.l.b16 %v178
  %v796 = vunpack.c.h.b16 %v178
  %v797 = vunpack.c.l.b16 %v179
  %v798 = vunpack.c.h.b16 %v179
  %v799 = vunpack.c.l.b16 %v180
  %v800 = vunpack.c.h.b16 %v180
  %v801 = vunpack.c.l.b16 %v181
  %v802 = vunpack.c.h.b16 %v181
  %v803 = vunpack.c.l.b16 %v182
  %v804 = vunpack.c.h.b16 %v182
  %v805 = vunpack.c.l.b16 %v183
  %v806 = vunpack.c.h.b16 %v183
  %v807 = vunpack.c.l.b16 %v184
  %v808 = vunpack.c.h.b16 %v184
  %v809 = vunpack.c.l.b16 %v185
  %v810 = vunpack.c.h.b16 %v185
  %v811 = vunpack.c.l.b16 %v186
  %v812 = vunpack.c.h.b16 %v186
  %v813 = vunpack.c.l.b16 %v187
  %v814 = vunpack.c.h.b16 %v187
  %v815 = vunpack.c.l.b16 %v188
  %v816 = vunpack.c.h.b16 %v188
  %v817 = vunpack.c.l.b16 %v189
  %v818 = vunpack.c.h.b16 %v189
  %v819 = vunpack.c.l.b16 %v190
  %v820 = vunpack.c.h.b16 %v190
  %v821 = vunpack.c.l.b16 %v191
  %v822 = vunpack.c.h.b16 %v191
  %v823 = vunpack.c.l.b16 %v192
  %v824 = vunpack.c.h.b16 %v192
  %v825 = vunpack.c.l.b16 %v193
  %v826 = vunpack.c.h.b16 %v193
  %v827 = vunpack.c.l.b16 %v194
  %v828 = vunpack.c.h.b16 %v194
  %v829 = vunpack.c.l.b16 %v195
  %v830 = vunpack.c.h.b16 %v195
  %v831 = vunpack.c.l.b16 %v196
  %v832 = vunpack.c.h.b16 %v196
  %v833 = vunpack.c.l.b16 %v197
  %v834 = vunpack.c.h.b16 %v197
  %v835 = vunpack.c.l.b16 %v198
  %v836 = vunpack.c.h.b16 %v198
  %v837 = vunpack.c.l.b16 %v199
  %v838 = vunpack.c.h.b16 %v199
  %v839 = vunpack.c.l.b16 %v200
  %v840 = vunpack.c.h.b16 %v200
  %v841 = vunpack.c.l.b16 %v201
  %v842 = vunpack.c.h.b16 %v201
  %v843 = vunpack.c.l.b16 %v202
  %v844 = vunpack.c.h.b16 %v202
  %v845 = vunpack.c.l.b16 %v203
  %v846 = vunpack.c.h.b16 %v203
  %v847 = vunpack.c.l.b16 %v204
  %v848 = vunpack.c.h.b16 %v204
  %v849 = vunpack.c.l.b16 %v205
  %v850 = vunpack.c.h.b16 %v205
  %v851 = vunpack.c.l.b16 %v206
  %v852 = vunpack.c.h.b16 %v206
  %v853 = vunpack.c.l.b16 %v207
  %v854 = vunpack.c.h.b16 %v207
  %v855 = vunpack.c.l.b16 %v208
  %v856 = vunpack.c.h.b16 %v208
  %v857 = vunpack.c.l.b16 %v209
  %v858 = vunpack.c.h.b16 %v209
  %v859 = vunpack.c.l.b16 %v210
  %v860 = vunpack.c.h.b16 %v210
  %v861 = vunpack.c.l.b16 %v211
  %v862 = vunpack.c.h.b16 %v211
  %v863 = vunpack.c.l.b16 %v212
  %v864 = vunpack.c.h.b16 %v212
  %v865 = vunpack.c.l.b16 %v213
  %v866 = vunpack.c.h.b16 %v213
  %v867 = vunpack.c.l.b16 %v214
  %v868 = vunpack.c.h.b16 %v214
  %v869 = vunpack.c.l.b16 %v215
  %v870 = vunpack.c.h.b16 %v215
  %v871 = vunpack.c.l.b16 %v216
  %v872 = vunpack.c.h.b16 %v216
  %v873 = vunpack.c.l.b16 %v217
  %v874 = vunpack.c.h.b16 %v217
  %v875 = vunpack.c.l.b16 %v218
  %v876 = vunpack.c.h.b16 %v218
  %v877 = vunpack.c.l.b16 %v219
  %v878 = vunpack.c.h.b16 %v219
  %v879 = vunpack.c.l.b16 %v220
  %v880 = vunpack.c.h.b16 %v220
  %v881 = vunpack.c.l.b16 %v221
  %v882 = vunpack.c.h.b16 %v221
  %v883 = vunpack.c.l.b16 %v222
  %v884 = vunpack.c.h.b16 %v222
  %v885 = vunpack.c.l.b16 %v223
  %v886 = vunpack.c.h.b16 %v223
  %v887 = vunpack.c.l.b16 %v224
  %v888 = vunpack.c.h.b16 %v224
  %v889 = vunpack.c.l.b16 %v225
  %v890 = vunpack.c.h.b16 %v225
  %v891 = vunpack.c.l.b16 %v226
  %v892 = vunpack.c.h.b16 %v226
  %v893 = vunpack.c.l.b16 %v227
  %v894 = vunpack.c.h.b16 %v227
  %v895 = vunpack.c.l.b16 %v228
  %v896 = vunpack.c.h.b16 %v228
  %v897 = vunpack.c.l.b16 %v229
  %v898 = vunpack.c.h.b16 %v229
  %v899 = vunpack.c.l.b16 %v230
  %v900 = vunpack.c.h.b16 %v230
  %v901 = vpack.c.b16 %v505, %v501
  %v902 = vpack.c.b16 %v506, %v502
  %v903 = vpack.c.b16 %v507, %v503
  %v904 = vpack.c.b16 %v508, %v504
  %v905 = vpack.c.b16 %v513, %v509
  %v906 = vpack.c.b16 %v514, %v510
  %v907 = vpack.c.b16 %v515, %v511
  %v908 = vpack.c.b16 %v516, %v512
  %v909 = vpack.c.b16 %v521, %v517
  %v910 = vpack.c.b16 %v522, %v518
  %v911 = vpack.c.b16 %v523, %v519
  %v912 = vpack.c.b16 %v524, %v520
  %v913 = vpack.c.b16 %v529, %v525
  %v914 = vpack.c.b16 %v530, %v526
  %v915 = vpack.c.b16 %v531, %v527
  %v916 = vpack.c.b16 %v532, %v528
  %v917 = vpack.c.b16 %v537, %v533
  %v918 = vpack.c.b16 %v538, %v534
  %v919 = vpack.c.b16 %v539, %v535
  %v920 = vpack.c.b16 %v540, %v536
  %v921 = vpack.c.b16 %v545, %v541
  %v922 = vpack.c.b16 %v546, %v542
  %v923 = vpack.c.b16 %v547, %v543
  %v924 = vpack.c.b16 %v548, %v544
  %v925 = vpack.c.b16 %v553, %v549
  %v926 = vpack.c.b16 %v554, %v550
  %v927 = vpack.c.b16 %v555, %v551
  %v928 = vpack.c.b16 %v556, %v552
  %v929 = vpack.c.b16 %v561, %v557
  %v930 = vpack.c.b16 %v562, %v558
  %v931 = vpack.c.b16 %v563, %v559
  %v932 = vpack.c.b16 %v564, %v560
  %v933 = vpack.c.b16 %v569, %v565
  %v934 = vpack.c.b16 %v570, %v566
  %v935 = vpack.c.b16 %v571, %v567
  %v936 = vpack.c.b16 %v572, %v568
  %v937 = vpack.c.b16 %v577, %v573
  %v938 = vpack.c.b16 %v578, %v574
  %v939 = vpack.c.b16 %v579, %v575
  %v940 = vpack.c.b16 %v580, %v576
  %v941 = vpack.c.b16 %v585, %v581
  %v942 = vpack.c.b16 %v586, %v582
  %v943 = vpack.c.b16 %v587, %v583
  %v944 = vpack.c.b16 %v588, %v584
  %v945 = vpack.c.b16 %v593, %v589
  %v946 = vpack.c.b16 %v594, %v590
  %v947 = vpack.c.b16 %v595, %v591
  %v948 = vpack.c.b16 %v596, %v592
  %v949 = vpack.c.b16 %v601, %v597
  %v950 = vpack.c.b16 %v602, %v598
  %v951 = vpack.c.b16 %v603, %v599
  %v952 = vpack.c.b16 %v604, %v600
  %v953 = vpack.c.b16 %v609, %v605
  %v954 = vpack.c.b16 %v610, %v606
  %v955 = vpack.c.b16 %v611, %v607
  %v956 = vpack.c.b16 %v612, %v608
  %v957 = vpack.c.b16 %v617, %v613
  %v958 = vpack.c.b16 %v618, %v614
  %v959 = vpack.c.b16 %v619, %v615
  %v960 = vpack.c.b16 %v620, %v616
  %v961 = vpack.c.b16 %v625, %v621
  %v962 = vpack.c.b16 %v626, %v622
  %v963 = vpack.c.b16 %v627, %v623
  %v964 = vpack.c.b16 %v628, %v624
  %v965 = vpack.c.b16 %v633, %v629
  %v966 = vpack.c.b16 %v634, %v630
  %v967 = vpack.c.b16 %v635, %v631
  %v968 = vpack.c.b16 %v636, %v632
  %v969 = vpack.c.b16 %v641, %v637
  %v970 = vpack.c.b16 %v642, %v638
  %v971 = vpack.c.b16 %v643, %v639
  %v972 = vpack.c.b16 %v644, %v640
  %v973 = vpack.c.b16 %v649, %v645
  %v974 = vpack.c.b16 %v650, %v646
  %v975 = vpack.c.b16 %v651, %v647
  %v976 = vpack.c.b16 %v652, %v648
  %v977 = vpack.c.b16 %v657, %v653
  %v978 = vpack.c.b16 %v658, %v654
  %v979 = vpack.c.b16 %v659, %v655
  %v980 = vpack.c.b16 %v660, %v656
  %v981 = vpack.c.b16 %v665, %v661
  %v982 = vpack.c.b16 %v666, %v662
  %v983 = vpack.c.b16 %v667, %v663
  %v984 = vpack.c.b16 %v668, %v664
  %v985 = vpack.c.b16 %v673, %v669
  %v986 = vpack.c.b16 %v674, %v670
  %v987 = vpack.c.b16 %v675, %v671
  %v988 = vpack.c.b16 %v676, %v672
  %v989 = vpack.c.b16 %v681, %v677
  %v990 = vpack.c.b16 %v682, %v678
  %v991 = vpack.c.b16 %v683, %v679
  %v992 = vpack.c.b16 %v684, %v680
  %v993 = vpack.c.b16 %v689, %v685
  %v994 = vpack.c.b16 %v690, %v686
  %v995 = vpack.c.b16 %v691, %v687
  %v996 = vpack.c.b16 %v692, %v688
  %v997 = vpack.c.b16 %v697, %v693
  %v998 = vpack.c.b16 %v698, %v694
  %v999 = vpack.c.b16 %v699, %v695
  %v1000 = vpack.c.b16 %v700, %v696
  %v1001 = vpack.c.b16 %v705, %v701
  %v1002 = vpack.c.b16 %v706, %v702
  %v1003 = vpack.c.b16 %v707, %v703
  %v1004 = vpack.c.b16 %v708, %v704
  %v1005 = vpack.c.b16 %v713, %v709
  %v1006 = vpack.c.b16 %v714, %v710
  %v1007 = vpack.c.b16 %v715, %v711
  %v1008 = vpack.c.b16 %v716, %v712
  %v1009 = vpack.c.b16 %v721, %v717
  %v1010 = vpack.c.b16 %v722, %v718
  %v1011 = vpack.c.b16 %v723, %v719
  %v1012 = vpack.c.b16 %v724, %v720
  %v1013 = vpack.c.b16 %v729, %v725
  %v1014 = vpack.c.b16 %v730, %v726
  %v1015 = vpack.c.b16 %v731, %v727
  %v1016 = vpack.c.b16 %v732, %v728
  %v1017 = vpack.c.b16 %v737, %v733
  %v1018 = vpack.c.b16 %v738, %v734
  %v1019 = vpack.c.b16 %v739, %v735
  %v1020 = vpack.c.b16 %v740, %v736
  %v1021 = vpack.c.b16 %v745, %v741
  %v1022 = vpack.c.b16 %v746, %v742
  %v1023 = vpack.c.b16 %v747, %v743
  %v1024 = vpack.c.b16 %v748, %v744
  %v1025 = vpack.c.b16 %v753, %v749
  %v1026 = vpack.c.b16 %v754, %v750
  %v1027 = vpack.c.b16 %v755, %v751
  %v1028 = vpack.c.b16 %v756, %v752
  %v1029 = vpack.c.b16 %v761, %v757
  %v1030 = vpack.c.b16 %v762, %v758
  %v1031 = vpack.c.b16 %v763, %v759
  %v1032 = vpack.c.b16 %v764, %v760
  %v1033 = vpack.c.b16 %v769, %v765
  %v1034 = vpack.c.b16 %v770, %v766
  %v1035 = vpack.c.b16 %v771, %v767
  %v1036 = vpack.c.b16 %v772, %v768
  %v1037 = vpack.c.b16 %v777, %v773
  %v1038 = vpack.c.b16 %v778, %v774
  %v1039 = vpack.c.b16 %v779, %v775
  %v1040 = vpack.c.b16 %v780, %v776
  %v1041 = vpack.c.b16 %v785, %v781
  %v1042 = vpack.c.b16 %v786, %v782
  %v1043 = vpack.c.b16 %v787, %v783
  %v1044 = vpack.c.b16 %v788, %v784
  %v1045 = vpack.c.b16 %v793, %v789
  %v1046 = vpack.c.b16 %v794, %v790
  %v1047 = vpack.c.b16 %v795, %v791
  %v1048 = vpack.c.b16 %v796, %v792
  %v1049 = vpack.c.b16 %v801, %v797
  %v1050 = vpack.c.b16 %v802, %v798
  %v1051 = vpack.c.b16 %v803, %v799
  %v1052 = vpack.c.b16 %v804, %v800
  %v1053 = vpack.c.b16 %v809, %v805
  %v1054 = vpack.c.b16 %v810, %v806
  %v1055 = vpack.c.b16 %v811, %v807
  %v1056 = vpack.c.b16 %v812, %v808
  %v1057 = vpack.c.b16 %v817, %v813
  %v1058 = vpack.c.b16 %v818, %v814
  %v1059 = vpack.c.b16 %v819, %v815
  %v1060 = vpack.c.b16 %v820, %v816
  %v1061 = vpack.c.b16 %v825, %v821
  %v1062 = vpack.c.b16 %v826, %v822
  %v1063 = vpack.c.b16 %v827, %v823
  %v1064 = vpack.c.b16 %v828, %v824
  %v1065 = vpack.c.b16 %v833, %v829
  %v1066 = vpack.c.b16 %v834, %v830
  %v1067 = vpack.c.b16 %v835, %v831
  %v1068 = vpack.c.b16 %v836, %v832
  %v1069 = vpack.c.b16 %v841, %v837
  %v1070 = vpack.c.b16 %v842, %v838
  %v1071 = vpack.c.b16 %v843, %v839
  %v1072 = vpack.c.b16 %v844, %v840
  %v1073 = vpack.c.b16 %v849, %v845
  %v1074 = vpack.c.b16 %v850, %v846
  %v1075 = vpack.c.b16 %v851, %v847
  %v1076 = vpack.c.b16 %v852, %v848
  %v1077 = vpack.c.b16 %v857, %v853
  %v1078 = vpack.c.b16 %v858, %v854
  %v1079 = vpack.c.b16 %v859, %v855
  %v1080 = vpack.c.b16 %v860, %v856
  %v1081 = vpack.c.b16 %v865, %v861
  %v1082 = vpack.c.b16 %v866, %v862
  %v1083 = vpack.c.b16 %v867, %v863
  %v1084 = vpack.c.b16 %v868, %v864
  %v1085 = vpack.c.b16 %v873, %v869
  %v1086 = vpack.c.b16 %v874, %v870
  %v1087 = vpack.c.b16 %v875, %v871
  %v1088 = vpack.c.b16 %v876, %v872
  %v1089 = vpack.c.b16 %v881, %v877
  %v1090 = vpack.c.b16 %v882, %v878
  %v1091 = vpack.c.b16 %v883, %v879
  %v1092 = vpack.c.b16 %v884, %v880
  %v1093 = vpack.c.b16 %v889, %v885
  %v1094 = vpack.c.b16 %v890, %v886
  %v1095 = vpack.c.b16 %v891, %v887
  %v1096 = vpack.c.b16 %v892, %v888
  %v1097 = vpack.c.b16 %v897, %v893
  %v1098 = vpack.c.b16 %v898, %v894
  %v1099 = vpack.c.b16 %v899, %v895
  %v1100 = vpack.c.b16 %v900, %v896
  %vm1301 = vcmask 261120
  %v1303 = vsel %vm1301, %v281, 0
  %v1306 = vsel %vm1301, %v288, 0
  %1308 = vmatprep.subr.bf16.mxu0 %v930
  %1309 = vmatpush1.bf16.msra.mxu0 %v929
  %1310 = vmatprep.subr.bf16.mxu0 %v926
  %1311 = vmatpush1.bf16.msra.mxu0 %v925
  %1312 = vmatprep.subr.bf16.mxu0 %v922
  %1313 = vmatpush1.bf16.msra.mxu0 %v921
  %1314 = vmatprep.subr.bf16.mxu0 %v918
  %1315 = vmatpush1.bf16.msra.mxu0 %v917
  %1316 = vmatprep.subr.bf16.mxu0 %v914
  %1317 = vmatpush1.bf16.msra.mxu0 %v913
  %1318 = vmatprep.subr.bf16.mxu0 %v910
  %1319 = vmatpush1.bf16.msra.mxu0 %v909
  %1320 = vmatprep.subr.bf16.mxu0 %v906
  %1321 = vmatpush1.bf16.msra.mxu0 %v905
  %1322 = vmatprep.subr.bf16.mxu0 %v902
  %1323 = vmatpush1.bf16.msra.mxu0 %v901
  %1324 = vmatprep.subr.bf16.mxu0 %v962
  %1325 = vmatpush2.bf16.msra.mxu0 %v961
  %1326 = vmatprep.subr.bf16.mxu0 %v958
  %1327 = vmatpush2.bf16.msra.mxu0 %v957
  %1328 = vmatprep.subr.bf16.mxu0 %v954
  %1329 = vmatpush2.bf16.msra.mxu0 %v953
  %1330 = vmatprep.subr.bf16.mxu0 %v950
  %1331 = vmatpush2.bf16.msra.mxu0 %v949
  %1332 = vmatprep.subr.bf16.mxu0 %v946
  %1333 = vmatpush2.bf16.msra.mxu0 %v945
  %1334 = vmatprep.subr.bf16.mxu0 %v942
  %1335 = vmatpush2.bf16.msra.mxu0 %v941
  %1336 = vmatprep.subr.bf16.mxu0 %v938
  %1337 = vmatpush2.bf16.msra.mxu0 %v937
  %1338 = vmatprep.subr.bf16.mxu0 %v934
  %1339 = vmatpush2.bf16.msra.mxu0 %v933
  %1340 = vmatprep.mubr.bf16.mxu0 %v276
  %1341 = vmatmul.mubr.bf16.gmra.mxu0 %v275
  %v1342 = vpop.f32.mrf.mxu0
  %v1343 = vadd.f32 0.0, %v1342
  %v1344 = vpop.f32.mrf.mxu0
  %v1345 = vadd.f32 0.0, %v1344
  %v1346 = vpop.f32.mrf.mxu0
  %v1347 = vadd.f32 0.0, %v1346
  %v1348 = vpop.f32.mrf.mxu0
  %v1349 = vadd.f32 0.0, %v1348
  %1350 = vmatprep.mubr.bf16.mxu0 %v283
  %1351 = vmatmul.mubr.bf16.gmra.mxu0 %v282
  %v1352 = vpop.f32.mrf.mxu0
  %v1353 = vadd.f32 0.0, %v1352
  %v1354 = vpop.f32.mrf.mxu0
  %v1355 = vadd.f32 0.0, %v1354
  %v1356 = vpop.f32.mrf.mxu0
  %v1357 = vadd.f32 0.0, %v1356
  %v1358 = vpop.f32.mrf.mxu0
  %v1359 = vadd.f32 0.0, %v1358
  %1360 = vdwg.mxu0
  %1361 = vmatprep.subr.bf16.mxu0 %v994
  %1362 = vmatpush1.bf16.msra.mxu0 %v993
  %1363 = vmatprep.subr.bf16.mxu0 %v990
  %1364 = vmatpush1.bf16.msra.mxu0 %v989
  %1365 = vmatprep.subr.bf16.mxu0 %v986
  %1366 = vmatpush1.bf16.msra.mxu0 %v985
  %1367 = vmatprep.subr.bf16.mxu0 %v982
  %1368 = vmatpush1.bf16.msra.mxu0 %v981
  %1369 = vmatprep.subr.bf16.mxu0 %v978
  %1370 = vmatpush1.bf16.msra.mxu0 %v977
  %1371 = vmatprep.subr.bf16.mxu0 %v974
  %1372 = vmatpush1.bf16.msra.mxu0 %v973
  %1373 = vmatprep.subr.bf16.mxu0 %v970
  %1374 = vmatpush1.bf16.msra.mxu0 %v969
  %1375 = vmatprep.subr.bf16.mxu0 %v966
  %1376 = vmatpush1.bf16.msra.mxu0 %v965
  %1377 = vmatprep.subr.bf16.mxu0 %v1026
  %1378 = vmatpush2.bf16.msra.mxu0 %v1025
  %1379 = vmatprep.subr.bf16.mxu0 %v1022
  %1380 = vmatpush2.bf16.msra.mxu0 %v1021
  %1381 = vmatprep.subr.bf16.mxu0 %v1018
  %1382 = vmatpush2.bf16.msra.mxu0 %v1017
  %1383 = vmatprep.subr.bf16.mxu0 %v1014
  %1384 = vmatpush2.bf16.msra.mxu0 %v1013
  %1385 = vmatprep.subr.bf16.mxu0 %v1010
  %1386 = vmatpush2.bf16.msra.mxu0 %v1009
  %1387 = vmatprep.subr.bf16.mxu0 %v1006
  %1388 = vmatpush2.bf16.msra.mxu0 %v1005
  %1389 = vmatprep.subr.bf16.mxu0 %v1002
  %1390 = vmatpush2.bf16.msra.mxu0 %v1001
  %1391 = vmatprep.subr.bf16.mxu0 %v998
  %1392 = vmatpush2.bf16.msra.mxu0 %v997
  %1393 = vmatprep.mubr.bf16.mxu0 %v278
  %1394 = vmatmul.mubr.bf16.gmra.mxu0 %v277
  %v1395 = vpop.f32.mrf.mxu0
  %v1396 = vadd.f32 %v1343, %v1395
  %v1397 = vpop.f32.mrf.mxu0
  %v1398 = vadd.f32 %v1345, %v1397
  %v1399 = vpop.f32.mrf.mxu0
  %v1400 = vadd.f32 %v1347, %v1399
  %v1401 = vpop.f32.mrf.mxu0
  %v1402 = vadd.f32 %v1349, %v1401
  %1403 = vmatprep.mubr.bf16.mxu0 %v285
  %1404 = vmatmul.mubr.bf16.gmra.mxu0 %v284
  %v1405 = vpop.f32.mrf.mxu0
  %v1406 = vadd.f32 %v1353, %v1405
  %v1407 = vpop.f32.mrf.mxu0
  %v1408 = vadd.f32 %v1355, %v1407
  %v1409 = vpop.f32.mrf.mxu0
  %v1410 = vadd.f32 %v1357, %v1409
  %v1411 = vpop.f32.mrf.mxu0
  %v1412 = vadd.f32 %v1359, %v1411
  %1413 = vdwg.mxu0
  %1414 = vmatprep.subr.bf16.mxu0 %v1058
  %1415 = vmatpush1.bf16.msra.mxu0 %v1057
  %1416 = vmatprep.subr.bf16.mxu0 %v1054
  %1417 = vmatpush1.bf16.msra.mxu0 %v1053
  %1418 = vmatprep.subr.bf16.mxu0 %v1050
  %1419 = vmatpush1.bf16.msra.mxu0 %v1049
  %1420 = vmatprep.subr.bf16.mxu0 %v1046
  %1421 = vmatpush1.bf16.msra.mxu0 %v1045
  %1422 = vmatprep.subr.bf16.mxu0 %v1042
  %1423 = vmatpush1.bf16.msra.mxu0 %v1041
  %1424 = vmatprep.subr.bf16.mxu0 %v1038
  %1425 = vmatpush1.bf16.msra.mxu0 %v1037
  %1426 = vmatprep.subr.bf16.mxu0 %v1034
  %1427 = vmatpush1.bf16.msra.mxu0 %v1033
  %1428 = vmatprep.subr.bf16.mxu0 %v1030
  %1429 = vmatpush1.bf16.msra.mxu0 %v1029
  %1430 = vmatprep.subr.bf16.mxu0 %v1090
  %1431 = vmatpush2.bf16.msra.mxu0 %v1089
  %1432 = vmatprep.subr.bf16.mxu0 %v1086
  %1433 = vmatpush2.bf16.msra.mxu0 %v1085
  %1434 = vmatprep.subr.bf16.mxu0 %v1082
  %1435 = vmatpush2.bf16.msra.mxu0 %v1081
  %1436 = vmatprep.subr.bf16.mxu0 %v1078
  %1437 = vmatpush2.bf16.msra.mxu0 %v1077
  %1438 = vmatprep.subr.bf16.mxu0 %v1074
  %1439 = vmatpush2.bf16.msra.mxu0 %v1073
  %1440 = vmatprep.subr.bf16.mxu0 %v1070
  %1441 = vmatpush2.bf16.msra.mxu0 %v1069
  %1442 = vmatprep.subr.bf16.mxu0 %v1066
  %1443 = vmatpush2.bf16.msra.mxu0 %v1065
  %1444 = vmatprep.subr.bf16.mxu0 %v1062
  %1445 = vmatpush2.bf16.msra.mxu0 %v1061
  %1446 = vmatprep.mubr.bf16.mxu0 %v280
  %1447 = vmatmul.mubr.bf16.gmra.mxu0 %v279
  %v1448 = vpop.f32.mrf.mxu0
  %v1449 = vadd.f32 %v1396, %v1448
  %v1450 = vpop.f32.mrf.mxu0
  %v1451 = vadd.f32 %v1398, %v1450
  %v1452 = vpop.f32.mrf.mxu0
  %v1453 = vadd.f32 %v1400, %v1452
  %v1454 = vpop.f32.mrf.mxu0
  %v1455 = vadd.f32 %v1402, %v1454
  %1456 = vmatprep.mubr.bf16.mxu0 %v287
  %1457 = vmatmul.mubr.bf16.gmra.mxu0 %v286
  %v1458 = vpop.f32.mrf.mxu0
  %v1459 = vadd.f32 %v1406, %v1458
  %v1460 = vpop.f32.mrf.mxu0
  %v1461 = vadd.f32 %v1408, %v1460
  %v1462 = vpop.f32.mrf.mxu0
  %v1463 = vadd.f32 %v1410, %v1462
  %v1464 = vpop.f32.mrf.mxu0
  %v1465 = vadd.f32 %v1412, %v1464
  %1466 = vdwg.mxu0
  %1467 = vmatprep.subr.bf16.mxu0 0
  %1468 = vmatpush1.bf16.msra.mxu0 0
  %1469 = vmatprep.subr.bf16.mxu0 0
  %1470 = vmatpush1.bf16.msra.mxu0 0
  %1471 = vmatprep.subr.bf16.mxu0 0
  %1472 = vmatpush1.bf16.msra.mxu0 0
  %1473 = vmatprep.subr.bf16.mxu0 0
  %1474 = vmatpush1.bf16.msra.mxu0 0
  %1475 = vmatprep.subr.bf16.mxu0 0
  %1476 = vmatpush1.bf16.msra.mxu0 0
  %1477 = vmatprep.subr.bf16.mxu0 0
  %1478 = vmatpush1.bf16.msra.mxu0 0
  %1479 = vmatprep.subr.bf16.mxu0 %v1098
  %1480 = vmatpush1.bf16.msra.mxu0 %v1097
  %1481 = vmatprep.subr.bf16.mxu0 %v1094
  %1482 = vmatpush1.bf16.msra.mxu0 %v1093
  %1483 = vmatprep.subr.bf16.mxu0 0
  %1484 = vmatpush2.bf16.msra.mxu0 0
  %1485 = vmatprep.subr.bf16.mxu0 0
  %1486 = vmatpush2.bf16.msra.mxu0 0
  %1487 = vmatprep.subr.bf16.mxu0 0
  %1488 = vmatpush2.bf16.msra.mxu0 0
  %1489 = vmatprep.subr.bf16.mxu0 0
  %1490 = vmatpush2.bf16.msra.mxu0 0
  %1491 = vmatprep.subr.bf16.mxu0 0
  %1492 = vmatpush2.bf16.msra.mxu0 0
  %1493 = vmatprep.subr.bf16.mxu0 0
  %1494 = vmatpush2.bf16.msra.mxu0 0
  %1495 = vmatprep.subr.bf16.mxu0 0
  %1496 = vmatpush2.bf16.msra.mxu0 0
  %1497 = vmatprep.subr.bf16.mxu0 0
  %1498 = vmatpush2.bf16.msra.mxu0 0
  %1499 = vmatprep.mubr.bf16.mxu0 0
  %1500 = vmatmul.mubr.bf16.gmra.mxu0 %v1303
  %v1501 = vpop.f32.mrf.mxu0
  %v1502 = vadd.f32 %v1449, %v1501
  %v1503 = vpop.f32.mrf.mxu0
  %v1504 = vadd.f32 %v1451, %v1503
  %v1505 = vpop.f32.mrf.mxu0
  %v1506 = vadd.f32 %v1453, %v1505
  %v1507 = vpop.f32.mrf.mxu0
  %v1508 = vadd.f32 %v1455, %v1507
  %1509 = vmatprep.mubr.bf16.mxu0 0
  %1510 = vmatmul.mubr.bf16.gmra.mxu0 %v1306
  %v1511 = vpop.f32.mrf.mxu0
  %v1512 = vadd.f32 %v1459, %v1511
  %v1513 = vpop.f32.mrf.mxu0
  %v1514 = vadd.f32 %v1461, %v1513
  %v1515 = vpop.f32.mrf.mxu0
  %v1516 = vadd.f32 %v1463, %v1515
  %v1517 = vpop.f32.mrf.mxu0
  %v1518 = vadd.f32 %v1465, %v1517
  %1519 = vdwg.mxu0
  %1520 = vmatprep.subr.bf16.mxu0 %v932
  %1521 = vmatpush1.bf16.msra.mxu0 %v931
  %1522 = vmatprep.subr.bf16.mxu0 %v928
  %1523 = vmatpush1.bf16.msra.mxu0 %v927
  %1524 = vmatprep.subr.bf16.mxu0 %v924
  %1525 = vmatpush1.bf16.msra.mxu0 %v923
  %1526 = vmatprep.subr.bf16.mxu0 %v920
  %1527 = vmatpush1.bf16.msra.mxu0 %v919
  %1528 = vmatprep.subr.bf16.mxu0 %v916
  %1529 = vmatpush1.bf16.msra.mxu0 %v915
  %1530 = vmatprep.subr.bf16.mxu0 %v912
  %1531 = vmatpush1.bf16.msra.mxu0 %v911
  %1532 = vmatprep.subr.bf16.mxu0 %v908
  %1533 = vmatpush1.bf16.msra.mxu0 %v907
  %1534 = vmatprep.subr.bf16.mxu0 %v904
  %1535 = vmatpush1.bf16.msra.mxu0 %v903
  %1536 = vmatprep.subr.bf16.mxu0 %v964
  %1537 = vmatpush2.bf16.msra.mxu0 %v963
  %1538 = vmatprep.subr.bf16.mxu0 %v960
  %1539 = vmatpush2.bf16.msra.mxu0 %v959
  %1540 = vmatprep.subr.bf16.mxu0 %v956
  %1541 = vmatpush2.bf16.msra.mxu0 %v955
  %1542 = vmatprep.subr.bf16.mxu0 %v952
  %1543 = vmatpush2.bf16.msra.mxu0 %v951
  %1544 = vmatprep.subr.bf16.mxu0 %v948
  %1545 = vmatpush2.bf16.msra.mxu0 %v947
  %1546 = vmatprep.subr.bf16.mxu0 %v944
  %1547 = vmatpush2.bf16.msra.mxu0 %v943
  %1548 = vmatprep.subr.bf16.mxu0 %v940
  %1549 = vmatpush2.bf16.msra.mxu0 %v939
  %1550 = vmatprep.subr.bf16.mxu0 %v936
  %1551 = vmatpush2.bf16.msra.mxu0 %v935
  %1552 = vmatprep.mubr.bf16.mxu0 %v276
  %1553 = vmatmul.mubr.bf16.gmra.mxu0 %v275
  %v1554 = vpop.f32.mrf.mxu0
  %v1555 = vadd.f32 0.0, %v1554
  %v1556 = vpop.f32.mrf.mxu0
  %v1557 = vadd.f32 0.0, %v1556
  %v1558 = vpop.f32.mrf.mxu0
  %v1559 = vadd.f32 0.0, %v1558
  %v1560 = vpop.f32.mrf.mxu0
  %v1561 = vadd.f32 0.0, %v1560
  %1562 = vmatprep.mubr.bf16.mxu0 %v283
  %1563 = vmatmul.mubr.bf16.gmra.mxu0 %v282
  %v1564 = vpop.f32.mrf.mxu0
  %v1565 = vadd.f32 0.0, %v1564
  %v1566 = vpop.f32.mrf.mxu0
  %v1567 = vadd.f32 0.0, %v1566
  %v1568 = vpop.f32.mrf.mxu0
  %v1569 = vadd.f32 0.0, %v1568
  %v1570 = vpop.f32.mrf.mxu0
  %v1571 = vadd.f32 0.0, %v1570
  %1572 = vdwg.mxu0
  %1573 = vmatprep.subr.bf16.mxu0 %v996
  %1574 = vmatpush1.bf16.msra.mxu0 %v995
  %1575 = vmatprep.subr.bf16.mxu0 %v992
  %1576 = vmatpush1.bf16.msra.mxu0 %v991
  %1577 = vmatprep.subr.bf16.mxu0 %v988
  %1578 = vmatpush1.bf16.msra.mxu0 %v987
  %1579 = vmatprep.subr.bf16.mxu0 %v984
  %1580 = vmatpush1.bf16.msra.mxu0 %v983
  %1581 = vmatprep.subr.bf16.mxu0 %v980
  %1582 = vmatpush1.bf16.msra.mxu0 %v979
  %1583 = vmatprep.subr.bf16.mxu0 %v976
  %1584 = vmatpush1.bf16.msra.mxu0 %v975
  %1585 = vmatprep.subr.bf16.mxu0 %v972
  %1586 = vmatpush1.bf16.msra.mxu0 %v971
  %1587 = vmatprep.subr.bf16.mxu0 %v968
  %1588 = vmatpush1.bf16.msra.mxu0 %v967
  %1589 = vmatprep.subr.bf16.mxu0 %v1028
  %1590 = vmatpush2.bf16.msra.mxu0 %v1027
  %1591 = vmatprep.subr.bf16.mxu0 %v1024
  %1592 = vmatpush2.bf16.msra.mxu0 %v1023
  %1593 = vmatprep.subr.bf16.mxu0 %v1020
  %1594 = vmatpush2.bf16.msra.mxu0 %v1019
  %1595 = vmatprep.subr.bf16.mxu0 %v1016
  %1596 = vmatpush2.bf16.msra.mxu0 %v1015
  %1597 = vmatprep.subr.bf16.mxu0 %v1012
  %1598 = vmatpush2.bf16.msra.mxu0 %v1011
  %1599 = vmatprep.subr.bf16.mxu0 %v1008
  %1600 = vmatpush2.bf16.msra.mxu0 %v1007
  %1601 = vmatprep.subr.bf16.mxu0 %v1004
  %1602 = vmatpush2.bf16.msra.mxu0 %v1003
  %1603 = vmatprep.subr.bf16.mxu0 %v1000
  %1604 = vmatpush2.bf16.msra.mxu0 %v999
  %1605 = vmatprep.mubr.bf16.mxu0 %v278
  %1606 = vmatmul.mubr.bf16.gmra.mxu0 %v277
  %v1607 = vpop.f32.mrf.mxu0
  %v1608 = vadd.f32 %v1555, %v1607
  %v1609 = vpop.f32.mrf.mxu0
  %v1610 = vadd.f32 %v1557, %v1609
  %v1611 = vpop.f32.mrf.mxu0
  %v1612 = vadd.f32 %v1559, %v1611
  %v1613 = vpop.f32.mrf.mxu0
  %v1614 = vadd.f32 %v1561, %v1613
  %1615 = vmatprep.mubr.bf16.mxu0 %v285
  %1616 = vmatmul.mubr.bf16.gmra.mxu0 %v284
  %v1617 = vpop.f32.mrf.mxu0
  %v1618 = vadd.f32 %v1565, %v1617
  %v1619 = vpop.f32.mrf.mxu0
  %v1620 = vadd.f32 %v1567, %v1619
  %v1621 = vpop.f32.mrf.mxu0
  %v1622 = vadd.f32 %v1569, %v1621
  %v1623 = vpop.f32.mrf.mxu0
  %v1624 = vadd.f32 %v1571, %v1623
  %1625 = vdwg.mxu0
  %1626 = vmatprep.subr.bf16.mxu0 %v1060
  %1627 = vmatpush1.bf16.msra.mxu0 %v1059
  %1628 = vmatprep.subr.bf16.mxu0 %v1056
  %1629 = vmatpush1.bf16.msra.mxu0 %v1055
  %1630 = vmatprep.subr.bf16.mxu0 %v1052
  %1631 = vmatpush1.bf16.msra.mxu0 %v1051
  %1632 = vmatprep.subr.bf16.mxu0 %v1048
  %1633 = vmatpush1.bf16.msra.mxu0 %v1047
  %1634 = vmatprep.subr.bf16.mxu0 %v1044
  %1635 = vmatpush1.bf16.msra.mxu0 %v1043
  %1636 = vmatprep.subr.bf16.mxu0 %v1040
  %1637 = vmatpush1.bf16.msra.mxu0 %v1039
  %1638 = vmatprep.subr.bf16.mxu0 %v1036
  %1639 = vmatpush1.bf16.msra.mxu0 %v1035
  %1640 = vmatprep.subr.bf16.mxu0 %v1032
  %1641 = vmatpush1.bf16.msra.mxu0 %v1031
  %1642 = vmatprep.subr.bf16.mxu0 %v1092
  %1643 = vmatpush2.bf16.msra.mxu0 %v1091
  %1644 = vmatprep.subr.bf16.mxu0 %v1088
  %1645 = vmatpush2.bf16.msra.mxu0 %v1087
  %1646 = vmatprep.subr.bf16.mxu0 %v1084
  %1647 = vmatpush2.bf16.msra.mxu0 %v1083
  %1648 = vmatprep.subr.bf16.mxu0 %v1080
  %1649 = vmatpush2.bf16.msra.mxu0 %v1079
  %1650 = vmatprep.subr.bf16.mxu0 %v1076
  %1651 = vmatpush2.bf16.msra.mxu0 %v1075
  %1652 = vmatprep.subr.bf16.mxu0 %v1072
  %1653 = vmatpush2.bf16.msra.mxu0 %v1071
  %1654 = vmatprep.subr.bf16.mxu0 %v1068
  %1655 = vmatpush2.bf16.msra.mxu0 %v1067
  %1656 = vmatprep.subr.bf16.mxu0 %v1064
  %1657 = vmatpush2.bf16.msra.mxu0 %v1063
  %1658 = vmatprep.mubr.bf16.mxu0 %v280
  %1659 = vmatmul.mubr.bf16.gmra.mxu0 %v279
  %v1660 = vpop.f32.mrf.mxu0
  %v1661 = vadd.f32 %v1608, %v1660
  %v1662 = vpop.f32.mrf.mxu0
  %v1663 = vadd.f32 %v1610, %v1662
  %v1664 = vpop.f32.mrf.mxu0
  %v1665 = vadd.f32 %v1612, %v1664
  %v1666 = vpop.f32.mrf.mxu0
  %v1667 = vadd.f32 %v1614, %v1666
  %1668 = vmatprep.mubr.bf16.mxu0 %v287
  %1669 = vmatmul.mubr.bf16.gmra.mxu0 %v286
  %v1670 = vpop.f32.mrf.mxu0
  %v1671 = vadd.f32 %v1618, %v1670
  %v1672 = vpop.f32.mrf.mxu0
  %v1673 = vadd.f32 %v1620, %v1672
  %v1674 = vpop.f32.mrf.mxu0
  %v1675 = vadd.f32 %v1622, %v1674
  %v1676 = vpop.f32.mrf.mxu0
  %v1677 = vadd.f32 %v1624, %v1676
  %1678 = vdwg.mxu0
  %1679 = vmatprep.subr.bf16.mxu0 0
  %1680 = vmatpush1.bf16.msra.mxu0 0
  %1681 = vmatprep.subr.bf16.mxu0 0
  %1682 = vmatpush1.bf16.msra.mxu0 0
  %1683 = vmatprep.subr.bf16.mxu0 0
  %1684 = vmatpush1.bf16.msra.mxu0 0
  %1685 = vmatprep.subr.bf16.mxu0 0
  %1686 = vmatpush1.bf16.msra.mxu0 0
  %1687 = vmatprep.subr.bf16.mxu0 0
  %1688 = vmatpush1.bf16.msra.mxu0 0
  %1689 = vmatprep.subr.bf16.mxu0 0
  %1690 = vmatpush1.bf16.msra.mxu0 0
  %1691 = vmatprep.subr.bf16.mxu0 %v1100
  %1692 = vmatpush1.bf16.msra.mxu0 %v1099
  %1693 = vmatprep.subr.bf16.mxu0 %v1096
  %1694 = vmatpush1.bf16.msra.mxu0 %v1095
  %1695 = vmatprep.subr.bf16.mxu0 0
  %1696 = vmatpush2.bf16.msra.mxu0 0
  %1697 = vmatprep.subr.bf16.mxu0 0
  %1698 = vmatpush2.bf16.msra.mxu0 0
  %1699 = vmatprep.subr.bf16.mxu0 0
  %1700 = vmatpush2.bf16.msra.mxu0 0
  %1701 = vmatprep.subr.bf16.mxu0 0
  %1702 = vmatpush2.bf16.msra.mxu0 0
  %1703 = vmatprep.subr.bf16.mxu0 0
  %1704 = vmatpush2.bf16.msra.mxu0 0
  %1705 = vmatprep.subr.bf16.mxu0 0
  %1706 = vmatpush2.bf16.msra.mxu0 0
  %1707 = vmatprep.subr.bf16.mxu0 0
  %1708 = vmatpush2.bf16.msra.mxu0 0
  %1709 = vmatprep.subr.bf16.mxu0 0
  %1710 = vmatpush2.bf16.msra.mxu0 0
  %1711 = vmatprep.mubr.bf16.mxu0 0
  %1712 = vmatmul.mubr.bf16.gmra.mxu0 %v1303
  %v1713 = vpop.f32.mrf.mxu0
  %v1714 = vadd.f32 %v1661, %v1713
  %v1715 = vpop.f32.mrf.mxu0
  %v1716 = vadd.f32 %v1663, %v1715
  %v1717 = vpop.f32.mrf.mxu0
  %v1718 = vadd.f32 %v1665, %v1717
  %v1719 = vpop.f32.mrf.mxu0
  %v1720 = vadd.f32 %v1667, %v1719
  %1721 = vmatprep.mubr.bf16.mxu0 0
  %1722 = vmatmul.mubr.bf16.gmra.mxu0 %v1306
  %v1723 = vpop.f32.mrf.mxu0
  %v1724 = vadd.f32 %v1671, %v1723
  %v1725 = vpop.f32.mrf.mxu0
  %v1726 = vadd.f32 %v1673, %v1725
  %v1727 = vpop.f32.mrf.mxu0
  %v1728 = vadd.f32 %v1675, %v1727
  %v1729 = vpop.f32.mrf.mxu0
  %v1730 = vadd.f32 %v1677, %v1729
  %1731 = vdwg.mxu0
  %v1732 = vmax.f32 %v1502, %v1504
  %v1733 = vmax.f32 %v1506, %v1508
  %v1734 = vmax.f32 %v1512, %v1514
  %v1735 = vmax.f32 %v1516, %v1518
  %v1736 = vmax.f32 %v1714, %v1716
  %v1737 = vmax.f32 %v1718, %v1720
  %v1738 = vmax.f32 %v1724, %v1726
  %v1739 = vmax.f32 %v1728, %v1730
  %v1740 = vmax.f32 %v1732, %v1736
  %v1741 = vmax.f32 %v1733, %v1737
  %v1742 = vmax.f32 %v1734, %v1738
  %v1743 = vmax.f32 %v1735, %v1739
  %v1744 = vld [vmem:[%s2] sm:$0xff]
  %v1745 = vld [vmem:[%s2 + $0x8] sm:$0xff]
  %v1746 = vld [vmem:[%s2 + $0x10] sm:$0xff]
  %v1747 = vld [vmem:[%s2 + $0x18] sm:$0xff]
  %1749 = vset.pattern.permute.xlu0 0
  %1750 = vperm.xlu0 %1749, %v1744
  %v1751 = vpop.permute.xlu0 %1750
  %1754 = vset.pattern.permute.xlu0 0
  %1755 = vperm.xlu0 %1754, %v1745
  %v1756 = vpop.permute.xlu0 %1755
  %1759 = vset.pattern.permute.xlu0 0
  %1760 = vperm.xlu0 %1759, %v1746
  %v1761 = vpop.permute.xlu0 %1760
  %1764 = vset.pattern.permute.xlu0 0
  %1765 = vperm.xlu0 %1764, %v1747
  %v1766 = vpop.permute.xlu0 %1765
  %v1768 = vadd.f32 %v1740, %v1751
  %v1769 = vadd.f32 %v1741, %v1756
  %v1770 = vadd.f32 %v1742, %v1761
  %v1771 = vadd.f32 %v1743, %v1766
  %1772 = vst [vmem:[%s3] sm:$0xff] %v1768
  %1773 = vst [vmem:[%s3 + $0x8] sm:$0xff] %v1769
  %1774 = vst [vmem:[%s3 + $0x10] sm:$0xff] %v1770
  %1775 = vst [vmem:[%s3 + $0x18] sm:$0xff] %v1771
  // Predicated region
  $region14: #{tudui_forward.5} parent=0 // pred_check
    _
  $region15: #{tudui_forward.5} parent=0 // pred_check_branch
    %1777 = sbr.rel (0) target = $region17
  $region16: #{tudui_forward.5} parent=0 // pred_region
    _
  $region17: #{tudui_forward.5} parent=0 // pred_fallthru
    _
  // Predicated region
  $region18: #{tudui_forward.5} parent=0 // pred_check
    _
  $region19: #{tudui_forward.5} parent=0 // pred_check_branch
    %1779 = sbr.rel (0) target = $region21
  $region20: #{tudui_forward.5} parent=0 // pred_region
    _
  $region21: #{tudui_forward.5} parent=0 // pred_fallthru
    _

// kernel: tudui_forward.6
$region0: #{tudui_forward.6}
  #allocation0 [shape = 'u32[]', space=smem, size = 0x4, offset = 0x4, fixed_abs, tag = 'smem constant byte address 0x4 - core index']
  #allocation1 [shape = 'u32[144,128]{1,0:T(1,128)}', space=vmem, size = 0x12000, scoped, tag = 'internal scratch']
  %s0 = inlined_call_operand.vmem [shape: bf16[800,128], index: 0, kind: input, shape index: {}]
  %s1 = inlined_call_operand.vmem [shape: bf16[64,800], index: 1, kind: input, shape index: {}]
  %s2 = inlined_call_operand.vmem [shape: f32[64,1], index: 2, kind: input, shape index: {}]
  %s3 = inlined_call_operand.vmem [shape: f32[64,32], index: 3, kind: output, shape index: {}]
  %s4 = sld [smem:[#allocation0]]
  $region22: #{tudui_forward.6} parent=0
    _
  %s6 = ssub.s32 1, %s4
  %s7 = scalar_select 0, %s6, %s4
  // Predicated region
  $region2: #{tudui_forward.6} parent=0 // pred_check
    _
  $region3: #{tudui_forward.6} parent=0 // pred_check_branch
    %9 = sbr.rel (0) target = $region5
  $region4: #{tudui_forward.6} parent=0 // pred_region
    _
  $region5: #{tudui_forward.6} parent=0 // pred_fallthru
    _
  // Predicated region
  $region6: #{tudui_forward.6} parent=0 // pred_check
    _
  $region7: #{tudui_forward.6} parent=0 // pred_check_branch
    %11 = sbr.rel (0) target = $region9
  $region8: #{tudui_forward.6} parent=0 // pred_region
    _
  $region9: #{tudui_forward.6} parent=0 // pred_fallthru
    _
  // Predicated region
  $region10: #{tudui_forward.6} parent=0 // pred_check
    _
  $region11: #{tudui_forward.6} parent=0 // pred_check_branch
    %13 = sbr.rel (0) target = $region13
  $region12: #{tudui_forward.6} parent=0 // pred_region
    _
  $region13: #{tudui_forward.6} parent=0 // pred_fallthru
    _
  %v15 = vld [vmem:[%s1] sm:$0xff]
  %v16 = vld [vmem:[%s1 + $0x8] sm:$0xff]
  %v17 = vld [vmem:[%s1 + $0x10] sm:$0xff]
  %v18 = vld [vmem:[%s1 + $0x18] sm:$0xf]
  %v19 = vld [vmem:[%s1 + $0x1c] sm:$0xff]
  %v20 = vld [vmem:[%s1 + $0x24] sm:$0xff]
  %v21 = vld [vmem:[%s1 + $0x2c] sm:$0xff]
  %v22 = vld [vmem:[%s1 + $0x34] sm:$0xf]
  %v23 = vld [vmem:[%s1 + $0x38] sm:$0xff]
  %v24 = vld [vmem:[%s1 + $0x40] sm:$0xff]
  %v25 = vld [vmem:[%s1 + $0x48] sm:$0xff]
  %v26 = vld [vmem:[%s1 + $0x50] sm:$0xf]
  %v27 = vld [vmem:[%s1 + $0x54] sm:$0xff]
  %v28 = vld [vmem:[%s1 + $0x5c] sm:$0xff]
  %v29 = vld [vmem:[%s1 + $0x64] sm:$0xff]
  %v30 = vld [vmem:[%s1 + $0x6c] sm:$0xf]
  %v31 = vld [vmem:[%s1 + $0x70] sm:$0xff]
  %v32 = vld [vmem:[%s1 + $0x78] sm:$0xff]
  %v33 = vld [vmem:[%s1 + $0x80] sm:$0xff]
  %v34 = vld [vmem:[%s1 + $0x88] sm:$0xf]
  %v35 = vld [vmem:[%s1 + $0x8c] sm:$0xff]
  %v36 = vld [vmem:[%s1 + $0x94] sm:$0xff]
  %v37 = vld [vmem:[%s1 + $0x9c] sm:$0xff]
  %v38 = vld [vmem:[%s1 + $0xa4] sm:$0xf]
  %v39 = vld [vmem:[%s1 + $0xa8] sm:$0xff]
  %v40 = vld [vmem:[%s1 + $0xb0] sm:$0xff]
  %v41 = vld [vmem:[%s1 + $0xb8] sm:$0xff]
  %v42 = vld [vmem:[%s1 + $0xc0] sm:$0xf]
  %v43 = vld [vmem:[%s1 + $0xc4] sm:$0xff]
  %v44 = vld [vmem:[%s1 + $0xcc] sm:$0xff]
  %v45 = vld [vmem:[%s1 + $0xd4] sm:$0xff]
  %v46 = vld [vmem:[%s1 + $0xdc] sm:$0xf]
  %v47 = vld [vmem:[%s0] sm:$0xf]
  %v48 = vld [vmem:[%s0 + $0x4] sm:$0xf]
  %v49 = vld [vmem:[%s0 + $0x8] sm:$0xf]
  %v50 = vld [vmem:[%s0 + $0xc] sm:$0xf]
  %v51 = vld [vmem:[%s0 + $0x10] sm:$0xf]
  %v52 = vld [vmem:[%s0 + $0x14] sm:$0xf]
  %v53 = vld [vmem:[%s0 + $0x18] sm:$0xf]
  %v54 = vld [vmem:[%s0 + $0x1c] sm:$0xf]
  %v55 = vld [vmem:[%s0 + $0x20] sm:$0xf]
  %v56 = vld [vmem:[%s0 + $0x24] sm:$0xf]
  %v57 = vld [vmem:[%s0 + $0x28] sm:$0xf]
  %v58 = vld [vmem:[%s0 + $0x2c] sm:$0xf]
  %v59 = vld [vmem:[%s0 + $0x30] sm:$0xf]
  %v60 = vld [vmem:[%s0 + $0x34] sm:$0xf]
  %v61 = vld [vmem:[%s0 + $0x38] sm:$0xf]
  %v62 = vld [vmem:[%s0 + $0x3c] sm:$0xf]
  %v63 = vld [vmem:[%s0 + $0x40] sm:$0xf]
  %v64 = vld [vmem:[%s0 + $0x44] sm:$0xf]
  %v65 = vld [vmem:[%s0 + $0x48] sm:$0xf]
  %v66 = vld [vmem:[%s0 + $0x4c] sm:$0xf]
  %v67 = vld [vmem:[%s0 + $0x50] sm:$0xf]
  %v68 = vld [vmem:[%s0 + $0x54] sm:$0xf]
  %v69 = vld [vmem:[%s0 + $0x58] sm:$0xf]
  %v70 = vld [vmem:[%s0 + $0x5c] sm:$0xf]
  %v71 = vld [vmem:[%s0 + $0x60] sm:$0xf]
  %v72 = vld [vmem:[%s0 + $0x64] sm:$0xf]
  %v73 = vld [vmem:[%s0 + $0x68] sm:$0xf]
  %v74 = vld [vmem:[%s0 + $0x6c] sm:$0xf]
  %v75 = vld [vmem:[%s0 + $0x70] sm:$0xf]
  %v76 = vld [vmem:[%s0 + $0x74] sm:$0xf]
  %v77 = vld [vmem:[%s0 + $0x78] sm:$0xf]
  %v78 = vld [vmem:[%s0 + $0x7c] sm:$0xf]
  %v79 = vld [vmem:[%s0 + $0x80] sm:$0xf]
  %v80 = vld [vmem:[%s0 + $0x84] sm:$0xf]
  %v81 = vld [vmem:[%s0 + $0x88] sm:$0xf]
  %v82 = vld [vmem:[%s0 + $0x8c] sm:$0xf]
  %v83 = vld [vmem:[%s0 + $0x90] sm:$0xf]
  %v84 = vld [vmem:[%s0 + $0x94] sm:$0xf]
  %v85 = vld [vmem:[%s0 + $0x98] sm:$0xf]
  %v86 = vld [vmem:[%s0 + $0x9c] sm:$0xf]
  %v87 = vld [vmem:[%s0 + $0xa0] sm:$0xf]
  %v88 = vld [vmem:[%s0 + $0xa4] sm:$0xf]
  %v89 = vld [vmem:[%s0 + $0xa8] sm:$0xf]
  %v90 = vld [vmem:[%s0 + $0xac] sm:$0xf]
  %v91 = vld [vmem:[%s0 + $0xb0] sm:$0xf]
  %v92 = vld [vmem:[%s0 + $0xb4] sm:$0xf]
  %v93 = vld [vmem:[%s0 + $0xb8] sm:$0xf]
  %v94 = vld [vmem:[%s0 + $0xbc] sm:$0xf]
  %v95 = vld [vmem:[%s0 + $0xc0] sm:$0xf]
  %v96 = vld [vmem:[%s0 + $0xc4] sm:$0xf]
  %v97 = vld [vmem:[%s0 + $0xc8] sm:$0xf]
  %v98 = vld [vmem:[%s0 + $0xcc] sm:$0xf]
  %v99 = vld [vmem:[%s0 + $0xd0] sm:$0xf]
  %v100 = vld [vmem:[%s0 + $0xd4] sm:$0xf]
  %v101 = vld [vmem:[%s0 + $0xd8] sm:$0xf]
  %v102 = vld [vmem:[%s0 + $0xdc] sm:$0xf]
  %v103 = vld [vmem:[%s0 + $0xe0] sm:$0xf]
  %v104 = vld [vmem:[%s0 + $0xe4] sm:$0xf]
  %v105 = vld [vmem:[%s0 + $0xe8] sm:$0xf]
  %v106 = vld [vmem:[%s0 + $0xec] sm:$0xf]
  %v107 = vld [vmem:[%s0 + $0xf0] sm:$0xf]
  %v108 = vld [vmem:[%s0 + $0xf4] sm:$0xf]
  %v109 = vld [vmem:[%s0 + $0xf8] sm:$0xf]
  %v110 = vld [vmem:[%s0 + $0xfc] sm:$0xf]
  %v111 = vld [vmem:[%s0 + $0x100] sm:$0xf]
  %v112 = vld [vmem:[%s0 + $0x104] sm:$0xf]
  %v113 = vld [vmem:[%s0 + $0x108] sm:$0xf]
  %v114 = vld [vmem:[%s0 + $0x10c] sm:$0xf]
  %v115 = vld [vmem:[%s0 + $0x110] sm:$0xf]
  %v116 = vld [vmem:[%s0 + $0x114] sm:$0xf]
  %v117 = vld [vmem:[%s0 + $0x118] sm:$0xf]
  %v118 = vld [vmem:[%s0 + $0x11c] sm:$0xf]
  %v119 = vld [vmem:[%s0 + $0x120] sm:$0xf]
  %v120 = vld [vmem:[%s0 + $0x124] sm:$0xf]
  %v121 = vld [vmem:[%s0 + $0x128] sm:$0xf]
  %v122 = vld [vmem:[%s0 + $0x12c] sm:$0xf]
  %v123 = vld [vmem:[%s0 + $0x130] sm:$0xf]
  %v124 = vld [vmem:[%s0 + $0x134] sm:$0xf]
  %v125 = vld [vmem:[%s0 + $0x138] sm:$0xf]
  %v126 = vld [vmem:[%s0 + $0x13c] sm:$0xf]
  %v127 = vld [vmem:[%s0 + $0x140] sm:$0xf]
  %v128 = vld [vmem:[%s0 + $0x144] sm:$0xf]
  %v129 = vld [vmem:[%s0 + $0x148] sm:$0xf]
  %v130 = vld [vmem:[%s0 + $0x14c] sm:$0xf]
  %v131 = vld [vmem:[%s0 + $0x150] sm:$0xf]
  %v132 = vld [vmem:[%s0 + $0x154] sm:$0xf]
  %v133 = vld [vmem:[%s0 + $0x158] sm:$0xf]
  %v134 = vld [vmem:[%s0 + $0x15c] sm:$0xf]
  %v135 = vld [vmem:[%s0 + $0x160] sm:$0xf]
  %v136 = vld [vmem:[%s0 + $0x164] sm:$0xf]
  %v137 = vld [vmem:[%s0 + $0x168] sm:$0xf]
  %v138 = vld [vmem:[%s0 + $0x16c] sm:$0xf]
  %v139 = vld [vmem:[%s0 + $0x170] sm:$0xf]
  %v140 = vld [vmem:[%s0 + $0x174] sm:$0xf]
  %v141 = vld [vmem:[%s0 + $0x178] sm:$0xf]
  %v142 = vld [vmem:[%s0 + $0x17c] sm:$0xf]
  %v143 = vld [vmem:[%s0 + $0x180] sm:$0xf]
  %v144 = vld [vmem:[%s0 + $0x184] sm:$0xf]
  %v145 = vld [vmem:[%s0 + $0x188] sm:$0xf]
  %v146 = vld [vmem:[%s0 + $0x18c] sm:$0xf]
  %v179 = vunpack.c.l.b16 %v15
  %v180 = vunpack.c.h.b16 %v15
  %v181 = vunpack.c.l.b16 %v16
  %v182 = vunpack.c.h.b16 %v16
  %v183 = vunpack.c.l.b16 %v17
  %v184 = vunpack.c.h.b16 %v17
  %v185 = vunpack.c.l.b16 %v18
  %v186 = vunpack.c.l.b16 %v19
  %v187 = vunpack.c.h.b16 %v19
  %v188 = vunpack.c.l.b16 %v20
  %v189 = vunpack.c.h.b16 %v20
  %v190 = vunpack.c.l.b16 %v21
  %v191 = vunpack.c.h.b16 %v21
  %v192 = vunpack.c.l.b16 %v22
  %v193 = vunpack.c.l.b16 %v23
  %v194 = vunpack.c.h.b16 %v23
  %v195 = vunpack.c.l.b16 %v24
  %v196 = vunpack.c.h.b16 %v24
  %v197 = vunpack.c.l.b16 %v25
  %v198 = vunpack.c.h.b16 %v25
  %v199 = vunpack.c.l.b16 %v26
  %v200 = vunpack.c.l.b16 %v27
  %v201 = vunpack.c.h.b16 %v27
  %v202 = vunpack.c.l.b16 %v28
  %v203 = vunpack.c.h.b16 %v28
  %v204 = vunpack.c.l.b16 %v29
  %v205 = vunpack.c.h.b16 %v29
  %v206 = vunpack.c.l.b16 %v30
  %v207 = vunpack.c.l.b16 %v31
  %v208 = vunpack.c.h.b16 %v31
  %v209 = vunpack.c.l.b16 %v32
  %v210 = vunpack.c.h.b16 %v32
  %v211 = vunpack.c.l.b16 %v33
  %v212 = vunpack.c.h.b16 %v33
  %v213 = vunpack.c.l.b16 %v34
  %v214 = vunpack.c.l.b16 %v35
  %v215 = vunpack.c.h.b16 %v35
  %v216 = vunpack.c.l.b16 %v36
  %v217 = vunpack.c.h.b16 %v36
  %v218 = vunpack.c.l.b16 %v37
  %v219 = vunpack.c.h.b16 %v37
  %v220 = vunpack.c.l.b16 %v38
  %v221 = vunpack.c.l.b16 %v39
  %v222 = vunpack.c.h.b16 %v39
  %v223 = vunpack.c.l.b16 %v40
  %v224 = vunpack.c.h.b16 %v40
  %v225 = vunpack.c.l.b16 %v41
  %v226 = vunpack.c.h.b16 %v41
  %v227 = vunpack.c.l.b16 %v42
  %v228 = vunpack.c.l.b16 %v43
  %v229 = vunpack.c.h.b16 %v43
  %v230 = vunpack.c.l.b16 %v44
  %v231 = vunpack.c.h.b16 %v44
  %v232 = vunpack.c.l.b16 %v45
  %v233 = vunpack.c.h.b16 %v45
  %v234 = vunpack.c.l.b16 %v46
  %v235 = vpack.c.b16 %v186, %v179
  %v236 = vpack.c.b16 %v187, %v180
  %v237 = vpack.c.b16 %v188, %v181
  %v238 = vpack.c.b16 %v189, %v182
  %v239 = vpack.c.b16 %v190, %v183
  %v240 = vpack.c.b16 %v191, %v184
  %v241 = vpack.c.b16 %v192, %v185
  %v242 = vpack.c.b16 %v200, %v193
  %v243 = vpack.c.b16 %v201, %v194
  %v244 = vpack.c.b16 %v202, %v195
  %v245 = vpack.c.b16 %v203, %v196
  %v246 = vpack.c.b16 %v204, %v197
  %v247 = vpack.c.b16 %v205, %v198
  %v248 = vpack.c.b16 %v206, %v199
  %v249 = vpack.c.b16 %v214, %v207
  %v250 = vpack.c.b16 %v215, %v208
  %v251 = vpack.c.b16 %v216, %v209
  %v252 = vpack.c.b16 %v217, %v210
  %v253 = vpack.c.b16 %v218, %v211
  %v254 = vpack.c.b16 %v219, %v212
  %v255 = vpack.c.b16 %v220, %v213
  %v256 = vpack.c.b16 %v228, %v221
  %v257 = vpack.c.b16 %v229, %v222
  %v258 = vpack.c.b16 %v230, %v223
  %v259 = vpack.c.b16 %v231, %v224
  %v260 = vpack.c.b16 %v232, %v225
  %v261 = vpack.c.b16 %v233, %v226
  %v262 = vpack.c.b16 %v234, %v227
  %v387 = vunpack.c.l.b16 %v47
  %v388 = vunpack.c.l.b16 %v48
  %v389 = vunpack.c.l.b16 %v49
  %v390 = vunpack.c.l.b16 %v50
  %v391 = vunpack.c.l.b16 %v51
  %v392 = vunpack.c.l.b16 %v52
  %v393 = vunpack.c.l.b16 %v53
  %v394 = vunpack.c.l.b16 %v54
  %v395 = vunpack.c.l.b16 %v55
  %v396 = vunpack.c.l.b16 %v56
  %v397 = vunpack.c.l.b16 %v57
  %v398 = vunpack.c.l.b16 %v58
  %v399 = vunpack.c.l.b16 %v59
  %v400 = vunpack.c.l.b16 %v60
  %v401 = vunpack.c.l.b16 %v61
  %v402 = vunpack.c.l.b16 %v62
  %v403 = vunpack.c.l.b16 %v63
  %v404 = vunpack.c.l.b16 %v64
  %v405 = vunpack.c.l.b16 %v65
  %v406 = vunpack.c.l.b16 %v66
  %v407 = vunpack.c.l.b16 %v67
  %v408 = vunpack.c.l.b16 %v68
  %v409 = vunpack.c.l.b16 %v69
  %v410 = vunpack.c.l.b16 %v70
  %v411 = vunpack.c.l.b16 %v71
  %v412 = vunpack.c.l.b16 %v72
  %v413 = vunpack.c.l.b16 %v73
  %v414 = vunpack.c.l.b16 %v74
  %v415 = vunpack.c.l.b16 %v75
  %v416 = vunpack.c.l.b16 %v76
  %v417 = vunpack.c.l.b16 %v77
  %v418 = vunpack.c.l.b16 %v78
  %v419 = vunpack.c.l.b16 %v79
  %v420 = vunpack.c.l.b16 %v80
  %v421 = vunpack.c.l.b16 %v81
  %v422 = vunpack.c.l.b16 %v82
  %v423 = vunpack.c.l.b16 %v83
  %v424 = vunpack.c.l.b16 %v84
  %v425 = vunpack.c.l.b16 %v85
  %v426 = vunpack.c.l.b16 %v86
  %v427 = vunpack.c.l.b16 %v87
  %v428 = vunpack.c.l.b16 %v88
  %v429 = vunpack.c.l.b16 %v89
  %v430 = vunpack.c.l.b16 %v90
  %v431 = vunpack.c.l.b16 %v91
  %v432 = vunpack.c.l.b16 %v92
  %v433 = vunpack.c.l.b16 %v93
  %v434 = vunpack.c.l.b16 %v94
  %v435 = vunpack.c.l.b16 %v95
  %v436 = vunpack.c.l.b16 %v96
  %v437 = vunpack.c.l.b16 %v97
  %v438 = vunpack.c.l.b16 %v98
  %v439 = vunpack.c.l.b16 %v99
  %v440 = vunpack.c.l.b16 %v100
  %v441 = vunpack.c.l.b16 %v101
  %v442 = vunpack.c.l.b16 %v102
  %v443 = vunpack.c.l.b16 %v103
  %v444 = vunpack.c.l.b16 %v104
  %v445 = vunpack.c.l.b16 %v105
  %v446 = vunpack.c.l.b16 %v106
  %v447 = vunpack.c.l.b16 %v107
  %v448 = vunpack.c.l.b16 %v108
  %v449 = vunpack.c.l.b16 %v109
  %v450 = vunpack.c.l.b16 %v110
  %v451 = vunpack.c.l.b16 %v111
  %v452 = vunpack.c.l.b16 %v112
  %v453 = vunpack.c.l.b16 %v113
  %v454 = vunpack.c.l.b16 %v114
  %v455 = vunpack.c.l.b16 %v115
  %v456 = vunpack.c.l.b16 %v116
  %v457 = vunpack.c.l.b16 %v117
  %v458 = vunpack.c.l.b16 %v118
  %v459 = vunpack.c.l.b16 %v119
  %v460 = vunpack.c.l.b16 %v120
  %v461 = vunpack.c.l.b16 %v121
  %v462 = vunpack.c.l.b16 %v122
  %v463 = vunpack.c.l.b16 %v123
  %v464 = vunpack.c.l.b16 %v124
  %v465 = vunpack.c.l.b16 %v125
  %v466 = vunpack.c.l.b16 %v126
  %v467 = vunpack.c.l.b16 %v127
  %v468 = vunpack.c.l.b16 %v128
  %v469 = vunpack.c.l.b16 %v129
  %v470 = vunpack.c.l.b16 %v130
  %v471 = vunpack.c.l.b16 %v131
  %v472 = vunpack.c.l.b16 %v132
  %v473 = vunpack.c.l.b16 %v133
  %v474 = vunpack.c.l.b16 %v134
  %v475 = vunpack.c.l.b16 %v135
  %v476 = vunpack.c.l.b16 %v136
  %v477 = vunpack.c.l.b16 %v137
  %v478 = vunpack.c.l.b16 %v138
  %v479 = vunpack.c.l.b16 %v139
  %v480 = vunpack.c.l.b16 %v140
  %v481 = vunpack.c.l.b16 %v141
  %v482 = vunpack.c.l.b16 %v142
  %v483 = vunpack.c.l.b16 %v143
  %v484 = vunpack.c.l.b16 %v144
  %v485 = vunpack.c.l.b16 %v145
  %v486 = vunpack.c.l.b16 %v146
  %v487 = vpack.c.b16 %v388, %v387
  %v488 = vpack.c.b16 %v390, %v389
  %v489 = vpack.c.b16 %v392, %v391
  %v490 = vpack.c.b16 %v394, %v393
  %v491 = vpack.c.b16 %v396, %v395
  %v492 = vpack.c.b16 %v398, %v397
  %v493 = vpack.c.b16 %v400, %v399
  %v494 = vpack.c.b16 %v402, %v401
  %v495 = vpack.c.b16 %v404, %v403
  %v496 = vpack.c.b16 %v406, %v405
  %v497 = vpack.c.b16 %v408, %v407
  %v498 = vpack.c.b16 %v410, %v409
  %v499 = vpack.c.b16 %v412, %v411
  %v500 = vpack.c.b16 %v414, %v413
  %v501 = vpack.c.b16 %v416, %v415
  %v502 = vpack.c.b16 %v418, %v417
  %v503 = vpack.c.b16 %v420, %v419
  %v504 = vpack.c.b16 %v422, %v421
  %v505 = vpack.c.b16 %v424, %v423
  %v506 = vpack.c.b16 %v426, %v425
  %v507 = vpack.c.b16 %v428, %v427
  %v508 = vpack.c.b16 %v430, %v429
  %v509 = vpack.c.b16 %v432, %v431
  %v510 = vpack.c.b16 %v434, %v433
  %v511 = vpack.c.b16 %v436, %v435
  %v512 = vpack.c.b16 %v438, %v437
  %v513 = vpack.c.b16 %v440, %v439
  %v514 = vpack.c.b16 %v442, %v441
  %v515 = vpack.c.b16 %v444, %v443
  %v516 = vpack.c.b16 %v446, %v445
  %v517 = vpack.c.b16 %v448, %v447
  %v518 = vpack.c.b16 %v450, %v449
  %v519 = vpack.c.b16 %v452, %v451
  %v520 = vpack.c.b16 %v454, %v453
  %v521 = vpack.c.b16 %v456, %v455
  %v522 = vpack.c.b16 %v458, %v457
  %v523 = vpack.c.b16 %v460, %v459
  %v524 = vpack.c.b16 %v462, %v461
  %v525 = vpack.c.b16 %v464, %v463
  %v526 = vpack.c.b16 %v466, %v465
  %v527 = vpack.c.b16 %v468, %v467
  %v528 = vpack.c.b16 %v470, %v469
  %v529 = vpack.c.b16 %v472, %v471
  %v530 = vpack.c.b16 %v474, %v473
  %v531 = vpack.c.b16 %v476, %v475
  %v532 = vpack.c.b16 %v478, %v477
  %v533 = vpack.c.b16 %v480, %v479
  %v534 = vpack.c.b16 %v482, %v481
  %v535 = vpack.c.b16 %v484, %v483
  %v536 = vpack.c.b16 %v486, %v485
  %vm587 = vcmask 261120
  %v589 = vsel %vm587, %v241, 0
  %v592 = vsel %vm587, %v248, 0
  %v595 = vsel %vm587, %v255, 0
  %v598 = vsel %vm587, %v262, 0
  %600 = vmatprep.subr.bf16.mxu0 0
  %601 = vmatpush1.bf16.msra.mxu0 %v494
  %602 = vmatprep.subr.bf16.mxu0 0
  %603 = vmatpush1.bf16.msra.mxu0 %v493
  %604 = vmatprep.subr.bf16.mxu0 0
  %605 = vmatpush1.bf16.msra.mxu0 %v492
  %606 = vmatprep.subr.bf16.mxu0 0
  %607 = vmatpush1.bf16.msra.mxu0 %v491
  %608 = vmatprep.subr.bf16.mxu0 0
  %609 = vmatpush1.bf16.msra.mxu0 %v490
  %610 = vmatprep.subr.bf16.mxu0 0
  %611 = vmatpush1.bf16.msra.mxu0 %v489
  %612 = vmatprep.subr.bf16.mxu0 0
  %613 = vmatpush1.bf16.msra.mxu0 %v488
  %614 = vmatprep.subr.bf16.mxu0 0
  %615 = vmatpush1.bf16.msra.mxu0 %v487
  %616 = vmatprep.subr.bf16.mxu0 0
  %617 = vmatpush2.bf16.msra.mxu0 %v502
  %618 = vmatprep.subr.bf16.mxu0 0
  %619 = vmatpush2.bf16.msra.mxu0 %v501
  %620 = vmatprep.subr.bf16.mxu0 0
  %621 = vmatpush2.bf16.msra.mxu0 %v500
  %622 = vmatprep.subr.bf16.mxu0 0
  %623 = vmatpush2.bf16.msra.mxu0 %v499
  %624 = vmatprep.subr.bf16.mxu0 0
  %625 = vmatpush2.bf16.msra.mxu0 %v498
  %626 = vmatprep.subr.bf16.mxu0 0
  %627 = vmatpush2.bf16.msra.mxu0 %v497
  %628 = vmatprep.subr.bf16.mxu0 0
  %629 = vmatpush2.bf16.msra.mxu0 %v496
  %630 = vmatprep.subr.bf16.mxu0 0
  %631 = vmatpush2.bf16.msra.mxu0 %v495
  %632 = vmatprep.mubr.bf16.mxu0 %v236
  %633 = vmatmul.mubr.bf16.gmra.mxu0 %v235
  %v634 = vpop.f32.mrf.mxu0
  %v635 = vadd.f32 0.0, %v634
  %v636 = vpop.f32.mrf.mxu0
  %v637 = vpop.f32.mrf.mxu0
  %v638 = vadd.f32 0.0, %v637
  %v639 = vpop.f32.mrf.mxu0
  %640 = vmatprep.mubr.bf16.mxu0 %v243
  %641 = vmatmul.mubr.bf16.gmra.mxu0 %v242
  %v642 = vpop.f32.mrf.mxu0
  %v643 = vadd.f32 0.0, %v642
  %v644 = vpop.f32.mrf.mxu0
  %v645 = vpop.f32.mrf.mxu0
  %v646 = vadd.f32 0.0, %v645
  %v647 = vpop.f32.mrf.mxu0
  %648 = vmatprep.mubr.bf16.mxu0 %v250
  %649 = vmatmul.mubr.bf16.gmra.mxu0 %v249
  %v650 = vpop.f32.mrf.mxu0
  %v651 = vadd.f32 0.0, %v650
  %v652 = vpop.f32.mrf.mxu0
  %v653 = vpop.f32.mrf.mxu0
  %v654 = vadd.f32 0.0, %v653
  %v655 = vpop.f32.mrf.mxu0
  %656 = vmatprep.mubr.bf16.mxu0 %v257
  %657 = vmatmul.mubr.bf16.gmra.mxu0 %v256
  %v658 = vpop.f32.mrf.mxu0
  %v659 = vadd.f32 0.0, %v658
  %v660 = vpop.f32.mrf.mxu0
  %v661 = vpop.f32.mrf.mxu0
  %v662 = vadd.f32 0.0, %v661
  %v663 = vpop.f32.mrf.mxu0
  %664 = vdwg.mxu0
  %665 = vmatprep.subr.bf16.mxu0 0
  %666 = vmatpush1.bf16.msra.mxu0 %v510
  %667 = vmatprep.subr.bf16.mxu0 0
  %668 = vmatpush1.bf16.msra.mxu0 %v509
  %669 = vmatprep.subr.bf16.mxu0 0
  %670 = vmatpush1.bf16.msra.mxu0 %v508
  %671 = vmatprep.subr.bf16.mxu0 0
  %672 = vmatpush1.bf16.msra.mxu0 %v507
  %673 = vmatprep.subr.bf16.mxu0 0
  %674 = vmatpush1.bf16.msra.mxu0 %v506
  %675 = vmatprep.subr.bf16.mxu0 0
  %676 = vmatpush1.bf16.msra.mxu0 %v505
  %677 = vmatprep.subr.bf16.mxu0 0
  %678 = vmatpush1.bf16.msra.mxu0 %v504
  %679 = vmatprep.subr.bf16.mxu0 0
  %680 = vmatpush1.bf16.msra.mxu0 %v503
  %681 = vmatprep.subr.bf16.mxu0 0
  %682 = vmatpush2.bf16.msra.mxu0 %v518
  %683 = vmatprep.subr.bf16.mxu0 0
  %684 = vmatpush2.bf16.msra.mxu0 %v517
  %685 = vmatprep.subr.bf16.mxu0 0
  %686 = vmatpush2.bf16.msra.mxu0 %v516
  %687 = vmatprep.subr.bf16.mxu0 0
  %688 = vmatpush2.bf16.msra.mxu0 %v515
  %689 = vmatprep.subr.bf16.mxu0 0
  %690 = vmatpush2.bf16.msra.mxu0 %v514
  %691 = vmatprep.subr.bf16.mxu0 0
  %692 = vmatpush2.bf16.msra.mxu0 %v513
  %693 = vmatprep.subr.bf16.mxu0 0
  %694 = vmatpush2.bf16.msra.mxu0 %v512
  %695 = vmatprep.subr.bf16.mxu0 0
  %696 = vmatpush2.bf16.msra.mxu0 %v511
  %697 = vmatprep.mubr.bf16.mxu0 %v238
  %698 = vmatmul.mubr.bf16.gmra.mxu0 %v237
  %v699 = vpop.f32.mrf.mxu0
  %v700 = vadd.f32 %v635, %v699
  %v701 = vpop.f32.mrf.mxu0
  %v702 = vpop.f32.mrf.mxu0
  %v703 = vadd.f32 %v638, %v702
  %v704 = vpop.f32.mrf.mxu0
  %705 = vmatprep.mubr.bf16.mxu0 %v245
  %706 = vmatmul.mubr.bf16.gmra.mxu0 %v244
  %v707 = vpop.f32.mrf.mxu0
  %v708 = vadd.f32 %v643, %v707
  %v709 = vpop.f32.mrf.mxu0
  %v710 = vpop.f32.mrf.mxu0
  %v711 = vadd.f32 %v646, %v710
  %v712 = vpop.f32.mrf.mxu0
  %713 = vmatprep.mubr.bf16.mxu0 %v252
  %714 = vmatmul.mubr.bf16.gmra.mxu0 %v251
  %v715 = vpop.f32.mrf.mxu0
  %v716 = vadd.f32 %v651, %v715
  %v717 = vpop.f32.mrf.mxu0
  %v718 = vpop.f32.mrf.mxu0
  %v719 = vadd.f32 %v654, %v718
  %v720 = vpop.f32.mrf.mxu0
  %721 = vmatprep.mubr.bf16.mxu0 %v259
  %722 = vmatmul.mubr.bf16.gmra.mxu0 %v258
  %v723 = vpop.f32.mrf.mxu0
  %v724 = vadd.f32 %v659, %v723
  %v725 = vpop.f32.mrf.mxu0
  %v726 = vpop.f32.mrf.mxu0
  %v727 = vadd.f32 %v662, %v726
  %v728 = vpop.f32.mrf.mxu0
  %729 = vdwg.mxu0
  %730 = vmatprep.subr.bf16.mxu0 0
  %731 = vmatpush1.bf16.msra.mxu0 %v526
  %732 = vmatprep.subr.bf16.mxu0 0
  %733 = vmatpush1.bf16.msra.mxu0 %v525
  %734 = vmatprep.subr.bf16.mxu0 0
  %735 = vmatpush1.bf16.msra.mxu0 %v524
  %736 = vmatprep.subr.bf16.mxu0 0
  %737 = vmatpush1.bf16.msra.mxu0 %v523
  %738 = vmatprep.subr.bf16.mxu0 0
  %739 = vmatpush1.bf16.msra.mxu0 %v522
  %740 = vmatprep.subr.bf16.mxu0 0
  %741 = vmatpush1.bf16.msra.mxu0 %v521
  %742 = vmatprep.subr.bf16.mxu0 0
  %743 = vmatpush1.bf16.msra.mxu0 %v520
  %744 = vmatprep.subr.bf16.mxu0 0
  %745 = vmatpush1.bf16.msra.mxu0 %v519
  %746 = vmatprep.subr.bf16.mxu0 0
  %747 = vmatpush2.bf16.msra.mxu0 %v534
  %748 = vmatprep.subr.bf16.mxu0 0
  %749 = vmatpush2.bf16.msra.mxu0 %v533
  %750 = vmatprep.subr.bf16.mxu0 0
  %751 = vmatpush2.bf16.msra.mxu0 %v532
  %752 = vmatprep.subr.bf16.mxu0 0
  %753 = vmatpush2.bf16.msra.mxu0 %v531
  %754 = vmatprep.subr.bf16.mxu0 0
  %755 = vmatpush2.bf16.msra.mxu0 %v530
  %756 = vmatprep.subr.bf16.mxu0 0
  %757 = vmatpush2.bf16.msra.mxu0 %v529
  %758 = vmatprep.subr.bf16.mxu0 0
  %759 = vmatpush2.bf16.msra.mxu0 %v528
  %760 = vmatprep.subr.bf16.mxu0 0
  %761 = vmatpush2.bf16.msra.mxu0 %v527
  %762 = vmatprep.mubr.bf16.mxu0 %v240
  %763 = vmatmul.mubr.bf16.gmra.mxu0 %v239
  %v764 = vpop.f32.mrf.mxu0
  %v765 = vadd.f32 %v700, %v764
  %v766 = vpop.f32.mrf.mxu0
  %v767 = vpop.f32.mrf.mxu0
  %v768 = vadd.f32 %v703, %v767
  %v769 = vpop.f32.mrf.mxu0
  %770 = vmatprep.mubr.bf16.mxu0 %v247
  %771 = vmatmul.mubr.bf16.gmra.mxu0 %v246
  %v772 = vpop.f32.mrf.mxu0
  %v773 = vadd.f32 %v708, %v772
  %v774 = vpop.f32.mrf.mxu0
  %v775 = vpop.f32.mrf.mxu0
  %v776 = vadd.f32 %v711, %v775
  %v777 = vpop.f32.mrf.mxu0
  %778 = vmatprep.mubr.bf16.mxu0 %v254
  %779 = vmatmul.mubr.bf16.gmra.mxu0 %v253
  %v780 = vpop.f32.mrf.mxu0
  %v781 = vadd.f32 %v716, %v780
  %v782 = vpop.f32.mrf.mxu0
  %v783 = vpop.f32.mrf.mxu0
  %v784 = vadd.f32 %v719, %v783
  %v785 = vpop.f32.mrf.mxu0
  %786 = vmatprep.mubr.bf16.mxu0 %v261
  %787 = vmatmul.mubr.bf16.gmra.mxu0 %v260
  %v788 = vpop.f32.mrf.mxu0
  %v789 = vadd.f32 %v724, %v788
  %v790 = vpop.f32.mrf.mxu0
  %v791 = vpop.f32.mrf.mxu0
  %v792 = vadd.f32 %v727, %v791
  %v793 = vpop.f32.mrf.mxu0
  %794 = vdwg.mxu0
  %795 = vmatprep.subr.bf16.mxu0 0
  %796 = vmatpush1.bf16.msra.mxu0 0
  %797 = vmatprep.subr.bf16.mxu0 0
  %798 = vmatpush1.bf16.msra.mxu0 0
  %799 = vmatprep.subr.bf16.mxu0 0
  %800 = vmatpush1.bf16.msra.mxu0 0
  %801 = vmatprep.subr.bf16.mxu0 0
  %802 = vmatpush1.bf16.msra.mxu0 0
  %803 = vmatprep.subr.bf16.mxu0 0
  %804 = vmatpush1.bf16.msra.mxu0 0
  %805 = vmatprep.subr.bf16.mxu0 0
  %806 = vmatpush1.bf16.msra.mxu0 0
  %807 = vmatprep.subr.bf16.mxu0 0
  %808 = vmatpush1.bf16.msra.mxu0 %v536
  %809 = vmatprep.subr.bf16.mxu0 0
  %810 = vmatpush1.bf16.msra.mxu0 %v535
  %811 = vmatprep.subr.bf16.mxu0 0
  %812 = vmatpush2.bf16.msra.mxu0 0
  %813 = vmatprep.subr.bf16.mxu0 0
  %814 = vmatpush2.bf16.msra.mxu0 0
  %815 = vmatprep.subr.bf16.mxu0 0
  %816 = vmatpush2.bf16.msra.mxu0 0
  %817 = vmatprep.subr.bf16.mxu0 0
  %818 = vmatpush2.bf16.msra.mxu0 0
  %819 = vmatprep.subr.bf16.mxu0 0
  %820 = vmatpush2.bf16.msra.mxu0 0
  %821 = vmatprep.subr.bf16.mxu0 0
  %822 = vmatpush2.bf16.msra.mxu0 0
  %823 = vmatprep.subr.bf16.mxu0 0
  %824 = vmatpush2.bf16.msra.mxu0 0
  %825 = vmatprep.subr.bf16.mxu0 0
  %826 = vmatpush2.bf16.msra.mxu0 0
  %827 = vmatprep.mubr.bf16.mxu0 0
  %828 = vmatmul.mubr.bf16.gmra.mxu0 %v589
  %v829 = vpop.f32.mrf.mxu0
  %v830 = vadd.f32 %v765, %v829
  %v831 = vpop.f32.mrf.mxu0
  %v832 = vpop.f32.mrf.mxu0
  %v833 = vadd.f32 %v768, %v832
  %v834 = vpop.f32.mrf.mxu0
  %835 = vmatprep.mubr.bf16.mxu0 0
  %836 = vmatmul.mubr.bf16.gmra.mxu0 %v592
  %v837 = vpop.f32.mrf.mxu0
  %v838 = vadd.f32 %v773, %v837
  %v839 = vpop.f32.mrf.mxu0
  %v840 = vpop.f32.mrf.mxu0
  %v841 = vadd.f32 %v776, %v840
  %v842 = vpop.f32.mrf.mxu0
  %843 = vmatprep.mubr.bf16.mxu0 0
  %844 = vmatmul.mubr.bf16.gmra.mxu0 %v595
  %v845 = vpop.f32.mrf.mxu0
  %v846 = vadd.f32 %v781, %v845
  %v847 = vpop.f32.mrf.mxu0
  %v848 = vpop.f32.mrf.mxu0
  %v849 = vadd.f32 %v784, %v848
  %v850 = vpop.f32.mrf.mxu0
  %851 = vmatprep.mubr.bf16.mxu0 0
  %852 = vmatmul.mubr.bf16.gmra.mxu0 %v598
  %v853 = vpop.f32.mrf.mxu0
  %v854 = vadd.f32 %v789, %v853
  %v855 = vpop.f32.mrf.mxu0
  %v856 = vpop.f32.mrf.mxu0
  %v857 = vadd.f32 %v792, %v856
  %v858 = vpop.f32.mrf.mxu0
  %859 = vdwg.mxu0
  %868 = vrot.lane.b32.xlu0 %v830, 96
  %v869 = vpop.permute.xlu0 %868
  %870 = vrot.lane.b32.xlu0 %v833, 96
  %v871 = vpop.permute.xlu0 %870
  %872 = vrot.lane.b32.xlu0 %v838, 96
  %v873 = vpop.permute.xlu0 %872
  %874 = vrot.lane.b32.xlu0 %v841, 96
  %v875 = vpop.permute.xlu0 %874
  %876 = vrot.lane.b32.xlu0 %v846, 96
  %v877 = vpop.permute.xlu0 %876
  %878 = vrot.lane.b32.xlu0 %v849, 96
  %v879 = vpop.permute.xlu0 %878
  %880 = vrot.lane.b32.xlu0 %v854, 96
  %v881 = vpop.permute.xlu0 %880
  %882 = vrot.lane.b32.xlu0 %v857, 96
  %v883 = vpop.permute.xlu0 %882
  %v892 = vmax.f32 %v830, %v869
  %v893 = vmax.f32 %v833, %v871
  %v894 = vmax.f32 %v838, %v873
  %v895 = vmax.f32 %v841, %v875
  %v896 = vmax.f32 %v846, %v877
  %v897 = vmax.f32 %v849, %v879
  %v898 = vmax.f32 %v854, %v881
  %v899 = vmax.f32 %v857, %v883
  %908 = vrot.lane.b32.xlu0 %v892, 64
  %v909 = vpop.permute.xlu0 %908
  %910 = vrot.lane.b32.xlu0 %v893, 64
  %v911 = vpop.permute.xlu0 %910
  %912 = vrot.lane.b32.xlu0 %v894, 64
  %v913 = vpop.permute.xlu0 %912
  %914 = vrot.lane.b32.xlu0 %v895, 64
  %v915 = vpop.permute.xlu0 %914
  %916 = vrot.lane.b32.xlu0 %v896, 64
  %v917 = vpop.permute.xlu0 %916
  %918 = vrot.lane.b32.xlu0 %v897, 64
  %v919 = vpop.permute.xlu0 %918
  %920 = vrot.lane.b32.xlu0 %v898, 64
  %v921 = vpop.permute.xlu0 %920
  %922 = vrot.lane.b32.xlu0 %v899, 64
  %v923 = vpop.permute.xlu0 %922
  %v932 = vmax.f32 %v892, %v909
  %v933 = vmax.f32 %v893, %v911
  %v934 = vmax.f32 %v894, %v913
  %v935 = vmax.f32 %v895, %v915
  %v936 = vmax.f32 %v896, %v917
  %v937 = vmax.f32 %v897, %v919
  %v938 = vmax.f32 %v898, %v921
  %v939 = vmax.f32 %v899, %v923
  %v940 = vld [vmem:[%s2] sm:$0xff]
  %v941 = vld [vmem:[%s2 + $0x8] sm:$0xff]
  %v942 = vld [vmem:[%s2 + $0x10] sm:$0xff]
  %v943 = vld [vmem:[%s2 + $0x18] sm:$0xff]
  %v944 = vld [vmem:[%s2 + $0x20] sm:$0xff]
  %v945 = vld [vmem:[%s2 + $0x28] sm:$0xff]
  %v946 = vld [vmem:[%s2 + $0x30] sm:$0xff]
  %v947 = vld [vmem:[%s2 + $0x38] sm:$0xff]
  %949 = vset.pattern.permute.xlu0 0
  %950 = vperm.xlu0 %949, %v940
  %v951 = vpop.permute.xlu0 %950
  %954 = vset.pattern.permute.xlu0 0
  %955 = vperm.xlu0 %954, %v941
  %v956 = vpop.permute.xlu0 %955
  %959 = vset.pattern.permute.xlu0 0
  %960 = vperm.xlu0 %959, %v942
  %v961 = vpop.permute.xlu0 %960
  %964 = vset.pattern.permute.xlu0 0
  %965 = vperm.xlu0 %964, %v943
  %v966 = vpop.permute.xlu0 %965
  %969 = vset.pattern.permute.xlu0 0
  %970 = vperm.xlu0 %969, %v944
  %v971 = vpop.permute.xlu0 %970
  %974 = vset.pattern.permute.xlu0 0
  %975 = vperm.xlu0 %974, %v945
  %v976 = vpop.permute.xlu0 %975
  %979 = vset.pattern.permute.xlu0 0
  %980 = vperm.xlu0 %979, %v946
  %v981 = vpop.permute.xlu0 %980
  %984 = vset.pattern.permute.xlu0 0
  %985 = vperm.xlu0 %984, %v947
  %v986 = vpop.permute.xlu0 %985
  %v988 = vadd.f32 %v932, %v951
  %v989 = vadd.f32 %v933, %v956
  %v990 = vadd.f32 %v934, %v961
  %v991 = vadd.f32 %v935, %v966
  %v992 = vadd.f32 %v936, %v971
  %v993 = vadd.f32 %v937, %v976
  %v994 = vadd.f32 %v938, %v981
  %v995 = vadd.f32 %v939, %v986
  %996 = vst.msk [vmem:[%s3] sm:$0xff] %vm587, %v988
  %997 = vst.msk [vmem:[%s3 + $0x8] sm:$0xff] %vm587, %v989
  %998 = vst.msk [vmem:[%s3 + $0x10] sm:$0xff] %vm587, %v990
  %999 = vst.msk [vmem:[%s3 + $0x18] sm:$0xff] %vm587, %v991
  %1000 = vst.msk [vmem:[%s3 + $0x20] sm:$0xff] %vm587, %v992
  %1001 = vst.msk [vmem:[%s3 + $0x28] sm:$0xff] %vm587, %v993
  %1002 = vst.msk [vmem:[%s3 + $0x30] sm:$0xff] %vm587, %v994
  %1003 = vst.msk [vmem:[%s3 + $0x38] sm:$0xff] %vm587, %v995
  // Predicated region
  $region14: #{tudui_forward.6} parent=0 // pred_check
    _
  $region15: #{tudui_forward.6} parent=0 // pred_check_branch
    %1005 = sbr.rel (0) target = $region17
  $region16: #{tudui_forward.6} parent=0 // pred_region
    _
  $region17: #{tudui_forward.6} parent=0 // pred_fallthru
    _
  // Predicated region
  $region18: #{tudui_forward.6} parent=0 // pred_check
    _
  $region19: #{tudui_forward.6} parent=0 // pred_check_branch
    %1007 = sbr.rel (0) target = $region21
  $region20: #{tudui_forward.6} parent=0 // pred_region
    _
  $region21: #{tudui_forward.6} parent=0 // pred_fallthru
    _

// kernel: tudui_forward.7
$region0: #{tudui_forward.7}
  #allocation0 [shape = 'u32[]', space=smem, size = 0x4, offset = 0x4, fixed_abs, tag = 'smem constant byte address 0x4 - core index']
  #allocation1 [shape = 'u32[144,128]{1,0:T(1,128)}', space=vmem, size = 0x12000, scoped, tag = 'internal scratch']
  %s0 = inlined_call_operand.vmem [shape: f32[1024,2], index: 0, kind: input, shape index: {}]
  %s1 = inlined_call_operand.vmem [shape: f32[64,1024], index: 1, kind: input, shape index: {}]
  %s2 = inlined_call_operand.vmem [shape: f32[64,1], index: 2, kind: input, shape index: {}]
  %s3 = inlined_call_operand.vmem [shape: f32[10,64], index: 3, kind: input, shape index: {}]
  %s4 = inlined_call_operand.vmem [shape: f32[10,1], index: 4, kind: input, shape index: {}]
  %s5 = inlined_call_operand.vmem [shape: f32[10,2], index: 5, kind: output, shape index: {}]
  %s6 = sld [smem:[#allocation0]]
  $region30: #{tudui_forward.7} parent=0
    _
  %s8 = ssub.s32 1, %s6
  %s9 = scalar_select 0, %s8, %s6
  // Predicated region
  $region2: #{tudui_forward.7} parent=0 // pred_check
    _
  $region3: #{tudui_forward.7} parent=0 // pred_check_branch
    %11 = sbr.rel (0) target = $region5
  $region4: #{tudui_forward.7} parent=0 // pred_region
    _
  $region5: #{tudui_forward.7} parent=0 // pred_fallthru
    _
  // Predicated region
  $region6: #{tudui_forward.7} parent=0 // pred_check
    _
  $region7: #{tudui_forward.7} parent=0 // pred_check_branch
    %13 = sbr.rel (0) target = $region9
  $region8: #{tudui_forward.7} parent=0 // pred_region
    _
  $region9: #{tudui_forward.7} parent=0 // pred_fallthru
    _
  // Predicated region
  $region10: #{tudui_forward.7} parent=0 // pred_check
    _
  $region11: #{tudui_forward.7} parent=0 // pred_check_branch
    %15 = sbr.rel (0) target = $region13
  $region12: #{tudui_forward.7} parent=0 // pred_region
    _
  $region13: #{tudui_forward.7} parent=0 // pred_fallthru
    _
  // Predicated region
  $region14: #{tudui_forward.7} parent=0 // pred_check
    _
  $region15: #{tudui_forward.7} parent=0 // pred_check_branch
    %17 = sbr.rel (0) target = $region17
  $region16: #{tudui_forward.7} parent=0 // pred_region
    _
  $region17: #{tudui_forward.7} parent=0 // pred_fallthru
    _
  // Predicated region
  $region18: #{tudui_forward.7} parent=0 // pred_check
    _
  $region19: #{tudui_forward.7} parent=0 // pred_check_branch
    %19 = sbr.rel (0) target = $region21
  $region20: #{tudui_forward.7} parent=0 // pred_region
    _
  $region21: #{tudui_forward.7} parent=0 // pred_fallthru
    _
  %v20 = vld [vmem:[%s1] sm:$0xff]
  %v21 = vld [vmem:[%s1 + $0x8] sm:$0xff]
  %v22 = vld [vmem:[%s1 + $0x10] sm:$0xff]
  %v23 = vld [vmem:[%s1 + $0x18] sm:$0xff]
  %v24 = vld [vmem:[%s1 + $0x20] sm:$0xff]
  %v25 = vld [vmem:[%s1 + $0x28] sm:$0xff]
  %v26 = vld [vmem:[%s1 + $0x30] sm:$0xff]
  %v27 = vld [vmem:[%s1 + $0x38] sm:$0xff]
  %v28 = vld [vmem:[%s1 + $0x40] sm:$0xff]
  %v29 = vld [vmem:[%s1 + $0x48] sm:$0xff]
  %v30 = vld [vmem:[%s1 + $0x50] sm:$0xff]
  %v31 = vld [vmem:[%s1 + $0x58] sm:$0xff]
  %v32 = vld [vmem:[%s1 + $0x60] sm:$0xff]
  %v33 = vld [vmem:[%s1 + $0x68] sm:$0xff]
  %v34 = vld [vmem:[%s1 + $0x70] sm:$0xff]
  %v35 = vld [vmem:[%s1 + $0x78] sm:$0xff]
  %v36 = vld [vmem:[%s1 + $0x80] sm:$0xff]
  %v37 = vld [vmem:[%s1 + $0x88] sm:$0xff]
  %v38 = vld [vmem:[%s1 + $0x90] sm:$0xff]
  %v39 = vld [vmem:[%s1 + $0x98] sm:$0xff]
  %v40 = vld [vmem:[%s1 + $0xa0] sm:$0xff]
  %v41 = vld [vmem:[%s1 + $0xa8] sm:$0xff]
  %v42 = vld [vmem:[%s1 + $0xb0] sm:$0xff]
  %v43 = vld [vmem:[%s1 + $0xb8] sm:$0xff]
  %v44 = vld [vmem:[%s1 + $0xc0] sm:$0xff]
  %v45 = vld [vmem:[%s1 + $0xc8] sm:$0xff]
  %v46 = vld [vmem:[%s1 + $0xd0] sm:$0xff]
  %v47 = vld [vmem:[%s1 + $0xd8] sm:$0xff]
  %v48 = vld [vmem:[%s1 + $0xe0] sm:$0xff]
  %v49 = vld [vmem:[%s1 + $0xe8] sm:$0xff]
  %v50 = vld [vmem:[%s1 + $0xf0] sm:$0xff]
  %v51 = vld [vmem:[%s1 + $0xf8] sm:$0xff]
  %v52 = vld [vmem:[%s1 + $0x100] sm:$0xff]
  %v53 = vld [vmem:[%s1 + $0x108] sm:$0xff]
  %v54 = vld [vmem:[%s1 + $0x110] sm:$0xff]
  %v55 = vld [vmem:[%s1 + $0x118] sm:$0xff]
  %v56 = vld [vmem:[%s1 + $0x120] sm:$0xff]
  %v57 = vld [vmem:[%s1 + $0x128] sm:$0xff]
  %v58 = vld [vmem:[%s1 + $0x130] sm:$0xff]
  %v59 = vld [vmem:[%s1 + $0x138] sm:$0xff]
  %v60 = vld [vmem:[%s1 + $0x140] sm:$0xff]
  %v61 = vld [vmem:[%s1 + $0x148] sm:$0xff]
  %v62 = vld [vmem:[%s1 + $0x150] sm:$0xff]
  %v63 = vld [vmem:[%s1 + $0x158] sm:$0xff]
  %v64 = vld [vmem:[%s1 + $0x160] sm:$0xff]
  %v65 = vld [vmem:[%s1 + $0x168] sm:$0xff]
  %v66 = vld [vmem:[%s1 + $0x170] sm:$0xff]
  %v67 = vld [vmem:[%s1 + $0x178] sm:$0xff]
  %v68 = vld [vmem:[%s1 + $0x180] sm:$0xff]
  %v69 = vld [vmem:[%s1 + $0x188] sm:$0xff]
  %v70 = vld [vmem:[%s1 + $0x190] sm:$0xff]
  %v71 = vld [vmem:[%s1 + $0x198] sm:$0xff]
  %v72 = vld [vmem:[%s1 + $0x1a0] sm:$0xff]
  %v73 = vld [vmem:[%s1 + $0x1a8] sm:$0xff]
  %v74 = vld [vmem:[%s1 + $0x1b0] sm:$0xff]
  %v75 = vld [vmem:[%s1 + $0x1b8] sm:$0xff]
  %v76 = vld [vmem:[%s1 + $0x1c0] sm:$0xff]
  %v77 = vld [vmem:[%s1 + $0x1c8] sm:$0xff]
  %v78 = vld [vmem:[%s1 + $0x1d0] sm:$0xff]
  %v79 = vld [vmem:[%s1 + $0x1d8] sm:$0xff]
  %v80 = vld [vmem:[%s1 + $0x1e0] sm:$0xff]
  %v81 = vld [vmem:[%s1 + $0x1e8] sm:$0xff]
  %v82 = vld [vmem:[%s1 + $0x1f0] sm:$0xff]
  %v83 = vld [vmem:[%s1 + $0x1f8] sm:$0xff]
  %v84 = vld [vmem:[%s0] sm:$0xff]
  %v85 = vld [vmem:[%s0 + $0x8] sm:$0xff]
  %v86 = vld [vmem:[%s0 + $0x10] sm:$0xff]
  %v87 = vld [vmem:[%s0 + $0x18] sm:$0xff]
  %v88 = vld [vmem:[%s0 + $0x20] sm:$0xff]
  %v89 = vld [vmem:[%s0 + $0x28] sm:$0xff]
  %v90 = vld [vmem:[%s0 + $0x30] sm:$0xff]
  %v91 = vld [vmem:[%s0 + $0x38] sm:$0xff]
  %v92 = vld [vmem:[%s0 + $0x40] sm:$0xff]
  %v93 = vld [vmem:[%s0 + $0x48] sm:$0xff]
  %v94 = vld [vmem:[%s0 + $0x50] sm:$0xff]
  %v95 = vld [vmem:[%s0 + $0x58] sm:$0xff]
  %v96 = vld [vmem:[%s0 + $0x60] sm:$0xff]
  %v97 = vld [vmem:[%s0 + $0x68] sm:$0xff]
  %v98 = vld [vmem:[%s0 + $0x70] sm:$0xff]
  %v99 = vld [vmem:[%s0 + $0x78] sm:$0xff]
  %v100 = vld [vmem:[%s0 + $0x80] sm:$0xff]
  %v101 = vld [vmem:[%s0 + $0x88] sm:$0xff]
  %v102 = vld [vmem:[%s0 + $0x90] sm:$0xff]
  %v103 = vld [vmem:[%s0 + $0x98] sm:$0xff]
  %v104 = vld [vmem:[%s0 + $0xa0] sm:$0xff]
  %v105 = vld [vmem:[%s0 + $0xa8] sm:$0xff]
  %v106 = vld [vmem:[%s0 + $0xb0] sm:$0xff]
  %v107 = vld [vmem:[%s0 + $0xb8] sm:$0xff]
  %v108 = vld [vmem:[%s0 + $0xc0] sm:$0xff]
  %v109 = vld [vmem:[%s0 + $0xc8] sm:$0xff]
  %v110 = vld [vmem:[%s0 + $0xd0] sm:$0xff]
  %v111 = vld [vmem:[%s0 + $0xd8] sm:$0xff]
  %v112 = vld [vmem:[%s0 + $0xe0] sm:$0xff]
  %v113 = vld [vmem:[%s0 + $0xe8] sm:$0xff]
  %v114 = vld [vmem:[%s0 + $0xf0] sm:$0xff]
  %v115 = vld [vmem:[%s0 + $0xf8] sm:$0xff]
  %v116 = vld [vmem:[%s0 + $0x100] sm:$0xff]
  %v117 = vld [vmem:[%s0 + $0x108] sm:$0xff]
  %v118 = vld [vmem:[%s0 + $0x110] sm:$0xff]
  %v119 = vld [vmem:[%s0 + $0x118] sm:$0xff]
  %v120 = vld [vmem:[%s0 + $0x120] sm:$0xff]
  %v121 = vld [vmem:[%s0 + $0x128] sm:$0xff]
  %v122 = vld [vmem:[%s0 + $0x130] sm:$0xff]
  %v123 = vld [vmem:[%s0 + $0x138] sm:$0xff]
  %v124 = vld [vmem:[%s0 + $0x140] sm:$0xff]
  %v125 = vld [vmem:[%s0 + $0x148] sm:$0xff]
  %v126 = vld [vmem:[%s0 + $0x150] sm:$0xff]
  %v127 = vld [vmem:[%s0 + $0x158] sm:$0xff]
  %v128 = vld [vmem:[%s0 + $0x160] sm:$0xff]
  %v129 = vld [vmem:[%s0 + $0x168] sm:$0xff]
  %v130 = vld [vmem:[%s0 + $0x170] sm:$0xff]
  %v131 = vld [vmem:[%s0 + $0x178] sm:$0xff]
  %v132 = vld [vmem:[%s0 + $0x180] sm:$0xff]
  %v133 = vld [vmem:[%s0 + $0x188] sm:$0xff]
  %v134 = vld [vmem:[%s0 + $0x190] sm:$0xff]
  %v135 = vld [vmem:[%s0 + $0x198] sm:$0xff]
  %v136 = vld [vmem:[%s0 + $0x1a0] sm:$0xff]
  %v137 = vld [vmem:[%s0 + $0x1a8] sm:$0xff]
  %v138 = vld [vmem:[%s0 + $0x1b0] sm:$0xff]
  %v139 = vld [vmem:[%s0 + $0x1b8] sm:$0xff]
  %v140 = vld [vmem:[%s0 + $0x1c0] sm:$0xff]
  %v141 = vld [vmem:[%s0 + $0x1c8] sm:$0xff]
  %v142 = vld [vmem:[%s0 + $0x1d0] sm:$0xff]
  %v143 = vld [vmem:[%s0 + $0x1d8] sm:$0xff]
  %v144 = vld [vmem:[%s0 + $0x1e0] sm:$0xff]
  %v145 = vld [vmem:[%s0 + $0x1e8] sm:$0xff]
  %v146 = vld [vmem:[%s0 + $0x1f0] sm:$0xff]
  %v147 = vld [vmem:[%s0 + $0x1f8] sm:$0xff]
  %v148 = vld [vmem:[%s0 + $0x200] sm:$0xff]
  %v149 = vld [vmem:[%s0 + $0x208] sm:$0xff]
  %v150 = vld [vmem:[%s0 + $0x210] sm:$0xff]
  %v151 = vld [vmem:[%s0 + $0x218] sm:$0xff]
  %v152 = vld [vmem:[%s0 + $0x220] sm:$0xff]
  %v153 = vld [vmem:[%s0 + $0x228] sm:$0xff]
  %v154 = vld [vmem:[%s0 + $0x230] sm:$0xff]
  %v155 = vld [vmem:[%s0 + $0x238] sm:$0xff]
  %v156 = vld [vmem:[%s0 + $0x240] sm:$0xff]
  %v157 = vld [vmem:[%s0 + $0x248] sm:$0xff]
  %v158 = vld [vmem:[%s0 + $0x250] sm:$0xff]
  %v159 = vld [vmem:[%s0 + $0x258] sm:$0xff]
  %v160 = vld [vmem:[%s0 + $0x260] sm:$0xff]
  %v161 = vld [vmem:[%s0 + $0x268] sm:$0xff]
  %v162 = vld [vmem:[%s0 + $0x270] sm:$0xff]
  %v163 = vld [vmem:[%s0 + $0x278] sm:$0xff]
  %v164 = vld [vmem:[%s0 + $0x280] sm:$0xff]
  %v165 = vld [vmem:[%s0 + $0x288] sm:$0xff]
  %v166 = vld [vmem:[%s0 + $0x290] sm:$0xff]
  %v167 = vld [vmem:[%s0 + $0x298] sm:$0xff]
  %v168 = vld [vmem:[%s0 + $0x2a0] sm:$0xff]
  %v169 = vld [vmem:[%s0 + $0x2a8] sm:$0xff]
  %v170 = vld [vmem:[%s0 + $0x2b0] sm:$0xff]
  %v171 = vld [vmem:[%s0 + $0x2b8] sm:$0xff]
  %v172 = vld [vmem:[%s0 + $0x2c0] sm:$0xff]
  %v173 = vld [vmem:[%s0 + $0x2c8] sm:$0xff]
  %v174 = vld [vmem:[%s0 + $0x2d0] sm:$0xff]
  %v175 = vld [vmem:[%s0 + $0x2d8] sm:$0xff]
  %v176 = vld [vmem:[%s0 + $0x2e0] sm:$0xff]
  %v177 = vld [vmem:[%s0 + $0x2e8] sm:$0xff]
  %v178 = vld [vmem:[%s0 + $0x2f0] sm:$0xff]
  %v179 = vld [vmem:[%s0 + $0x2f8] sm:$0xff]
  %v180 = vld [vmem:[%s0 + $0x300] sm:$0xff]
  %v181 = vld [vmem:[%s0 + $0x308] sm:$0xff]
  %v182 = vld [vmem:[%s0 + $0x310] sm:$0xff]
  %v183 = vld [vmem:[%s0 + $0x318] sm:$0xff]
  %v184 = vld [vmem:[%s0 + $0x320] sm:$0xff]
  %v185 = vld [vmem:[%s0 + $0x328] sm:$0xff]
  %v186 = vld [vmem:[%s0 + $0x330] sm:$0xff]
  %v187 = vld [vmem:[%s0 + $0x338] sm:$0xff]
  %v188 = vld [vmem:[%s0 + $0x340] sm:$0xff]
  %v189 = vld [vmem:[%s0 + $0x348] sm:$0xff]
  %v190 = vld [vmem:[%s0 + $0x350] sm:$0xff]
  %v191 = vld [vmem:[%s0 + $0x358] sm:$0xff]
  %v192 = vld [vmem:[%s0 + $0x360] sm:$0xff]
  %v193 = vld [vmem:[%s0 + $0x368] sm:$0xff]
  %v194 = vld [vmem:[%s0 + $0x370] sm:$0xff]
  %v195 = vld [vmem:[%s0 + $0x378] sm:$0xff]
  %v196 = vld [vmem:[%s0 + $0x380] sm:$0xff]
  %v197 = vld [vmem:[%s0 + $0x388] sm:$0xff]
  %v198 = vld [vmem:[%s0 + $0x390] sm:$0xff]
  %v199 = vld [vmem:[%s0 + $0x398] sm:$0xff]
  %v200 = vld [vmem:[%s0 + $0x3a0] sm:$0xff]
  %v201 = vld [vmem:[%s0 + $0x3a8] sm:$0xff]
  %v202 = vld [vmem:[%s0 + $0x3b0] sm:$0xff]
  %v203 = vld [vmem:[%s0 + $0x3b8] sm:$0xff]
  %v204 = vld [vmem:[%s0 + $0x3c0] sm:$0xff]
  %v205 = vld [vmem:[%s0 + $0x3c8] sm:$0xff]
  %v206 = vld [vmem:[%s0 + $0x3d0] sm:$0xff]
  %v207 = vld [vmem:[%s0 + $0x3d8] sm:$0xff]
  %v208 = vld [vmem:[%s0 + $0x3e0] sm:$0xff]
  %v209 = vld [vmem:[%s0 + $0x3e8] sm:$0xff]
  %v210 = vld [vmem:[%s0 + $0x3f0] sm:$0xff]
  %v211 = vld [vmem:[%s0 + $0x3f8] sm:$0xff]
  %v212 = vld [vmem:[%s2] sm:$0xff]
  %v213 = vld [vmem:[%s2 + $0x8] sm:$0xff]
  %v214 = vld [vmem:[%s2 + $0x10] sm:$0xff]
  %v215 = vld [vmem:[%s2 + $0x18] sm:$0xff]
  %v216 = vld [vmem:[%s2 + $0x20] sm:$0xff]
  %v217 = vld [vmem:[%s2 + $0x28] sm:$0xff]
  %v218 = vld [vmem:[%s2 + $0x30] sm:$0xff]
  %v219 = vld [vmem:[%s2 + $0x38] sm:$0xff]
  %221 = vset.pattern.permute.xlu0 0
  %222 = vperm.xlu0 %221, %v212
  %v223 = vpop.permute.xlu0 %222
  %226 = vset.pattern.permute.xlu0 0
  %227 = vperm.xlu0 %226, %v213
  %v228 = vpop.permute.xlu0 %227
  %231 = vset.pattern.permute.xlu0 0
  %232 = vperm.xlu0 %231, %v214
  %v233 = vpop.permute.xlu0 %232
  %236 = vset.pattern.permute.xlu0 0
  %237 = vperm.xlu0 %236, %v215
  %v238 = vpop.permute.xlu0 %237
  %241 = vset.pattern.permute.xlu0 0
  %242 = vperm.xlu0 %241, %v216
  %v243 = vpop.permute.xlu0 %242
  %246 = vset.pattern.permute.xlu0 0
  %247 = vperm.xlu0 %246, %v217
  %v248 = vpop.permute.xlu0 %247
  %251 = vset.pattern.permute.xlu0 0
  %252 = vperm.xlu0 %251, %v218
  %v253 = vpop.permute.xlu0 %252
  %256 = vset.pattern.permute.xlu0 0
  %257 = vperm.xlu0 %256, %v219
  %v258 = vpop.permute.xlu0 %257
  %260 = vmatprep.subr.mxu0 0.0
  %261 = vmatpush1.msra.mxu0 %v99
  %262 = vmatprep.subr.mxu0 0.0
  %263 = vmatpush1.msra.mxu0 %v98
  %264 = vmatprep.subr.mxu0 0.0
  %265 = vmatpush1.msra.mxu0 %v97
  %266 = vmatprep.subr.mxu0 0.0
  %267 = vmatpush1.msra.mxu0 %v96
  %268 = vmatprep.subr.mxu0 0.0
  %269 = vmatpush1.msra.mxu0 %v95
  %270 = vmatprep.subr.mxu0 0.0
  %271 = vmatpush1.msra.mxu0 %v94
  %272 = vmatprep.subr.mxu0 0.0
  %273 = vmatpush1.msra.mxu0 %v93
  %274 = vmatprep.subr.mxu0 0.0
  %275 = vmatpush1.msra.mxu0 %v92
  %276 = vmatprep.subr.mxu0 0.0
  %277 = vmatpush1.msra.mxu0 %v91
  %278 = vmatprep.subr.mxu0 0.0
  %279 = vmatpush1.msra.mxu0 %v90
  %280 = vmatprep.subr.mxu0 0.0
  %281 = vmatpush1.msra.mxu0 %v89
  %282 = vmatprep.subr.mxu0 0.0
  %283 = vmatpush1.msra.mxu0 %v88
  %284 = vmatprep.subr.mxu0 0.0
  %285 = vmatpush1.msra.mxu0 %v87
  %286 = vmatprep.subr.mxu0 0.0
  %287 = vmatpush1.msra.mxu0 %v86
  %288 = vmatprep.subr.mxu0 0.0
  %289 = vmatpush1.msra.mxu0 %v85
  %290 = vmatprep.subr.mxu0 0.0
  %291 = vmatpush1.msra.mxu0 %v84
  %292 = vmatprep.subr.mxu0 0.0
  %293 = vmatpush2.msra.mxu0 %v115
  %294 = vmatprep.subr.mxu0 0.0
  %295 = vmatpush2.msra.mxu0 %v114
  %296 = vmatprep.subr.mxu0 0.0
  %297 = vmatpush2.msra.mxu0 %v113
  %298 = vmatprep.subr.mxu0 0.0
  %299 = vmatpush2.msra.mxu0 %v112
  %300 = vmatprep.subr.mxu0 0.0
  %301 = vmatpush2.msra.mxu0 %v111
  %302 = vmatprep.subr.mxu0 0.0
  %303 = vmatpush2.msra.mxu0 %v110
  %304 = vmatprep.subr.mxu0 0.0
  %305 = vmatpush2.msra.mxu0 %v109
  %306 = vmatprep.subr.mxu0 0.0
  %307 = vmatpush2.msra.mxu0 %v108
  %308 = vmatprep.subr.mxu0 0.0
  %309 = vmatpush2.msra.mxu0 %v107
  %310 = vmatprep.subr.mxu0 0.0
  %311 = vmatpush2.msra.mxu0 %v106
  %312 = vmatprep.subr.mxu0 0.0
  %313 = vmatpush2.msra.mxu0 %v105
  %314 = vmatprep.subr.mxu0 0.0
  %315 = vmatpush2.msra.mxu0 %v104
  %316 = vmatprep.subr.mxu0 0.0
  %317 = vmatpush2.msra.mxu0 %v103
  %318 = vmatprep.subr.mxu0 0.0
  %319 = vmatpush2.msra.mxu0 %v102
  %320 = vmatprep.subr.mxu0 0.0
  %321 = vmatpush2.msra.mxu0 %v101
  %322 = vmatprep.subr.mxu0 0.0
  %323 = vmatpush2.msra.mxu0 %v100
  %324 = vmatprep.mubr.f32.mxu0 %v21
  %325 = vmatmul.mubr.f32.gmra.mxu0 %v20
  %v326 = vpop.f32.mrf.mxu0
  %v327 = vadd.f32 %v223, %v326
  %v328 = vpop.f32.mrf.mxu0
  %329 = vmatprep.mubr.f32.mxu0 %v29
  %330 = vmatmul.mubr.f32.gmra.mxu0 %v28
  %v331 = vpop.f32.mrf.mxu0
  %v332 = vadd.f32 %v228, %v331
  %v333 = vpop.f32.mrf.mxu0
  %334 = vmatprep.mubr.f32.mxu0 %v37
  %335 = vmatmul.mubr.f32.gmra.mxu0 %v36
  %v336 = vpop.f32.mrf.mxu0
  %v337 = vadd.f32 %v233, %v336
  %v338 = vpop.f32.mrf.mxu0
  %339 = vmatprep.mubr.f32.mxu0 %v45
  %340 = vmatmul.mubr.f32.gmra.mxu0 %v44
  %v341 = vpop.f32.mrf.mxu0
  %v342 = vadd.f32 %v238, %v341
  %v343 = vpop.f32.mrf.mxu0
  %344 = vmatprep.mubr.f32.mxu0 %v53
  %345 = vmatmul.mubr.f32.gmra.mxu0 %v52
  %v346 = vpop.f32.mrf.mxu0
  %v347 = vadd.f32 %v243, %v346
  %v348 = vpop.f32.mrf.mxu0
  %349 = vmatprep.mubr.f32.mxu0 %v61
  %350 = vmatmul.mubr.f32.gmra.mxu0 %v60
  %v351 = vpop.f32.mrf.mxu0
  %v352 = vadd.f32 %v248, %v351
  %v353 = vpop.f32.mrf.mxu0
  %354 = vmatprep.mubr.f32.mxu0 %v69
  %355 = vmatmul.mubr.f32.gmra.mxu0 %v68
  %v356 = vpop.f32.mrf.mxu0
  %v357 = vadd.f32 %v253, %v356
  %v358 = vpop.f32.mrf.mxu0
  %359 = vmatprep.mubr.f32.mxu0 %v77
  %360 = vmatmul.mubr.f32.gmra.mxu0 %v76
  %v361 = vpop.f32.mrf.mxu0
  %v362 = vadd.f32 %v258, %v361
  %v363 = vpop.f32.mrf.mxu0
  %364 = vdwg.mxu0
  %365 = vmatprep.subr.mxu0 0.0
  %366 = vmatpush1.msra.mxu0 %v131
  %367 = vmatprep.subr.mxu0 0.0
  %368 = vmatpush1.msra.mxu0 %v130
  %369 = vmatprep.subr.mxu0 0.0
  %370 = vmatpush1.msra.mxu0 %v129
  %371 = vmatprep.subr.mxu0 0.0
  %372 = vmatpush1.msra.mxu0 %v128
  %373 = vmatprep.subr.mxu0 0.0
  %374 = vmatpush1.msra.mxu0 %v127
  %375 = vmatprep.subr.mxu0 0.0
  %376 = vmatpush1.msra.mxu0 %v126
  %377 = vmatprep.subr.mxu0 0.0
  %378 = vmatpush1.msra.mxu0 %v125
  %379 = vmatprep.subr.mxu0 0.0
  %380 = vmatpush1.msra.mxu0 %v124
  %381 = vmatprep.subr.mxu0 0.0
  %382 = vmatpush1.msra.mxu0 %v123
  %383 = vmatprep.subr.mxu0 0.0
  %384 = vmatpush1.msra.mxu0 %v122
  %385 = vmatprep.subr.mxu0 0.0
  %386 = vmatpush1.msra.mxu0 %v121
  %387 = vmatprep.subr.mxu0 0.0
  %388 = vmatpush1.msra.mxu0 %v120
  %389 = vmatprep.subr.mxu0 0.0
  %390 = vmatpush1.msra.mxu0 %v119
  %391 = vmatprep.subr.mxu0 0.0
  %392 = vmatpush1.msra.mxu0 %v118
  %393 = vmatprep.subr.mxu0 0.0
  %394 = vmatpush1.msra.mxu0 %v117
  %395 = vmatprep.subr.mxu0 0.0
  %396 = vmatpush1.msra.mxu0 %v116
  %397 = vmatprep.subr.mxu0 0.0
  %398 = vmatpush2.msra.mxu0 %v147
  %399 = vmatprep.subr.mxu0 0.0
  %400 = vmatpush2.msra.mxu0 %v146
  %401 = vmatprep.subr.mxu0 0.0
  %402 = vmatpush2.msra.mxu0 %v145
  %403 = vmatprep.subr.mxu0 0.0
  %404 = vmatpush2.msra.mxu0 %v144
  %405 = vmatprep.subr.mxu0 0.0
  %406 = vmatpush2.msra.mxu0 %v143
  %407 = vmatprep.subr.mxu0 0.0
  %408 = vmatpush2.msra.mxu0 %v142
  %409 = vmatprep.subr.mxu0 0.0
  %410 = vmatpush2.msra.mxu0 %v141
  %411 = vmatprep.subr.mxu0 0.0
  %412 = vmatpush2.msra.mxu0 %v140
  %413 = vmatprep.subr.mxu0 0.0
  %414 = vmatpush2.msra.mxu0 %v139
  %415 = vmatprep.subr.mxu0 0.0
  %416 = vmatpush2.msra.mxu0 %v138
  %417 = vmatprep.subr.mxu0 0.0
  %418 = vmatpush2.msra.mxu0 %v137
  %419 = vmatprep.subr.mxu0 0.0
  %420 = vmatpush2.msra.mxu0 %v136
  %421 = vmatprep.subr.mxu0 0.0
  %422 = vmatpush2.msra.mxu0 %v135
  %423 = vmatprep.subr.mxu0 0.0
  %424 = vmatpush2.msra.mxu0 %v134
  %425 = vmatprep.subr.mxu0 0.0
  %426 = vmatpush2.msra.mxu0 %v133
  %427 = vmatprep.subr.mxu0 0.0
  %428 = vmatpush2.msra.mxu0 %v132
  %429 = vmatprep.mubr.f32.mxu0 %v23
  %430 = vmatmul.mubr.f32.gmra.mxu0 %v22
  %v431 = vpop.f32.mrf.mxu0
  %v432 = vadd.f32 %v327, %v431
  %v433 = vpop.f32.mrf.mxu0
  %434 = vmatprep.mubr.f32.mxu0 %v31
  %435 = vmatmul.mubr.f32.gmra.mxu0 %v30
  %v436 = vpop.f32.mrf.mxu0
  %v437 = vadd.f32 %v332, %v436
  %v438 = vpop.f32.mrf.mxu0
  %439 = vmatprep.mubr.f32.mxu0 %v39
  %440 = vmatmul.mubr.f32.gmra.mxu0 %v38
  %v441 = vpop.f32.mrf.mxu0
  %v442 = vadd.f32 %v337, %v441
  %v443 = vpop.f32.mrf.mxu0
  %444 = vmatprep.mubr.f32.mxu0 %v47
  %445 = vmatmul.mubr.f32.gmra.mxu0 %v46
  %v446 = vpop.f32.mrf.mxu0
  %v447 = vadd.f32 %v342, %v446
  %v448 = vpop.f32.mrf.mxu0
  %449 = vmatprep.mubr.f32.mxu0 %v55
  %450 = vmatmul.mubr.f32.gmra.mxu0 %v54
  %v451 = vpop.f32.mrf.mxu0
  %v452 = vadd.f32 %v347, %v451
  %v453 = vpop.f32.mrf.mxu0
  %454 = vmatprep.mubr.f32.mxu0 %v63
  %455 = vmatmul.mubr.f32.gmra.mxu0 %v62
  %v456 = vpop.f32.mrf.mxu0
  %v457 = vadd.f32 %v352, %v456
  %v458 = vpop.f32.mrf.mxu0
  %459 = vmatprep.mubr.f32.mxu0 %v71
  %460 = vmatmul.mubr.f32.gmra.mxu0 %v70
  %v461 = vpop.f32.mrf.mxu0
  %v462 = vadd.f32 %v357, %v461
  %v463 = vpop.f32.mrf.mxu0
  %464 = vmatprep.mubr.f32.mxu0 %v79
  %465 = vmatmul.mubr.f32.gmra.mxu0 %v78
  %v466 = vpop.f32.mrf.mxu0
  %v467 = vadd.f32 %v362, %v466
  %v468 = vpop.f32.mrf.mxu0
  %469 = vdwg.mxu0
  %470 = vmatprep.subr.mxu0 0.0
  %471 = vmatpush1.msra.mxu0 %v163
  %472 = vmatprep.subr.mxu0 0.0
  %473 = vmatpush1.msra.mxu0 %v162
  %474 = vmatprep.subr.mxu0 0.0
  %475 = vmatpush1.msra.mxu0 %v161
  %476 = vmatprep.subr.mxu0 0.0
  %477 = vmatpush1.msra.mxu0 %v160
  %478 = vmatprep.subr.mxu0 0.0
  %479 = vmatpush1.msra.mxu0 %v159
  %480 = vmatprep.subr.mxu0 0.0
  %481 = vmatpush1.msra.mxu0 %v158
  %482 = vmatprep.subr.mxu0 0.0
  %483 = vmatpush1.msra.mxu0 %v157
  %484 = vmatprep.subr.mxu0 0.0
  %485 = vmatpush1.msra.mxu0 %v156
  %486 = vmatprep.subr.mxu0 0.0
  %487 = vmatpush1.msra.mxu0 %v155
  %488 = vmatprep.subr.mxu0 0.0
  %489 = vmatpush1.msra.mxu0 %v154
  %490 = vmatprep.subr.mxu0 0.0
  %491 = vmatpush1.msra.mxu0 %v153
  %492 = vmatprep.subr.mxu0 0.0
  %493 = vmatpush1.msra.mxu0 %v152
  %494 = vmatprep.subr.mxu0 0.0
  %495 = vmatpush1.msra.mxu0 %v151
  %496 = vmatprep.subr.mxu0 0.0
  %497 = vmatpush1.msra.mxu0 %v150
  %498 = vmatprep.subr.mxu0 0.0
  %499 = vmatpush1.msra.mxu0 %v149
  %500 = vmatprep.subr.mxu0 0.0
  %501 = vmatpush1.msra.mxu0 %v148
  %502 = vmatprep.subr.mxu0 0.0
  %503 = vmatpush2.msra.mxu0 %v179
  %504 = vmatprep.subr.mxu0 0.0
  %505 = vmatpush2.msra.mxu0 %v178
  %506 = vmatprep.subr.mxu0 0.0
  %507 = vmatpush2.msra.mxu0 %v177
  %508 = vmatprep.subr.mxu0 0.0
  %509 = vmatpush2.msra.mxu0 %v176
  %510 = vmatprep.subr.mxu0 0.0
  %511 = vmatpush2.msra.mxu0 %v175
  %512 = vmatprep.subr.mxu0 0.0
  %513 = vmatpush2.msra.mxu0 %v174
  %514 = vmatprep.subr.mxu0 0.0
  %515 = vmatpush2.msra.mxu0 %v173
  %516 = vmatprep.subr.mxu0 0.0
  %517 = vmatpush2.msra.mxu0 %v172
  %518 = vmatprep.subr.mxu0 0.0
  %519 = vmatpush2.msra.mxu0 %v171
  %520 = vmatprep.subr.mxu0 0.0
  %521 = vmatpush2.msra.mxu0 %v170
  %522 = vmatprep.subr.mxu0 0.0
  %523 = vmatpush2.msra.mxu0 %v169
  %524 = vmatprep.subr.mxu0 0.0
  %525 = vmatpush2.msra.mxu0 %v168
  %526 = vmatprep.subr.mxu0 0.0
  %527 = vmatpush2.msra.mxu0 %v167
  %528 = vmatprep.subr.mxu0 0.0
  %529 = vmatpush2.msra.mxu0 %v166
  %530 = vmatprep.subr.mxu0 0.0
  %531 = vmatpush2.msra.mxu0 %v165
  %532 = vmatprep.subr.mxu0 0.0
  %533 = vmatpush2.msra.mxu0 %v164
  %534 = vmatprep.mubr.f32.mxu0 %v25
  %535 = vmatmul.mubr.f32.gmra.mxu0 %v24
  %v536 = vpop.f32.mrf.mxu0
  %v537 = vadd.f32 %v432, %v536
  %v538 = vpop.f32.mrf.mxu0
  %539 = vmatprep.mubr.f32.mxu0 %v33
  %540 = vmatmul.mubr.f32.gmra.mxu0 %v32
  %v541 = vpop.f32.mrf.mxu0
  %v542 = vadd.f32 %v437, %v541
  %v543 = vpop.f32.mrf.mxu0
  %544 = vmatprep.mubr.f32.mxu0 %v41
  %545 = vmatmul.mubr.f32.gmra.mxu0 %v40
  %v546 = vpop.f32.mrf.mxu0
  %v547 = vadd.f32 %v442, %v546
  %v548 = vpop.f32.mrf.mxu0
  %549 = vmatprep.mubr.f32.mxu0 %v49
  %550 = vmatmul.mubr.f32.gmra.mxu0 %v48
  %v551 = vpop.f32.mrf.mxu0
  %v552 = vadd.f32 %v447, %v551
  %v553 = vpop.f32.mrf.mxu0
  %554 = vmatprep.mubr.f32.mxu0 %v57
  %555 = vmatmul.mubr.f32.gmra.mxu0 %v56
  %v556 = vpop.f32.mrf.mxu0
  %v557 = vadd.f32 %v452, %v556
  %v558 = vpop.f32.mrf.mxu0
  %559 = vmatprep.mubr.f32.mxu0 %v65
  %560 = vmatmul.mubr.f32.gmra.mxu0 %v64
  %v561 = vpop.f32.mrf.mxu0
  %v562 = vadd.f32 %v457, %v561
  %v563 = vpop.f32.mrf.mxu0
  %564 = vmatprep.mubr.f32.mxu0 %v73
  %565 = vmatmul.mubr.f32.gmra.mxu0 %v72
  %v566 = vpop.f32.mrf.mxu0
  %v567 = vadd.f32 %v462, %v566
  %v568 = vpop.f32.mrf.mxu0
  %569 = vmatprep.mubr.f32.mxu0 %v81
  %570 = vmatmul.mubr.f32.gmra.mxu0 %v80
  %v571 = vpop.f32.mrf.mxu0
  %v572 = vadd.f32 %v467, %v571
  %v573 = vpop.f32.mrf.mxu0
  %574 = vdwg.mxu0
  %575 = vmatprep.subr.mxu0 0.0
  %576 = vmatpush1.msra.mxu0 %v195
  %577 = vmatprep.subr.mxu0 0.0
  %578 = vmatpush1.msra.mxu0 %v194
  %579 = vmatprep.subr.mxu0 0.0
  %580 = vmatpush1.msra.mxu0 %v193
  %581 = vmatprep.subr.mxu0 0.0
  %582 = vmatpush1.msra.mxu0 %v192
  %583 = vmatprep.subr.mxu0 0.0
  %584 = vmatpush1.msra.mxu0 %v191
  %585 = vmatprep.subr.mxu0 0.0
  %586 = vmatpush1.msra.mxu0 %v190
  %587 = vmatprep.subr.mxu0 0.0
  %588 = vmatpush1.msra.mxu0 %v189
  %589 = vmatprep.subr.mxu0 0.0
  %590 = vmatpush1.msra.mxu0 %v188
  %591 = vmatprep.subr.mxu0 0.0
  %592 = vmatpush1.msra.mxu0 %v187
  %593 = vmatprep.subr.mxu0 0.0
  %594 = vmatpush1.msra.mxu0 %v186
  %595 = vmatprep.subr.mxu0 0.0
  %596 = vmatpush1.msra.mxu0 %v185
  %597 = vmatprep.subr.mxu0 0.0
  %598 = vmatpush1.msra.mxu0 %v184
  %599 = vmatprep.subr.mxu0 0.0
  %600 = vmatpush1.msra.mxu0 %v183
  %601 = vmatprep.subr.mxu0 0.0
  %602 = vmatpush1.msra.mxu0 %v182
  %603 = vmatprep.subr.mxu0 0.0
  %604 = vmatpush1.msra.mxu0 %v181
  %605 = vmatprep.subr.mxu0 0.0
  %606 = vmatpush1.msra.mxu0 %v180
  %607 = vmatprep.subr.mxu0 0.0
  %608 = vmatpush2.msra.mxu0 %v211
  %609 = vmatprep.subr.mxu0 0.0
  %610 = vmatpush2.msra.mxu0 %v210
  %611 = vmatprep.subr.mxu0 0.0
  %612 = vmatpush2.msra.mxu0 %v209
  %613 = vmatprep.subr.mxu0 0.0
  %614 = vmatpush2.msra.mxu0 %v208
  %615 = vmatprep.subr.mxu0 0.0
  %616 = vmatpush2.msra.mxu0 %v207
  %617 = vmatprep.subr.mxu0 0.0
  %618 = vmatpush2.msra.mxu0 %v206
  %619 = vmatprep.subr.mxu0 0.0
  %620 = vmatpush2.msra.mxu0 %v205
  %621 = vmatprep.subr.mxu0 0.0
  %622 = vmatpush2.msra.mxu0 %v204
  %623 = vmatprep.subr.mxu0 0.0
  %624 = vmatpush2.msra.mxu0 %v203
  %625 = vmatprep.subr.mxu0 0.0
  %626 = vmatpush2.msra.mxu0 %v202
  %627 = vmatprep.subr.mxu0 0.0
  %628 = vmatpush2.msra.mxu0 %v201
  %629 = vmatprep.subr.mxu0 0.0
  %630 = vmatpush2.msra.mxu0 %v200
  %631 = vmatprep.subr.mxu0 0.0
  %632 = vmatpush2.msra.mxu0 %v199
  %633 = vmatprep.subr.mxu0 0.0
  %634 = vmatpush2.msra.mxu0 %v198
  %635 = vmatprep.subr.mxu0 0.0
  %636 = vmatpush2.msra.mxu0 %v197
  %637 = vmatprep.subr.mxu0 0.0
  %638 = vmatpush2.msra.mxu0 %v196
  %639 = vmatprep.mubr.f32.mxu0 %v27
  %640 = vmatmul.mubr.f32.gmra.mxu0 %v26
  %v641 = vpop.f32.mrf.mxu0
  %v642 = vadd.f32 %v537, %v641
  %v643 = vpop.f32.mrf.mxu0
  %644 = vmatprep.mubr.f32.mxu0 %v35
  %645 = vmatmul.mubr.f32.gmra.mxu0 %v34
  %v646 = vpop.f32.mrf.mxu0
  %v647 = vadd.f32 %v542, %v646
  %v648 = vpop.f32.mrf.mxu0
  %649 = vmatprep.mubr.f32.mxu0 %v43
  %650 = vmatmul.mubr.f32.gmra.mxu0 %v42
  %v651 = vpop.f32.mrf.mxu0
  %v652 = vadd.f32 %v547, %v651
  %v653 = vpop.f32.mrf.mxu0
  %654 = vmatprep.mubr.f32.mxu0 %v51
  %655 = vmatmul.mubr.f32.gmra.mxu0 %v50
  %v656 = vpop.f32.mrf.mxu0
  %v657 = vadd.f32 %v552, %v656
  %v658 = vpop.f32.mrf.mxu0
  %659 = vmatprep.mubr.f32.mxu0 %v59
  %660 = vmatmul.mubr.f32.gmra.mxu0 %v58
  %v661 = vpop.f32.mrf.mxu0
  %v662 = vadd.f32 %v557, %v661
  %v663 = vpop.f32.mrf.mxu0
  %664 = vmatprep.mubr.f32.mxu0 %v67
  %665 = vmatmul.mubr.f32.gmra.mxu0 %v66
  %v666 = vpop.f32.mrf.mxu0
  %v667 = vadd.f32 %v562, %v666
  %v668 = vpop.f32.mrf.mxu0
  %669 = vmatprep.mubr.f32.mxu0 %v75
  %670 = vmatmul.mubr.f32.gmra.mxu0 %v74
  %v671 = vpop.f32.mrf.mxu0
  %v672 = vadd.f32 %v567, %v671
  %v673 = vpop.f32.mrf.mxu0
  %674 = vmatprep.mubr.f32.mxu0 %v83
  %675 = vmatmul.mubr.f32.gmra.mxu0 %v82
  %v676 = vpop.f32.mrf.mxu0
  %v677 = vadd.f32 %v572, %v676
  %v678 = vpop.f32.mrf.mxu0
  %679 = vdwg.mxu0
  %v680 = vld [vmem:[%s3] sm:$0xff]
  %v681 = vld [vmem:[%s3 + $0x8] sm:$0x3]
  %v682 = vld [vmem:[%s4] sm:$0xff]
  %v683 = vld [vmem:[%s4 + $0x8] sm:$0x3]
  %685 = vset.pattern.permute.xlu0 0
  %686 = vperm.xlu0 %685, %v682
  %v687 = vpop.permute.xlu0 %686
  %690 = vset.pattern.permute.xlu0 0
  %691 = vperm.xlu0 %690, %v683
  %v692 = vpop.permute.xlu0 %691
  %vm694 = vcmask 523264
  %v696 = vsel %vm694, %v680, 0
  %v699 = vsel %vm694, %v681, 0
  %701 = vmatprep.subr.mxu0 0.0
  %702 = vmatpush1.msra.mxu0 0.0
  %703 = vmatprep.subr.mxu0 0.0
  %704 = vmatpush1.msra.mxu0 0.0
  %705 = vmatprep.subr.mxu0 0.0
  %706 = vmatpush1.msra.mxu0 0.0
  %707 = vmatprep.subr.mxu0 0.0
  %708 = vmatpush1.msra.mxu0 0.0
  %709 = vmatprep.subr.mxu0 0.0
  %710 = vmatpush1.msra.mxu0 0.0
  %711 = vmatprep.subr.mxu0 0.0
  %712 = vmatpush1.msra.mxu0 0.0
  %713 = vmatprep.subr.mxu0 0.0
  %714 = vmatpush1.msra.mxu0 0.0
  %715 = vmatprep.subr.mxu0 0.0
  %716 = vmatpush1.msra.mxu0 0.0
  %717 = vmatprep.subr.mxu0 0.0
  %718 = vmatpush1.msra.mxu0 %v677
  %719 = vmatprep.subr.mxu0 0.0
  %720 = vmatpush1.msra.mxu0 %v672
  %721 = vmatprep.subr.mxu0 0.0
  %722 = vmatpush1.msra.mxu0 %v667
  %723 = vmatprep.subr.mxu0 0.0
  %724 = vmatpush1.msra.mxu0 %v662
  %725 = vmatprep.subr.mxu0 0.0
  %726 = vmatpush1.msra.mxu0 %v657
  %727 = vmatprep.subr.mxu0 0.0
  %728 = vmatpush1.msra.mxu0 %v652
  %729 = vmatprep.subr.mxu0 0.0
  %730 = vmatpush1.msra.mxu0 %v647
  %731 = vmatprep.subr.mxu0 0.0
  %732 = vmatpush1.msra.mxu0 %v642
  %733 = vmatprep.subr.mxu0 0.0
  %734 = vmatpush2.msra.mxu0 0.0
  %735 = vmatprep.subr.mxu0 0.0
  %736 = vmatpush2.msra.mxu0 0.0
  %737 = vmatprep.subr.mxu0 0.0
  %738 = vmatpush2.msra.mxu0 0.0
  %739 = vmatprep.subr.mxu0 0.0
  %740 = vmatpush2.msra.mxu0 0.0
  %741 = vmatprep.subr.mxu0 0.0
  %742 = vmatpush2.msra.mxu0 0.0
  %743 = vmatprep.subr.mxu0 0.0
  %744 = vmatpush2.msra.mxu0 0.0
  %745 = vmatprep.subr.mxu0 0.0
  %746 = vmatpush2.msra.mxu0 0.0
  %747 = vmatprep.subr.mxu0 0.0
  %748 = vmatpush2.msra.mxu0 0.0
  %749 = vmatprep.subr.mxu0 0.0
  %750 = vmatpush2.msra.mxu0 0.0
  %751 = vmatprep.subr.mxu0 0.0
  %752 = vmatpush2.msra.mxu0 0.0
  %753 = vmatprep.subr.mxu0 0.0
  %754 = vmatpush2.msra.mxu0 0.0
  %755 = vmatprep.subr.mxu0 0.0
  %756 = vmatpush2.msra.mxu0 0.0
  %757 = vmatprep.subr.mxu0 0.0
  %758 = vmatpush2.msra.mxu0 0.0
  %759 = vmatprep.subr.mxu0 0.0
  %760 = vmatpush2.msra.mxu0 0.0
  %761 = vmatprep.subr.mxu0 0.0
  %762 = vmatpush2.msra.mxu0 0.0
  %763 = vmatprep.subr.mxu0 0.0
  %764 = vmatpush2.msra.mxu0 0.0
  %765 = vmatprep.mubr.f32.mxu0 0.0
  %766 = vmatmul.mubr.f32.gmra.mxu0 %v696
  %v767 = vpop.f32.mrf.mxu0
  %v768 = vadd.f32 %v687, %v767
  %v769 = vpop.f32.mrf.mxu0
  %770 = vmatprep.mubr.f32.mxu0 0.0
  %771 = vmatmul.mubr.f32.gmra.mxu0 %v699
  %v772 = vpop.f32.mrf.mxu0
  %v773 = vadd.f32 %v692, %v772
  %v774 = vpop.f32.mrf.mxu0
  %775 = vdwg.mxu0
  %vm776 = vcmask 15360
  %777 = vst.msk [vmem:[%s5] sm:$0xff] %vm776, %v768
  %vm778 = vcmask 9216
  %779 = vst.msk [vmem:[%s5 + $0x8] sm:$0x3] %vm778, %v773
  // Predicated region
  $region22: #{tudui_forward.7} parent=0 // pred_check
    _
  $region23: #{tudui_forward.7} parent=0 // pred_check_branch
    %781 = sbr.rel (0) target = $region25
  $region24: #{tudui_forward.7} parent=0 // pred_region
    _
  $region25: #{tudui_forward.7} parent=0 // pred_fallthru
    _
  // Predicated region
  $region26: #{tudui_forward.7} parent=0 // pred_check
    _
  $region27: #{tudui_forward.7} parent=0 // pred_check_branch
    %783 = sbr.rel (0) target = $region29
  $region28: #{tudui_forward.7} parent=0 // pred_region
    _
  $region29: #{tudui_forward.7} parent=0 // pred_fallthru
    _

</llo_original>
